<compile_context>
chip_gen: v7x
topology: tpu7x:2x2x1
jax: 0.10.0
libtpu: 0.0.40
codegen_flags: <defaults>
</compile_context>

<pallas_src>
import functools

import jax
import jax.numpy as jnp
from jax.experimental import pallas as pl
from jax.experimental.pallas import tpu as pltpu


def attention_kernel(x_ref, wqkv_ref, wout_ref, bout_ref, o_ref,
                     *, num_heads, dim_per_head):
    """One grid step handles a single batch element, in transposed layout.

    x_ref:    (1, C, N)          input pixels, channels on sublanes, pixels on lanes
    wqkv_ref: (3*hidden, C)      fused qkv 1x1-conv weight, (out_ch, in_ch), q pre-scaled
    wout_ref: (H, C, d)          output 1x1-conv weight, split per head
    bout_ref: (C, 1)             output 1x1-conv bias (broadcast over pixels)
    o_ref:    (1, C, N)          result (lane-dense store)
    """
    hidden = num_heads * dim_per_head

    xT = x_ref[0]                                             # (C, N)
    C, N = xT.shape

    # Fused qkv projection: qkv^T = Wqkv^T @ x^T   -> (3*hidden, N)
    qkvT = jnp.dot(wqkv_ref[...], xT,
                   preferred_element_type=jnp.float32)

    yT = jnp.zeros((C, N), dtype=jnp.float32)

    for h in range(num_heads):                                # static, unrolled
        lo = h * dim_per_head
        qT_h = qkvT[lo:lo + dim_per_head]                     # (d, N)  sublane slice
        kT_h = qkvT[hidden + lo:hidden + lo + dim_per_head]   # (d, N)
        vT_h = qkvT[2 * hidden + lo:2 * hidden + lo + dim_per_head]  # (d, N)

        # simT[j, i] = sum_d k[d, j] * q[d, i]   (keys on sublanes, queries on lanes)
        simT = jnp.dot(kT_h.T.astype(jnp.bfloat16),
                       qT_h.astype(jnp.bfloat16),
                       preferred_element_type=jnp.float32)    # (N_k, N_q)

        # softmax over keys (sublane axis), normalization deferred past PV
        m = jnp.max(simT, axis=0, keepdims=True)              # (1, N_q)
        p = jnp.exp(simT - m)                                 # (N_k, N_q) f32
        l = jnp.sum(p, axis=0, keepdims=True)                 # (1, N_q)

        # outT[dd, i] = sum_j v[dd, j] * p[j, i]
        outT_h = jnp.dot(vT_h.astype(jnp.bfloat16),
                         p.astype(jnp.bfloat16),
                         preferred_element_type=jnp.float32)  # (d, N_q)
        outT_h = outT_h * pl.reciprocal(l, approx=True)       # deferred 1/rowsum

        # fold head directly into the output projection: y^T += WoutT_h @ outT_h
        yT = yT + jnp.dot(wout_ref[h], outT_h,
                          preferred_element_type=jnp.float32)  # (C, N)

    o_ref[0] = (yT + bout_ref[...]).astype(o_ref.dtype)


def attention_pallas(x_nchw, wqkv, wout, bout, *, num_heads, dim_per_head):
    """x_nchw: (B, C, H, W) f32.  wqkv: (C, 3*hidden).  wout: (hidden, C).  bout: (1, C).

    Returns (B, C, H, W), matching the PyTorch module's forward.
    """
    B, C, H, W = x_nchw.shape
    N = H * W
    hidden = num_heads * dim_per_head
    scale = dim_per_head ** (-0.5)

    # channels-on-sublane / pixels-on-lane: pure reshape, no transpose.
    xT = x_nchw.reshape(B, C, N)

    # Fold softmax scale into the Q columns; store weight as (out_ch, in_ch).
    wq = wqkv[:, :hidden] * scale
    wkv = wqkv[:, hidden:]
    wqkv_t = jnp.concatenate([wq, wkv], axis=1).T                     # (3*hidden, C)
    # Per-head output weight: wout_heads[h, c, dd] = wout[h*d + dd, c].
    wout_heads = wout.reshape(num_heads, dim_per_head, C).transpose(0, 2, 1)  # (H, C, d)
    bout_col = bout.reshape(C, 1)                                     # (C, 1)

    kernel = functools.partial(attention_kernel,
                               num_heads=num_heads, dim_per_head=dim_per_head)

    out = pl.pallas_call(
        kernel,
        out_shape=jax.ShapeDtypeStruct((B, C, N), jnp.float32),
        grid_spec=pltpu.PrefetchScalarGridSpec(
            num_scalar_prefetch=0,
            grid=(B,),
            in_specs=[
                pl.BlockSpec((1, C, N), lambda b: (b, 0, 0)),
                pl.BlockSpec((3 * hidden, C), lambda b: (0, 0)),
                pl.BlockSpec((num_heads, C, dim_per_head), lambda b: (0, 0, 0)),
                pl.BlockSpec((C, 1), lambda b: (0, 0)),
            ],
            out_specs=pl.BlockSpec((1, C, N), lambda b: (b, 0, 0)),
        ),
        compiler_params=pltpu.CompilerParams(
            dimension_semantics=("parallel",),
            vmem_limit_bytes=32 * 1024 * 1024,
        ),
    )(xT, wqkv_t, wout_heads, bout_col)

    # (B, C, N) -> NCHW: pure reshape.
    return out.reshape(B, C, H, W)


def attention_reference(x_nchw, wqkv, wout, bout, *, num_heads, dim_per_head):
    """Pure-JAX f32 reference mirroring the PyTorch forward exactly."""
    B, C, H, W = x_nchw.shape
    N = H * W
    hidden = num_heads * dim_per_head
    scale = dim_per_head ** (-0.5)

    x = jnp.transpose(x_nchw, (0, 2, 3, 1)).reshape(B, N, C)
    qkv = jnp.einsum('bnc,ck->bnk', x, wqkv)
    q, k, v = jnp.split(qkv, 3, axis=-1)

    def per_head(t):  # (B, N, hidden) -> (B, nh, N, d)
        return t.reshape(B, N, num_heads, dim_per_head).transpose(0, 2, 1, 3)

    q, k, v = per_head(q) * scale, per_head(k), per_head(v)
    sim = jnp.einsum('bhid,bhjd->bhij', q, k)
    sim = sim - jnp.max(sim, axis=-1, keepdims=True)
    atten = jax.nn.softmax(sim, axis=-1)
    out = jnp.einsum('bhij,bhjd->bhid', atten, v)          # (B, nh, N, d)
    out = out.transpose(0, 2, 1, 3).reshape(B, N, hidden)  # channel = head*d + dd
    y = jnp.einsum('bnh,hc->bnc', out, wout) + bout[0]
    return jnp.transpose(y.reshape(B, H, W, C), (0, 3, 1, 2))


if __name__ == "__main__":
    # Small shapes consistent with the module: dim=4, num_heads=4, dim_per_head=32
    B, DIM, H, W = 2, 4, 16, 16
    NUM_HEADS, DIM_PER_HEAD = 4, 32
    HIDDEN = NUM_HEADS * DIM_PER_HEAD

    key = jax.random.PRNGKey(0)
    kx, kq, kw, kb = jax.random.split(key, 4)

    x = jax.random.normal(kx, (B, DIM, H, W), dtype=jnp.float32)
    # Deterministic synthetic parameters (PyTorch conv weight[:, :, 0, 0].T layout).
    wqkv = 0.1 * jax.random.normal(kq, (DIM, 3 * HIDDEN), dtype=jnp.float32)
    wout = 0.1 * jax.random.normal(kw, (HIDDEN, DIM), dtype=jnp.float32)
    bout = 0.1 * jax.random.normal(kb, (1, DIM), dtype=jnp.float32)

    y = attention_pallas(x, wqkv, wout, bout,
                         num_heads=NUM_HEADS, dim_per_head=DIM_PER_HEAD)
    y = jax.block_until_ready(y)

    y_ref = attention_reference(x, wqkv, wout, bout,
                                num_heads=NUM_HEADS, dim_per_head=DIM_PER_HEAD)

    assert y.shape == (B, DIM, H, W)
    # Tolerance loosened vs pure-f32 because the attention matmuls use bf16 MXU
    # operands (f32 accumulation) and the softmax denom uses approx reciprocal.
    assert jnp.allclose(y, y_ref, rtol=2e-2, atol=2e-2), "mismatch vs reference"
    print("KERNEL_OK")
</pallas_src>

<mosaic_0001>
module attributes {stable_mosaic.version = 11 : i64} {
  func.func @attention_kernel(%arg0: i32, %arg1: memref<1x4x256xf32, #tpu.memory_space<vmem>>, %arg2: memref<384x4xf32, #tpu.memory_space<vmem>>, %arg3: memref<4x4x32xf32, #tpu.memory_space<vmem>>, %arg4: memref<4x1xf32, #tpu.memory_space<vmem>>, %arg5: memref<1x4x256xf32, #tpu.memory_space<vmem>>) attributes {dimension_semantics = [#tpu.dimension_semantics<parallel>], iteration_bounds = array<i64: 2>, scalar_prefetch = 0 : i64, scratch_operands = 0 : i64, tpu.core_type = #tpu.core_type<tc>, window_params = [{transform_indices = @transform_0, window_bounds = array<i64: 1, 4, 256>}, {pipeline_mode = #tpu.pipeline_mode<synchronous>, transform_indices = @transform_1, window_bounds = array<i64: 384, 4>}, {pipeline_mode = #tpu.pipeline_mode<synchronous>, transform_indices = @transform_2, window_bounds = array<i64: 4, 4, 32>}, {pipeline_mode = #tpu.pipeline_mode<synchronous>, transform_indices = @transform_3, window_bounds = array<i64: 4, 1>}, {transform_indices = @transform_4, window_bounds = array<i64: 1, 4, 256>}]} {
    %c0 = arith.constant 0 : index
    %c0_0 = arith.constant 0 : index
    %c0_1 = arith.constant 0 : index
    %0 = vector.load %arg1[%c0, %c0_0, %c0_1] : memref<1x4x256xf32, #tpu.memory_space<vmem>>, vector<1x4x256xf32>
    %1 = vector.shape_cast %0 : vector<1x4x256xf32> to vector<4x256xf32>
    %c0_2 = arith.constant 0 : index
    %c0_3 = arith.constant 0 : index
    %2 = vector.load %arg2[%c0_2, %c0_3] : memref<384x4xf32, #tpu.memory_space<vmem>>, vector<384x4xf32>
    %cst = arith.constant dense<0.000000e+00> : vector<384x256xf32>
    %3 = tpu.matmul %2, %1, %cst {dimension_numbers = #tpu.dot_dimension_numbers<[1], [0], [0], [1], [0, 0, 1, 1], [], []>} : vector<384x4xf32>, vector<4x256xf32>, vector<384x256xf32> -> vector<384x256xf32>
    %cst_4 = arith.constant 0.000000e+00 : f32
    %4 = vector.broadcast %cst_4 : f32 to vector<4x256xf32>
    %5 = vector.extract_strided_slice %3 {offsets = [0, 0], sizes = [32, 256], strides = [1, 1]} : vector<384x256xf32> to vector<32x256xf32>
    %6 = vector.extract_strided_slice %3 {offsets = [128, 0], sizes = [32, 256], strides = [1, 1]} : vector<384x256xf32> to vector<32x256xf32>
    %7 = vector.extract_strided_slice %3 {offsets = [256, 0], sizes = [32, 256], strides = [1, 1]} : vector<384x256xf32> to vector<32x256xf32>
    %8 = tpu.transpose %6, [1, 0] : vector<32x256xf32> -> vector<256x32xf32>
    %9 = arith.truncf %8 : vector<256x32xf32> to vector<256x32xbf16>
    %10 = arith.truncf %5 : vector<32x256xf32> to vector<32x256xbf16>
    %cst_5 = arith.constant dense<0.000000e+00> : vector<256x256xf32>
    %11 = tpu.matmul %9, %10, %cst_5 {dimension_numbers = #tpu.dot_dimension_numbers<[1], [0], [0], [1], [0, 0, 1, 1], [], []>} : vector<256x32xbf16>, vector<32x256xbf16>, vector<256x256xf32> -> vector<256x256xf32>
    %cst_6 = arith.constant dense<0xFF800000> : vector<256xf32>
    %12 = vector.multi_reduction <maximumf>, %11, %cst_6 [0] : vector<256x256xf32> to vector<256xf32>
    %13 = vector.shape_cast %12 : vector<256xf32> to vector<1x256xf32>
    %14 = vector.broadcast %13 : vector<1x256xf32> to vector<256x256xf32>
    %15 = arith.subf %11, %14 : vector<256x256xf32>
    %16 = math.exp %15 : vector<256x256xf32>
    %cst_7 = arith.constant dense<0.000000e+00> : vector<256xf32>
    %17 = vector.multi_reduction <add>, %16, %cst_7 [0] : vector<256x256xf32> to vector<256xf32>
    %18 = vector.shape_cast %17 : vector<256xf32> to vector<1x256xf32>
    %19 = arith.truncf %7 : vector<32x256xf32> to vector<32x256xbf16>
    %20 = arith.truncf %16 : vector<256x256xf32> to vector<256x256xbf16>
    %cst_8 = arith.constant dense<0.000000e+00> : vector<32x256xf32>
    %21 = tpu.matmul %19, %20, %cst_8 {dimension_numbers = #tpu.dot_dimension_numbers<[1], [0], [0], [1], [0, 0, 1, 1], [], []>} : vector<32x256xbf16>, vector<256x256xbf16>, vector<32x256xf32> -> vector<32x256xf32>
    %22 = tpu.reciprocal %18 {approx = true} : vector<1x256xf32> -> vector<1x256xf32>
    %23 = vector.broadcast %22 : vector<1x256xf32> to vector<32x256xf32>
    %24 = arith.mulf %21, %23 : vector<32x256xf32>
    %c0_9 = arith.constant 0 : index
    %c0_10 = arith.constant 0 : index
    %c0_11 = arith.constant 0 : index
    %25 = vector.load %arg3[%c0_9, %c0_10, %c0_11] : memref<4x4x32xf32, #tpu.memory_space<vmem>>, vector<1x4x32xf32>
    %26 = vector.shape_cast %25 : vector<1x4x32xf32> to vector<4x32xf32>
    %cst_12 = arith.constant dense<0.000000e+00> : vector<4x256xf32>
    %27 = tpu.matmul %26, %24, %cst_12 {dimension_numbers = #tpu.dot_dimension_numbers<[1], [0], [0], [1], [0, 0, 1, 1], [], []>} : vector<4x32xf32>, vector<32x256xf32>, vector<4x256xf32> -> vector<4x256xf32>
    %28 = arith.addf %4, %27 : vector<4x256xf32>
    %29 = vector.extract_strided_slice %3 {offsets = [32, 0], sizes = [32, 256], strides = [1, 1]} : vector<384x256xf32> to vector<32x256xf32>
    %30 = vector.extract_strided_slice %3 {offsets = [160, 0], sizes = [32, 256], strides = [1, 1]} : vector<384x256xf32> to vector<32x256xf32>
    %31 = vector.extract_strided_slice %3 {offsets = [288, 0], sizes = [32, 256], strides = [1, 1]} : vector<384x256xf32> to vector<32x256xf32>
    %32 = tpu.transpose %30, [1, 0] : vector<32x256xf32> -> vector<256x32xf32>
    %33 = arith.truncf %32 : vector<256x32xf32> to vector<256x32xbf16>
    %34 = arith.truncf %29 : vector<32x256xf32> to vector<32x256xbf16>
    %cst_13 = arith.constant dense<0.000000e+00> : vector<256x256xf32>
    %35 = tpu.matmul %33, %34, %cst_13 {dimension_numbers = #tpu.dot_dimension_numbers<[1], [0], [0], [1], [0, 0, 1, 1], [], []>} : vector<256x32xbf16>, vector<32x256xbf16>, vector<256x256xf32> -> vector<256x256xf32>
    %cst_14 = arith.constant dense<0xFF800000> : vector<256xf32>
    %36 = vector.multi_reduction <maximumf>, %35, %cst_14 [0] : vector<256x256xf32> to vector<256xf32>
    %37 = vector.shape_cast %36 : vector<256xf32> to vector<1x256xf32>
    %38 = vector.broadcast %37 : vector<1x256xf32> to vector<256x256xf32>
    %39 = arith.subf %35, %38 : vector<256x256xf32>
    %40 = math.exp %39 : vector<256x256xf32>
    %cst_15 = arith.constant dense<0.000000e+00> : vector<256xf32>
    %41 = vector.multi_reduction <add>, %40, %cst_15 [0] : vector<256x256xf32> to vector<256xf32>
    %42 = vector.shape_cast %41 : vector<256xf32> to vector<1x256xf32>
    %43 = arith.truncf %31 : vector<32x256xf32> to vector<32x256xbf16>
    %44 = arith.truncf %40 : vector<256x256xf32> to vector<256x256xbf16>
    %cst_16 = arith.constant dense<0.000000e+00> : vector<32x256xf32>
    %45 = tpu.matmul %43, %44, %cst_16 {dimension_numbers = #tpu.dot_dimension_numbers<[1], [0], [0], [1], [0, 0, 1, 1], [], []>} : vector<32x256xbf16>, vector<256x256xbf16>, vector<32x256xf32> -> vector<32x256xf32>
    %46 = tpu.reciprocal %42 {approx = true} : vector<1x256xf32> -> vector<1x256xf32>
    %47 = vector.broadcast %46 : vector<1x256xf32> to vector<32x256xf32>
    %48 = arith.mulf %45, %47 : vector<32x256xf32>
    %c1 = arith.constant 1 : index
    %c0_17 = arith.constant 0 : index
    %c0_18 = arith.constant 0 : index
    %49 = vector.load %arg3[%c1, %c0_17, %c0_18] : memref<4x4x32xf32, #tpu.memory_space<vmem>>, vector<1x4x32xf32>
    %50 = vector.shape_cast %49 : vector<1x4x32xf32> to vector<4x32xf32>
    %cst_19 = arith.constant dense<0.000000e+00> : vector<4x256xf32>
    %51 = tpu.matmul %50, %48, %cst_19 {dimension_numbers = #tpu.dot_dimension_numbers<[1], [0], [0], [1], [0, 0, 1, 1], [], []>} : vector<4x32xf32>, vector<32x256xf32>, vector<4x256xf32> -> vector<4x256xf32>
    %52 = arith.addf %28, %51 : vector<4x256xf32>
    %53 = vector.extract_strided_slice %3 {offsets = [64, 0], sizes = [32, 256], strides = [1, 1]} : vector<384x256xf32> to vector<32x256xf32>
    %54 = vector.extract_strided_slice %3 {offsets = [192, 0], sizes = [32, 256], strides = [1, 1]} : vector<384x256xf32> to vector<32x256xf32>
    %55 = vector.extract_strided_slice %3 {offsets = [320, 0], sizes = [32, 256], strides = [1, 1]} : vector<384x256xf32> to vector<32x256xf32>
    %56 = tpu.transpose %54, [1, 0] : vector<32x256xf32> -> vector<256x32xf32>
    %57 = arith.truncf %56 : vector<256x32xf32> to vector<256x32xbf16>
    %58 = arith.truncf %53 : vector<32x256xf32> to vector<32x256xbf16>
    %cst_20 = arith.constant dense<0.000000e+00> : vector<256x256xf32>
    %59 = tpu.matmul %57, %58, %cst_20 {dimension_numbers = #tpu.dot_dimension_numbers<[1], [0], [0], [1], [0, 0, 1, 1], [], []>} : vector<256x32xbf16>, vector<32x256xbf16>, vector<256x256xf32> -> vector<256x256xf32>
    %cst_21 = arith.constant dense<0xFF800000> : vector<256xf32>
    %60 = vector.multi_reduction <maximumf>, %59, %cst_21 [0] : vector<256x256xf32> to vector<256xf32>
    %61 = vector.shape_cast %60 : vector<256xf32> to vector<1x256xf32>
    %62 = vector.broadcast %61 : vector<1x256xf32> to vector<256x256xf32>
    %63 = arith.subf %59, %62 : vector<256x256xf32>
    %64 = math.exp %63 : vector<256x256xf32>
    %cst_22 = arith.constant dense<0.000000e+00> : vector<256xf32>
    %65 = vector.multi_reduction <add>, %64, %cst_22 [0] : vector<256x256xf32> to vector<256xf32>
    %66 = vector.shape_cast %65 : vector<256xf32> to vector<1x256xf32>
    %67 = arith.truncf %55 : vector<32x256xf32> to vector<32x256xbf16>
    %68 = arith.truncf %64 : vector<256x256xf32> to vector<256x256xbf16>
    %cst_23 = arith.constant dense<0.000000e+00> : vector<32x256xf32>
    %69 = tpu.matmul %67, %68, %cst_23 {dimension_numbers = #tpu.dot_dimension_numbers<[1], [0], [0], [1], [0, 0, 1, 1], [], []>} : vector<32x256xbf16>, vector<256x256xbf16>, vector<32x256xf32> -> vector<32x256xf32>
    %70 = tpu.reciprocal %66 {approx = true} : vector<1x256xf32> -> vector<1x256xf32>
    %71 = vector.broadcast %70 : vector<1x256xf32> to vector<32x256xf32>
    %72 = arith.mulf %69, %71 : vector<32x256xf32>
    %c2 = arith.constant 2 : index
    %c0_24 = arith.constant 0 : index
    %c0_25 = arith.constant 0 : index
    %73 = vector.load %arg3[%c2, %c0_24, %c0_25] : memref<4x4x32xf32, #tpu.memory_space<vmem>>, vector<1x4x32xf32>
    %74 = vector.shape_cast %73 : vector<1x4x32xf32> to vector<4x32xf32>
    %cst_26 = arith.constant dense<0.000000e+00> : vector<4x256xf32>
    %75 = tpu.matmul %74, %72, %cst_26 {dimension_numbers = #tpu.dot_dimension_numbers<[1], [0], [0], [1], [0, 0, 1, 1], [], []>} : vector<4x32xf32>, vector<32x256xf32>, vector<4x256xf32> -> vector<4x256xf32>
    %76 = arith.addf %52, %75 : vector<4x256xf32>
    %77 = vector.extract_strided_slice %3 {offsets = [96, 0], sizes = [32, 256], strides = [1, 1]} : vector<384x256xf32> to vector<32x256xf32>
    %78 = vector.extract_strided_slice %3 {offsets = [224, 0], sizes = [32, 256], strides = [1, 1]} : vector<384x256xf32> to vector<32x256xf32>
    %79 = vector.extract_strided_slice %3 {offsets = [352, 0], sizes = [32, 256], strides = [1, 1]} : vector<384x256xf32> to vector<32x256xf32>
    %80 = tpu.transpose %78, [1, 0] : vector<32x256xf32> -> vector<256x32xf32>
    %81 = arith.truncf %80 : vector<256x32xf32> to vector<256x32xbf16>
    %82 = arith.truncf %77 : vector<32x256xf32> to vector<32x256xbf16>
    %cst_27 = arith.constant dense<0.000000e+00> : vector<256x256xf32>
    %83 = tpu.matmul %81, %82, %cst_27 {dimension_numbers = #tpu.dot_dimension_numbers<[1], [0], [0], [1], [0, 0, 1, 1], [], []>} : vector<256x32xbf16>, vector<32x256xbf16>, vector<256x256xf32> -> vector<256x256xf32>
    %cst_28 = arith.constant dense<0xFF800000> : vector<256xf32>
    %84 = vector.multi_reduction <maximumf>, %83, %cst_28 [0] : vector<256x256xf32> to vector<256xf32>
    %85 = vector.shape_cast %84 : vector<256xf32> to vector<1x256xf32>
    %86 = vector.broadcast %85 : vector<1x256xf32> to vector<256x256xf32>
    %87 = arith.subf %83, %86 : vector<256x256xf32>
    %88 = math.exp %87 : vector<256x256xf32>
    %cst_29 = arith.constant dense<0.000000e+00> : vector<256xf32>
    %89 = vector.multi_reduction <add>, %88, %cst_29 [0] : vector<256x256xf32> to vector<256xf32>
    %90 = vector.shape_cast %89 : vector<256xf32> to vector<1x256xf32>
    %91 = arith.truncf %79 : vector<32x256xf32> to vector<32x256xbf16>
    %92 = arith.truncf %88 : vector<256x256xf32> to vector<256x256xbf16>
    %cst_30 = arith.constant dense<0.000000e+00> : vector<32x256xf32>
    %93 = tpu.matmul %91, %92, %cst_30 {dimension_numbers = #tpu.dot_dimension_numbers<[1], [0], [0], [1], [0, 0, 1, 1], [], []>} : vector<32x256xbf16>, vector<256x256xbf16>, vector<32x256xf32> -> vector<32x256xf32>
    %94 = tpu.reciprocal %90 {approx = true} : vector<1x256xf32> -> vector<1x256xf32>
    %95 = vector.broadcast %94 : vector<1x256xf32> to vector<32x256xf32>
    %96 = arith.mulf %93, %95 : vector<32x256xf32>
    %c3 = arith.constant 3 : index
    %c0_31 = arith.constant 0 : index
    %c0_32 = arith.constant 0 : index
    %97 = vector.load %arg3[%c3, %c0_31, %c0_32] : memref<4x4x32xf32, #tpu.memory_space<vmem>>, vector<1x4x32xf32>
    %98 = vector.shape_cast %97 : vector<1x4x32xf32> to vector<4x32xf32>
    %cst_33 = arith.constant dense<0.000000e+00> : vector<4x256xf32>
    %99 = tpu.matmul %98, %96, %cst_33 {dimension_numbers = #tpu.dot_dimension_numbers<[1], [0], [0], [1], [0, 0, 1, 1], [], []>} : vector<4x32xf32>, vector<32x256xf32>, vector<4x256xf32> -> vector<4x256xf32>
    %100 = arith.addf %76, %99 : vector<4x256xf32>
    %c0_34 = arith.constant 0 : index
    %c0_35 = arith.constant 0 : index
    %101 = vector.load %arg4[%c0_34, %c0_35] : memref<4x1xf32, #tpu.memory_space<vmem>>, vector<4x1xf32>
    %102 = vector.broadcast %101 : vector<4x1xf32> to vector<4x256xf32>
    %103 = arith.addf %100, %102 : vector<4x256xf32>
    %c0_36 = arith.constant 0 : index
    %c0_37 = arith.constant 0 : index
    %c0_38 = arith.constant 0 : index
    %104 = vector.load %arg5[%c0_36, %c0_37, %c0_38] : memref<1x4x256xf32, #tpu.memory_space<vmem>>, vector<1x4x256xf32>
    %105 = vector.shape_cast %104 : vector<1x4x256xf32> to vector<4x256xf32>
    %106 = vector.shape_cast %103 : vector<4x256xf32> to vector<1x4x256xf32>
    tpu.vector_store %arg5[%c0_36, %c0_37, %c0_38], %106 {strides = array<i32>} : memref<1x4x256xf32, #tpu.memory_space<vmem>>, vector<1x4x256xf32>,
    return
  }
  func.func @transform_0(%arg0: i32) -> (i32, i32, i32) {
    %c0_i32 = arith.constant 0 : i32
    %c0_i32_0 = arith.constant 0 : i32
    %c0_i32_1 = arith.constant 0 : i32
    return %arg0, %c0_i32, %c0_i32_0 : i32, i32, i32
  }
  func.func @transform_1(%arg0: i32) -> (i32, i32) {
    %c0_i32 = arith.constant 0 : i32
    %c0_i32_0 = arith.constant 0 : i32
    %c0_i32_1 = arith.constant 0 : i32
    return %c0_i32, %c0_i32_0 : i32, i32
  }
  func.func @transform_2(%arg0: i32) -> (i32, i32, i32) {
    %c0_i32 = arith.constant 0 : i32
    %c0_i32_0 = arith.constant 0 : i32
    %c0_i32_1 = arith.constant 0 : i32
    %c0_i32_2 = arith.constant 0 : i32
    return %c0_i32, %c0_i32_0, %c0_i32_1 : i32, i32, i32
  }
  func.func @transform_3(%arg0: i32) -> (i32, i32) {
    %c0_i32 = arith.constant 0 : i32
    %c0_i32_0 = arith.constant 0 : i32
    %c0_i32_1 = arith.constant 0 : i32
    return %c0_i32, %c0_i32_0 : i32, i32
  }
  func.func @transform_4(%arg0: i32) -> (i32, i32, i32) {
    %c0_i32 = arith.constant 0 : i32
    %c0_i32_0 = arith.constant 0 : i32
    %c0_i32_1 = arith.constant 0 : i32
    return %arg0, %c0_i32, %c0_i32_0 : i32, i32, i32
  }
}

</mosaic_0001>

<llo_original>
// kernel: tpu_custom_call.1
$region0: #{tpu_custom_call.1}
  #allocation0 [shape = 'u32[]', space=smem, size = 0x4, offset = 0x4, fixed_abs, tag = 'smem constant byte address 0x4 - core index']
  #allocation1 [shape = 'u32[144,128]{1,0:T(1,128)}', space=vmem, size = 0x12000, scoped, tag = 'internal scratch']
  %s0 = inlined_call_operand.vmem [shape: f32[2,4,256], index: 0, kind: input, shape index: {}]
  %s1 = inlined_call_operand.vmem [shape: f32[384,4], index: 1, kind: input, shape index: {}]
  %s2 = inlined_call_operand.vmem [shape: f32[4,4,32], index: 2, kind: input, shape index: {}]
  %s3 = inlined_call_operand.vmem [shape: f32[4,1], index: 3, kind: input, shape index: {}]
  %s4 = inlined_call_operand.hbm [shape: f32[2,4,256], index: 4, kind: output, shape index: {}]
  %s5 = sld [smem:[#allocation0]]
  $region49: #{tpu_custom_call.1} parent=0
    _
  %s7 = ssub.s32 1, %s5
  %s8 = scalar_select 0, %s7, %s5
  $region1: #{tpu_custom_call.1} parent=0
    #allocation2 [shape = 'u8[8192]{0}', space=vmem, size = 0x2000, scoped, tag = 'output window, operand 0']
    #allocation3 [shape = 's32[2]{0}', space=sflag, size = 0x8, scoped, tag = 'scoped memory for tpu_custom_call.1']
    %9 = vsyncpa [#allocation3], 0
    %s10 = scalar_lea.sflag [#allocation3], 1
    %11 = vsyncpa %s10, 0
    loop: start=0, step=1, limit=4
    $region2: #{tpu_custom_call.1} parent=1 // loop_pre_header
      _
    $region3: #{tpu_custom_call.1} parent=1 // loop_header
      %s13 = sphi 0, %s17
      %p14 = scmp.ge.s32.totalorder %s13, 4
      %s23 = sphi 0, %s25
      %s26 = sphi 0, %s23
      %s27 = sphi 0, %s26
      %s43 = sphi 0, %s27
      %s47 = sphi 0, %s47
      %s49 = sphi 0, %s47
      %s50 = sphi 0, %s49
      %s64 = sphi 0, %s50
      %s68 = sphi 0, %s68
      %s70 = sphi 0, %s68
      %s71 = sphi 0, %s70
      %s85 = sphi 0, %s71
      %s89 = sphi 0, %s89
      %s91 = sphi 0, %s89
      %s92 = sphi 0, %s91
      %s106 = sphi 0, %s92
      %s112 = sphi 0, %s114
      %s115 = sphi 0, %s112
      %s116 = sphi 0, %s115
      %s132 = sphi 0, %s116
    $region4: #{tpu_custom_call.1} parent=1 // loop_header_branch
      %16 = sbr.rel (%p14) target = $region8
    $region5: #{tpu_custom_call.1} parent=1 // loop_body
      %s18 = ssub.s32 %s13, 1
      %s19 = ssub.s32 %s13, 2
      %s20 = sadd.s32 %s13, 1
      %s21 = ssub.s32 %s13, %s20
      %p22 = scmp.eq.s32.totalorder %s21, 0
      %s24 = sadd.s32 %s23, 1
      %s25 = scalar_select %p22, %s23, %s24
      %p28 = pneg %p22
      %p29 = scmp.eq.s32.totalorder %s13, 1
      %p30 = por %p28, %p29
      %p31 = scmp.ne.s32.totalorder %s23, %s26
      %p32 = scmp.eq.s32.totalorder %s13, 0
      %p33 = por %p31, %p32
      %p34 = scmp.ne.s32.totalorder %s23, %s26
      %p35 = scmp.eq.s32.totalorder %s18, 1
      %p36 = por %p34, %p35
      %p37 = scmp.ne.s32.totalorder %s26, %s27
      %p38 = scmp.eq.s32.totalorder %s18, 0
      %p39 = por %p37, %p38
      %p40 = scmp.ne.s32.totalorder %s26, %s27
      %p41 = scmp.eq.s32.totalorder %s19, 1
      %p42 = por %p40, %p41
      %p44 = scmp.ne.s32.totalorder %s27, %s43
      %p45 = scmp.eq.s32.totalorder %s19, 0
      %p46 = por %p44, %p45
      %s48 = sadd.s32 %s47, 1
      %p51 = scmp.eq.s32.totalorder %s13, 1
      %p52 = scmp.ne.s32.totalorder %s47, %s49
      %p53 = scmp.eq.s32.totalorder %s13, 0
      %p54 = por %p52, %p53
      %p55 = scmp.ne.s32.totalorder %s47, %s49
      %p56 = scmp.eq.s32.totalorder %s18, 1
      %p57 = por %p55, %p56
      %p58 = scmp.ne.s32.totalorder %s49, %s50
      %p59 = scmp.eq.s32.totalorder %s18, 0
      %p60 = por %p58, %p59
      %p61 = scmp.ne.s32.totalorder %s49, %s50
      %p62 = scmp.eq.s32.totalorder %s19, 1
      %p63 = por %p61, %p62
      %p65 = scmp.ne.s32.totalorder %s50, %s64
      %p66 = scmp.eq.s32.totalorder %s19, 0
      %p67 = por %p65, %p66
      %s69 = sadd.s32 %s68, 1
      %p72 = scmp.eq.s32.totalorder %s13, 1
      %p73 = scmp.ne.s32.totalorder %s68, %s70
      %p74 = scmp.eq.s32.totalorder %s13, 0
      %p75 = por %p73, %p74
      %p76 = scmp.ne.s32.totalorder %s68, %s70
      %p77 = scmp.eq.s32.totalorder %s18, 1
      %p78 = por %p76, %p77
      %p79 = scmp.ne.s32.totalorder %s70, %s71
      %p80 = scmp.eq.s32.totalorder %s18, 0
      %p81 = por %p79, %p80
      %p82 = scmp.ne.s32.totalorder %s70, %s71
      %p83 = scmp.eq.s32.totalorder %s19, 1
      %p84 = por %p82, %p83
      %p86 = scmp.ne.s32.totalorder %s71, %s85
      %p87 = scmp.eq.s32.totalorder %s19, 0
      %p88 = por %p86, %p87
      %s90 = sadd.s32 %s89, 1
      %p93 = scmp.eq.s32.totalorder %s13, 1
      %p94 = scmp.ne.s32.totalorder %s89, %s91
      %p95 = scmp.eq.s32.totalorder %s13, 0
      %p96 = por %p94, %p95
      %p97 = scmp.ne.s32.totalorder %s89, %s91
      %p98 = scmp.eq.s32.totalorder %s18, 1
      %p99 = por %p97, %p98
      %p100 = scmp.ne.s32.totalorder %s91, %s92
      %p101 = scmp.eq.s32.totalorder %s18, 0
      %p102 = por %p100, %p101
      %p103 = scmp.ne.s32.totalorder %s91, %s92
      %p104 = scmp.eq.s32.totalorder %s19, 1
      %p105 = por %p103, %p104
      %p107 = scmp.ne.s32.totalorder %s92, %s106
      %p108 = scmp.eq.s32.totalorder %s19, 0
      %p109 = por %p107, %p108
      %s110 = ssub.s32 %s13, %s20
      %p111 = scmp.eq.s32.totalorder %s110, 0
      %s113 = sadd.s32 %s112, 1
      %s114 = scalar_select %p111, %s112, %s113
      %p117 = pneg %p111
      %p118 = scmp.eq.s32.totalorder %s13, 1
      %p119 = por %p117, %p118
      %p120 = scmp.ne.s32.totalorder %s112, %s115
      %p121 = scmp.eq.s32.totalorder %s13, 0
      %p122 = por %p120, %p121
      %p123 = scmp.ne.s32.totalorder %s112, %s115
      %p124 = scmp.eq.s32.totalorder %s18, 1
      %p125 = por %p123, %p124
      %p126 = scmp.ne.s32.totalorder %s115, %s116
      %p127 = scmp.eq.s32.totalorder %s18, 0
      %p128 = por %p126, %p127
      %p129 = scmp.ne.s32.totalorder %s115, %s116
      %p130 = scmp.eq.s32.totalorder %s19, 1
      %p131 = por %p129, %p130
      %p133 = scmp.ne.s32.totalorder %s116, %s132
      %p134 = scmp.eq.s32.totalorder %s19, 0
      %p135 = por %p133, %p134
      %p136 = scmp.le.s32.totalorder 1, %s13
      %p137 = scmp.lt.s32.totalorder %s13, 3
      %p138 = pnand %p136, %p137
      %p139 = pneg %p138
      // Predicated region
      $region9: #{tpu_custom_call.1} parent=5 // pred_check
        _
      $region10: #{tpu_custom_call.1} parent=5 // pred_check_branch
        %141 = sbr.rel (%p138) target = $region12
      $region11: #{tpu_custom_call.1} parent=5 // pred_region
        %s142 = ssub.s32 %s13, 1
        // Predicated region
        $region13: #{tpu_custom_call.1} parent=11 // pred_check
          %p143 = pneg %p60
        $region14: #{tpu_custom_call.1} parent=11 // pred_check_branch
          %145 = sbr.rel (%p143) target = $region16
        $region15: #{tpu_custom_call.1} parent=11 // pred_region
          _
        $region16: #{tpu_custom_call.1} parent=11 // pred_fallthru
          _
        // Predicated region
        $region17: #{tpu_custom_call.1} parent=11 // pred_check
          %p146 = pneg %p81
        $region18: #{tpu_custom_call.1} parent=11 // pred_check_branch
          %148 = sbr.rel (%p146) target = $region20
        $region19: #{tpu_custom_call.1} parent=11 // pred_region
          _
        $region20: #{tpu_custom_call.1} parent=11 // pred_fallthru
          _
        // Predicated region
        $region21: #{tpu_custom_call.1} parent=11 // pred_check
          %p149 = pneg %p102
        $region22: #{tpu_custom_call.1} parent=11 // pred_check_branch
          %151 = sbr.rel (%p149) target = $region24
        $region23: #{tpu_custom_call.1} parent=11 // pred_region
          _
        $region24: #{tpu_custom_call.1} parent=11 // pred_fallthru
          _
      $region12: #{tpu_custom_call.1} parent=5 // pred_fallthru
        _
      %p152 = scmp.lt.s32.totalorder %s13, 2
      // Predicated region
      $region25: #{tpu_custom_call.1} parent=5 // pred_check
        %p153 = pneg %p152
      $region26: #{tpu_custom_call.1} parent=5 // pred_check_branch
        %155 = sbr.rel (%p153) target = $region28
      $region27: #{tpu_custom_call.1} parent=5 // pred_region
        // Predicated region
        $region29: #{tpu_custom_call.1} parent=27 // pred_check
          %p156 = pneg %p33
        $region30: #{tpu_custom_call.1} parent=27 // pred_check_branch
          %158 = sbr.rel (%p156) target = $region32
        $region31: #{tpu_custom_call.1} parent=27 // pred_region
          %p159 = scmp.lt.s32.totalorder %s13, 1
          %s160 = scalar_select %p159, %s13, 1
          %s161 = smul.addr %s160, 2
          %s162 = smul.addr %s161, 4
          %s163 = scalar_lea.vmem %s0, %s162
        $region32: #{tpu_custom_call.1} parent=27 // pred_fallthru
          _
      $region28: #{tpu_custom_call.1} parent=5 // pred_fallthru
        _
      %p164 = scmp.le.s32.totalorder 1, %s13
      %p165 = scmp.lt.s32.totalorder %s13, 3
      %p166 = pnand %p164, %p165
      %p167 = pneg %p166
      // Predicated region
      $region33: #{tpu_custom_call.1} parent=5 // pred_check
        _
      $region34: #{tpu_custom_call.1} parent=5 // pred_check_branch
        %169 = sbr.rel (%p166) target = $region36
      $region35: #{tpu_custom_call.1} parent=5 // pred_region
        %s170 = ssub.s32 %s13, 1
        %p171 = scmp.lt.s32.totalorder %s18, 1
        %s172 = scalar_select %p171, %s18, 1
        %s173 = smul.addr %s172, 2
        %s174 = smul.addr %s173, 4
        %s175 = scalar_lea.vmem %s0, %s174
        %p176 = pneg %p39
        %p177 = pneg %p36
        %p178 = pneg %p60
        %p179 = pneg %p57
        %p180 = pneg %p81
        %p181 = pneg %p78
        %p182 = pneg %p102
        %p183 = pneg %p99
        %p184 = pneg %p128
        %p185 = pneg %p125
        %s186 = sand.u32 %s115, 1
        %s187 = scalar_lea.sflag [#allocation3], %s186
        %s188 = sand.u32 %s115, 1
        %s189 = smul.addr %s188, 8
        %s190 = scalar_lea.vmem [#allocation2], %s189
        %p191 = scmp.lt.s32.totalorder %s18, 1
        %s192 = scalar_select %p191, %s18, 1
        %s193 = smul.addr %s192, 2
        %s194 = smul.addr %s193, 4
        %s195 = scalar_lea.vmem %s0, %s194
        %v197 = vld [vmem:[%s195] sm:$0xff]
        %v198 = vld [vmem:[%s1] sm:$0xff]
        %v199 = vld [vmem:[%s1 + $0x8] sm:$0xff]
        %v200 = vld [vmem:[%s1 + $0x10] sm:$0xff]
        %v201 = vld [vmem:[%s1 + $0x18] sm:$0xff]
        %v202 = vld [vmem:[%s1 + $0x20] sm:$0xff]
        %v203 = vld [vmem:[%s1 + $0x28] sm:$0xff]
        %v204 = vld [vmem:[%s1 + $0x30] sm:$0xff]
        %v205 = vld [vmem:[%s1 + $0x38] sm:$0xff]
        %v206 = vld [vmem:[%s1 + $0x40] sm:$0xff]
        %v207 = vld [vmem:[%s1 + $0x48] sm:$0xff]
        %v208 = vld [vmem:[%s1 + $0x50] sm:$0xff]
        %v209 = vld [vmem:[%s1 + $0x58] sm:$0xff]
        %v210 = vld [vmem:[%s1 + $0x60] sm:$0xff]
        %v211 = vld [vmem:[%s1 + $0x68] sm:$0xff]
        %v212 = vld [vmem:[%s1 + $0x70] sm:$0xff]
        %v213 = vld [vmem:[%s1 + $0x78] sm:$0xff]
        %v214 = vld [vmem:[%s1 + $0x80] sm:$0xff]
        %v215 = vld [vmem:[%s1 + $0x88] sm:$0xff]
        %v216 = vld [vmem:[%s1 + $0x90] sm:$0xff]
        %v217 = vld [vmem:[%s1 + $0x98] sm:$0xff]
        %v218 = vld [vmem:[%s1 + $0xa0] sm:$0xff]
        %v219 = vld [vmem:[%s1 + $0xa8] sm:$0xff]
        %v220 = vld [vmem:[%s1 + $0xb0] sm:$0xff]
        %v221 = vld [vmem:[%s1 + $0xb8] sm:$0xff]
        %v222 = vld [vmem:[%s1 + $0xc0] sm:$0xff]
        %v223 = vld [vmem:[%s1 + $0xc8] sm:$0xff]
        %v224 = vld [vmem:[%s1 + $0xd0] sm:$0xff]
        %v225 = vld [vmem:[%s1 + $0xd8] sm:$0xff]
        %v226 = vld [vmem:[%s1 + $0xe0] sm:$0xff]
        %v227 = vld [vmem:[%s1 + $0xe8] sm:$0xff]
        %v228 = vld [vmem:[%s1 + $0xf0] sm:$0xff]
        %v229 = vld [vmem:[%s1 + $0xf8] sm:$0xff]
        %v230 = vld [vmem:[%s1 + $0x100] sm:$0xff]
        %v231 = vld [vmem:[%s1 + $0x108] sm:$0xff]
        %v232 = vld [vmem:[%s1 + $0x110] sm:$0xff]
        %v233 = vld [vmem:[%s1 + $0x118] sm:$0xff]
        %v234 = vld [vmem:[%s1 + $0x120] sm:$0xff]
        %v235 = vld [vmem:[%s1 + $0x128] sm:$0xff]
        %v236 = vld [vmem:[%s1 + $0x130] sm:$0xff]
        %v237 = vld [vmem:[%s1 + $0x138] sm:$0xff]
        %v238 = vld [vmem:[%s1 + $0x140] sm:$0xff]
        %v239 = vld [vmem:[%s1 + $0x148] sm:$0xff]
        %v240 = vld [vmem:[%s1 + $0x150] sm:$0xff]
        %v241 = vld [vmem:[%s1 + $0x158] sm:$0xff]
        %v242 = vld [vmem:[%s1 + $0x160] sm:$0xff]
        %v243 = vld [vmem:[%s1 + $0x168] sm:$0xff]
        %v244 = vld [vmem:[%s1 + $0x170] sm:$0xff]
        %v245 = vld [vmem:[%s1 + $0x178] sm:$0xff]
        %v247 = vcombine.high %v197, %v197
        %vm248 = vcmask 31744
        %v250 = vsel %vm248, %v198, 0
        %v253 = vsel %vm248, %v199, 0
        %v256 = vsel %vm248, %v200, 0
        %v259 = vsel %vm248, %v201, 0
        %v262 = vsel %vm248, %v202, 0
        %v265 = vsel %vm248, %v203, 0
        %v268 = vsel %vm248, %v204, 0
        %v271 = vsel %vm248, %v205, 0
        %v274 = vsel %vm248, %v206, 0
        %v277 = vsel %vm248, %v207, 0
        %v280 = vsel %vm248, %v208, 0
        %v283 = vsel %vm248, %v209, 0
        %v286 = vsel %vm248, %v210, 0
        %v289 = vsel %vm248, %v211, 0
        %v292 = vsel %vm248, %v212, 0
        %v295 = vsel %vm248, %v213, 0
        %v298 = vsel %vm248, %v214, 0
        %v301 = vsel %vm248, %v215, 0
        %v304 = vsel %vm248, %v216, 0
        %v307 = vsel %vm248, %v217, 0
        %v310 = vsel %vm248, %v218, 0
        %v313 = vsel %vm248, %v219, 0
        %v316 = vsel %vm248, %v220, 0
        %v319 = vsel %vm248, %v221, 0
        %v322 = vsel %vm248, %v222, 0
        %v325 = vsel %vm248, %v223, 0
        %v328 = vsel %vm248, %v224, 0
        %v331 = vsel %vm248, %v225, 0
        %v334 = vsel %vm248, %v226, 0
        %v337 = vsel %vm248, %v227, 0
        %v340 = vsel %vm248, %v228, 0
        %v343 = vsel %vm248, %v229, 0
        %v346 = vsel %vm248, %v230, 0
        %v349 = vsel %vm248, %v231, 0
        %v352 = vsel %vm248, %v232, 0
        %v355 = vsel %vm248, %v233, 0
        %v358 = vsel %vm248, %v234, 0
        %v361 = vsel %vm248, %v235, 0
        %v364 = vsel %vm248, %v236, 0
        %v367 = vsel %vm248, %v237, 0
        %v370 = vsel %vm248, %v238, 0
        %v373 = vsel %vm248, %v239, 0
        %v376 = vsel %vm248, %v240, 0
        %v379 = vsel %vm248, %v241, 0
        %v382 = vsel %vm248, %v242, 0
        %v385 = vsel %vm248, %v243, 0
        %v388 = vsel %vm248, %v244, 0
        %v391 = vsel %vm248, %v245, 0
        %vm393 = vcmask 1043456
        %v394 = vsel %vm393, %v197, 0
        %v396 = vsel %vm393, %v247, 0
        %398 = vmatprep.subr.mxu0 %v396
        %399 = vmatpush1.msra.mxu0 %v394
        %400 = vmatprep.subr.mxu0 0.0
        %401 = vmatpush1.msra.mxu0 0.0
        %402 = vmatprep.subr.mxu0 0.0
        %403 = vmatpush1.msra.mxu0 0.0
        %404 = vmatprep.subr.mxu0 0.0
        %405 = vmatpush1.msra.mxu0 0.0
        %406 = vmatprep.subr.mxu0 0.0
        %407 = vmatpush1.msra.mxu0 0.0
        %408 = vmatprep.subr.mxu0 0.0
        %409 = vmatpush1.msra.mxu0 0.0
        %410 = vmatprep.subr.mxu0 0.0
        %411 = vmatpush1.msra.mxu0 0.0
        %412 = vmatprep.subr.mxu0 0.0
        %413 = vmatpush1.msra.mxu0 0.0
        %414 = vmatprep.subr.mxu0 0.0
        %415 = vmatpush1.msra.mxu0 0.0
        %416 = vmatprep.subr.mxu0 0.0
        %417 = vmatpush1.msra.mxu0 0.0
        %418 = vmatprep.subr.mxu0 0.0
        %419 = vmatpush1.msra.mxu0 0.0
        %420 = vmatprep.subr.mxu0 0.0
        %421 = vmatpush1.msra.mxu0 0.0
        %422 = vmatprep.subr.mxu0 0.0
        %423 = vmatpush1.msra.mxu0 0.0
        %424 = vmatprep.subr.mxu0 0.0
        %425 = vmatpush1.msra.mxu0 0.0
        %426 = vmatprep.subr.mxu0 0.0
        %427 = vmatpush1.msra.mxu0 0.0
        %428 = vmatprep.subr.mxu0 0.0
        %429 = vmatpush1.msra.mxu0 0.0
        %430 = vmatprep.subr.mxu0 0.0
        %431 = vmatpush1.msra.mxu0 0.0
        %432 = vmatprep.subr.mxu0 0.0
        %433 = vmatpush1.msra.mxu0 0.0
        %434 = vmatprep.subr.mxu0 0.0
        %435 = vmatpush1.msra.mxu0 0.0
        %436 = vmatprep.subr.mxu0 0.0
        %437 = vmatpush1.msra.mxu0 0.0
        %438 = vmatprep.subr.mxu0 0.0
        %439 = vmatpush1.msra.mxu0 0.0
        %440 = vmatprep.subr.mxu0 0.0
        %441 = vmatpush1.msra.mxu0 0.0
        %442 = vmatprep.subr.mxu0 0.0
        %443 = vmatpush1.msra.mxu0 0.0
        %444 = vmatprep.subr.mxu0 0.0
        %445 = vmatpush1.msra.mxu0 0.0
        %446 = vmatprep.subr.mxu0 0.0
        %447 = vmatpush1.msra.mxu0 0.0
        %448 = vmatprep.subr.mxu0 0.0
        %449 = vmatpush1.msra.mxu0 0.0
        %450 = vmatprep.subr.mxu0 0.0
        %451 = vmatpush1.msra.mxu0 0.0
        %452 = vmatprep.subr.mxu0 0.0
        %453 = vmatpush1.msra.mxu0 0.0
        %454 = vmatprep.subr.mxu0 0.0
        %455 = vmatpush1.msra.mxu0 0.0
        %456 = vmatprep.subr.mxu0 0.0
        %457 = vmatpush1.msra.mxu0 0.0
        %458 = vmatprep.subr.mxu0 0.0
        %459 = vmatpush1.msra.mxu0 0.0
        %460 = vmatprep.subr.mxu0 0.0
        %461 = vmatpush1.msra.mxu0 0.0
        %462 = vmatprep.mubr.f32.mxu0 0.0
        %463 = vmatmul.mubr.f32.gmra.mrb[0].mxu0 %v250
        %v464 = vpop.f32.mrb[0].mxu0
        %v465 = vadd.f32 0.0, %v464
        %v466 = vpop.f32.mrb[0].mxu0
        %v467 = vadd.f32 0.0, %v466
        %468 = vmatprep.mubr.f32.mxu0 0.0
        %469 = vmatmul.mubr.f32.gmra.mrb[0].mxu0 %v253
        %v470 = vpop.f32.mrb[0].mxu0
        %v471 = vadd.f32 0.0, %v470
        %v472 = vpop.f32.mrb[0].mxu0
        %v473 = vadd.f32 0.0, %v472
        %474 = vmatprep.mubr.f32.mxu0 0.0
        %475 = vmatmul.mubr.f32.gmra.mrb[0].mxu0 %v256
        %v476 = vpop.f32.mrb[0].mxu0
        %v477 = vadd.f32 0.0, %v476
        %v478 = vpop.f32.mrb[0].mxu0
        %v479 = vadd.f32 0.0, %v478
        %480 = vmatprep.mubr.f32.mxu0 0.0
        %481 = vmatmul.mubr.f32.gmra.mrb[0].mxu0 %v259
        %v482 = vpop.f32.mrb[0].mxu0
        %v483 = vadd.f32 0.0, %v482
        %v484 = vpop.f32.mrb[0].mxu0
        %v485 = vadd.f32 0.0, %v484
        %486 = vmatprep.mubr.f32.mxu0 0.0
        %487 = vmatmul.mubr.f32.gmra.mrb[0].mxu0 %v262
        %v488 = vpop.f32.mrb[0].mxu0
        %v489 = vadd.f32 0.0, %v488
        %v490 = vpop.f32.mrb[0].mxu0
        %v491 = vadd.f32 0.0, %v490
        %492 = vmatprep.mubr.f32.mxu0 0.0
        %493 = vmatmul.mubr.f32.gmra.mrb[0].mxu0 %v265
        %v494 = vpop.f32.mrb[0].mxu0
        %v495 = vadd.f32 0.0, %v494
        %v496 = vpop.f32.mrb[0].mxu0
        %v497 = vadd.f32 0.0, %v496
        %498 = vmatprep.mubr.f32.mxu0 0.0
        %499 = vmatmul.mubr.f32.gmra.mrb[0].mxu0 %v268
        %v500 = vpop.f32.mrb[0].mxu0
        %v501 = vadd.f32 0.0, %v500
        %v502 = vpop.f32.mrb[0].mxu0
        %v503 = vadd.f32 0.0, %v502
        %504 = vmatprep.mubr.f32.mxu0 0.0
        %505 = vmatmul.mubr.f32.gmra.mrb[0].mxu0 %v271
        %v506 = vpop.f32.mrb[0].mxu0
        %v507 = vadd.f32 0.0, %v506
        %v508 = vpop.f32.mrb[0].mxu0
        %v509 = vadd.f32 0.0, %v508
        %510 = vmatprep.mubr.f32.mxu0 0.0
        %511 = vmatmul.mubr.f32.gmra.mrb[0].mxu0 %v274
        %v512 = vpop.f32.mrb[0].mxu0
        %v513 = vadd.f32 0.0, %v512
        %v514 = vpop.f32.mrb[0].mxu0
        %v515 = vadd.f32 0.0, %v514
        %516 = vmatprep.mubr.f32.mxu0 0.0
        %517 = vmatmul.mubr.f32.gmra.mrb[0].mxu0 %v277
        %v518 = vpop.f32.mrb[0].mxu0
        %v519 = vadd.f32 0.0, %v518
        %v520 = vpop.f32.mrb[0].mxu0
        %v521 = vadd.f32 0.0, %v520
        %522 = vmatprep.mubr.f32.mxu0 0.0
        %523 = vmatmul.mubr.f32.gmra.mrb[0].mxu0 %v280
        %v524 = vpop.f32.mrb[0].mxu0
        %v525 = vadd.f32 0.0, %v524
        %v526 = vpop.f32.mrb[0].mxu0
        %v527 = vadd.f32 0.0, %v526
        %528 = vmatprep.mubr.f32.mxu0 0.0
        %529 = vmatmul.mubr.f32.gmra.mrb[0].mxu0 %v283
        %v530 = vpop.f32.mrb[0].mxu0
        %v531 = vadd.f32 0.0, %v530
        %v532 = vpop.f32.mrb[0].mxu0
        %v533 = vadd.f32 0.0, %v532
        %534 = vmatprep.mubr.f32.mxu0 0.0
        %535 = vmatmul.mubr.f32.gmra.mrb[0].mxu0 %v286
        %v536 = vpop.f32.mrb[0].mxu0
        %v537 = vadd.f32 0.0, %v536
        %v538 = vpop.f32.mrb[0].mxu0
        %v539 = vadd.f32 0.0, %v538
        %540 = vmatprep.mubr.f32.mxu0 0.0
        %541 = vmatmul.mubr.f32.gmra.mrb[0].mxu0 %v289
        %v542 = vpop.f32.mrb[0].mxu0
        %v543 = vadd.f32 0.0, %v542
        %v544 = vpop.f32.mrb[0].mxu0
        %v545 = vadd.f32 0.0, %v544
        %546 = vmatprep.mubr.f32.mxu0 0.0
        %547 = vmatmul.mubr.f32.gmra.mrb[0].mxu0 %v292
        %v548 = vpop.f32.mrb[0].mxu0
        %v549 = vadd.f32 0.0, %v548
        %v550 = vpop.f32.mrb[0].mxu0
        %v551 = vadd.f32 0.0, %v550
        %552 = vmatprep.mubr.f32.mxu0 0.0
        %553 = vmatmul.mubr.f32.gmra.mrb[0].mxu0 %v295
        %v554 = vpop.f32.mrb[0].mxu0
        %v555 = vadd.f32 0.0, %v554
        %v556 = vpop.f32.mrb[0].mxu0
        %v557 = vadd.f32 0.0, %v556
        %558 = vmatprep.mubr.f32.mxu0 0.0
        %559 = vmatmul.mubr.f32.gmra.mrb[0].mxu0 %v298
        %v560 = vpop.f32.mrb[0].mxu0
        %v561 = vadd.f32 0.0, %v560
        %v562 = vpop.f32.mrb[0].mxu0
        %v563 = vadd.f32 0.0, %v562
        %564 = vmatprep.mubr.f32.mxu0 0.0
        %565 = vmatmul.mubr.f32.gmra.mrb[0].mxu0 %v301
        %v566 = vpop.f32.mrb[0].mxu0
        %v567 = vadd.f32 0.0, %v566
        %v568 = vpop.f32.mrb[0].mxu0
        %v569 = vadd.f32 0.0, %v568
        %570 = vmatprep.mubr.f32.mxu0 0.0
        %571 = vmatmul.mubr.f32.gmra.mrb[0].mxu0 %v304
        %v572 = vpop.f32.mrb[0].mxu0
        %v573 = vadd.f32 0.0, %v572
        %v574 = vpop.f32.mrb[0].mxu0
        %v575 = vadd.f32 0.0, %v574
        %576 = vmatprep.mubr.f32.mxu0 0.0
        %577 = vmatmul.mubr.f32.gmra.mrb[0].mxu0 %v307
        %v578 = vpop.f32.mrb[0].mxu0
        %v579 = vadd.f32 0.0, %v578
        %v580 = vpop.f32.mrb[0].mxu0
        %v581 = vadd.f32 0.0, %v580
        %582 = vmatprep.mubr.f32.mxu0 0.0
        %583 = vmatmul.mubr.f32.gmra.mrb[0].mxu0 %v310
        %v584 = vpop.f32.mrb[0].mxu0
        %v585 = vadd.f32 0.0, %v584
        %v586 = vpop.f32.mrb[0].mxu0
        %v587 = vadd.f32 0.0, %v586
        %588 = vmatprep.mubr.f32.mxu0 0.0
        %589 = vmatmul.mubr.f32.gmra.mrb[0].mxu0 %v313
        %v590 = vpop.f32.mrb[0].mxu0
        %v591 = vadd.f32 0.0, %v590
        %v592 = vpop.f32.mrb[0].mxu0
        %v593 = vadd.f32 0.0, %v592
        %594 = vmatprep.mubr.f32.mxu0 0.0
        %595 = vmatmul.mubr.f32.gmra.mrb[0].mxu0 %v316
        %v596 = vpop.f32.mrb[0].mxu0
        %v597 = vadd.f32 0.0, %v596
        %v598 = vpop.f32.mrb[0].mxu0
        %v599 = vadd.f32 0.0, %v598
        %600 = vmatprep.mubr.f32.mxu0 0.0
        %601 = vmatmul.mubr.f32.gmra.mrb[0].mxu0 %v319
        %v602 = vpop.f32.mrb[0].mxu0
        %v603 = vadd.f32 0.0, %v602
        %v604 = vpop.f32.mrb[0].mxu0
        %v605 = vadd.f32 0.0, %v604
        %606 = vmatprep.mubr.f32.mxu0 0.0
        %607 = vmatmul.mubr.f32.gmra.mrb[0].mxu0 %v322
        %v608 = vpop.f32.mrb[0].mxu0
        %v609 = vadd.f32 0.0, %v608
        %v610 = vpop.f32.mrb[0].mxu0
        %v611 = vadd.f32 0.0, %v610
        %612 = vmatprep.mubr.f32.mxu0 0.0
        %613 = vmatmul.mubr.f32.gmra.mrb[0].mxu0 %v325
        %v614 = vpop.f32.mrb[0].mxu0
        %v615 = vadd.f32 0.0, %v614
        %v616 = vpop.f32.mrb[0].mxu0
        %v617 = vadd.f32 0.0, %v616
        %618 = vmatprep.mubr.f32.mxu0 0.0
        %619 = vmatmul.mubr.f32.gmra.mrb[0].mxu0 %v328
        %v620 = vpop.f32.mrb[0].mxu0
        %v621 = vadd.f32 0.0, %v620
        %v622 = vpop.f32.mrb[0].mxu0
        %v623 = vadd.f32 0.0, %v622
        %624 = vmatprep.mubr.f32.mxu0 0.0
        %625 = vmatmul.mubr.f32.gmra.mrb[0].mxu0 %v331
        %v626 = vpop.f32.mrb[0].mxu0
        %v627 = vadd.f32 0.0, %v626
        %v628 = vpop.f32.mrb[0].mxu0
        %v629 = vadd.f32 0.0, %v628
        %630 = vmatprep.mubr.f32.mxu0 0.0
        %631 = vmatmul.mubr.f32.gmra.mrb[0].mxu0 %v334
        %v632 = vpop.f32.mrb[0].mxu0
        %v633 = vadd.f32 0.0, %v632
        %v634 = vpop.f32.mrb[0].mxu0
        %v635 = vadd.f32 0.0, %v634
        %636 = vmatprep.mubr.f32.mxu0 0.0
        %637 = vmatmul.mubr.f32.gmra.mrb[0].mxu0 %v337
        %v638 = vpop.f32.mrb[0].mxu0
        %v639 = vadd.f32 0.0, %v638
        %v640 = vpop.f32.mrb[0].mxu0
        %v641 = vadd.f32 0.0, %v640
        %642 = vmatprep.mubr.f32.mxu0 0.0
        %643 = vmatmul.mubr.f32.gmra.mrb[0].mxu0 %v340
        %v644 = vpop.f32.mrb[0].mxu0
        %v645 = vadd.f32 0.0, %v644
        %v646 = vpop.f32.mrb[0].mxu0
        %v647 = vadd.f32 0.0, %v646
        %648 = vmatprep.mubr.f32.mxu0 0.0
        %649 = vmatmul.mubr.f32.gmra.mrb[0].mxu0 %v343
        %v650 = vpop.f32.mrb[0].mxu0
        %v651 = vadd.f32 0.0, %v650
        %v652 = vpop.f32.mrb[0].mxu0
        %v653 = vadd.f32 0.0, %v652
        %654 = vmatprep.mubr.f32.mxu0 0.0
        %655 = vmatmul.mubr.f32.gmra.mrb[0].mxu0 %v346
        %v656 = vpop.f32.mrb[0].mxu0
        %v657 = vadd.f32 0.0, %v656
        %v658 = vpop.f32.mrb[0].mxu0
        %v659 = vadd.f32 0.0, %v658
        %660 = vmatprep.mubr.f32.mxu0 0.0
        %661 = vmatmul.mubr.f32.gmra.mrb[0].mxu0 %v349
        %v662 = vpop.f32.mrb[0].mxu0
        %v663 = vadd.f32 0.0, %v662
        %v664 = vpop.f32.mrb[0].mxu0
        %v665 = vadd.f32 0.0, %v664
        %666 = vmatprep.mubr.f32.mxu0 0.0
        %667 = vmatmul.mubr.f32.gmra.mrb[0].mxu0 %v352
        %v668 = vpop.f32.mrb[0].mxu0
        %v669 = vadd.f32 0.0, %v668
        %v670 = vpop.f32.mrb[0].mxu0
        %v671 = vadd.f32 0.0, %v670
        %672 = vmatprep.mubr.f32.mxu0 0.0
        %673 = vmatmul.mubr.f32.gmra.mrb[0].mxu0 %v355
        %v674 = vpop.f32.mrb[0].mxu0
        %v675 = vadd.f32 0.0, %v674
        %v676 = vpop.f32.mrb[0].mxu0
        %v677 = vadd.f32 0.0, %v676
        %678 = vmatprep.mubr.f32.mxu0 0.0
        %679 = vmatmul.mubr.f32.gmra.mrb[0].mxu0 %v358
        %v680 = vpop.f32.mrb[0].mxu0
        %v681 = vadd.f32 0.0, %v680
        %v682 = vpop.f32.mrb[0].mxu0
        %v683 = vadd.f32 0.0, %v682
        %684 = vmatprep.mubr.f32.mxu0 0.0
        %685 = vmatmul.mubr.f32.gmra.mrb[0].mxu0 %v361
        %v686 = vpop.f32.mrb[0].mxu0
        %v687 = vadd.f32 0.0, %v686
        %v688 = vpop.f32.mrb[0].mxu0
        %v689 = vadd.f32 0.0, %v688
        %690 = vmatprep.mubr.f32.mxu0 0.0
        %691 = vmatmul.mubr.f32.gmra.mrb[0].mxu0 %v364
        %v692 = vpop.f32.mrb[0].mxu0
        %v693 = vadd.f32 0.0, %v692
        %v694 = vpop.f32.mrb[0].mxu0
        %v695 = vadd.f32 0.0, %v694
        %696 = vmatprep.mubr.f32.mxu0 0.0
        %697 = vmatmul.mubr.f32.gmra.mrb[0].mxu0 %v367
        %v698 = vpop.f32.mrb[0].mxu0
        %v699 = vadd.f32 0.0, %v698
        %v700 = vpop.f32.mrb[0].mxu0
        %v701 = vadd.f32 0.0, %v700
        %702 = vmatprep.mubr.f32.mxu0 0.0
        %703 = vmatmul.mubr.f32.gmra.mrb[0].mxu0 %v370
        %v704 = vpop.f32.mrb[0].mxu0
        %v705 = vadd.f32 0.0, %v704
        %v706 = vpop.f32.mrb[0].mxu0
        %v707 = vadd.f32 0.0, %v706
        %708 = vmatprep.mubr.f32.mxu0 0.0
        %709 = vmatmul.mubr.f32.gmra.mrb[0].mxu0 %v373
        %v710 = vpop.f32.mrb[0].mxu0
        %v711 = vadd.f32 0.0, %v710
        %v712 = vpop.f32.mrb[0].mxu0
        %v713 = vadd.f32 0.0, %v712
        %714 = vmatprep.mubr.f32.mxu0 0.0
        %715 = vmatmul.mubr.f32.gmra.mrb[0].mxu0 %v376
        %v716 = vpop.f32.mrb[0].mxu0
        %v717 = vadd.f32 0.0, %v716
        %v718 = vpop.f32.mrb[0].mxu0
        %v719 = vadd.f32 0.0, %v718
        %720 = vmatprep.mubr.f32.mxu0 0.0
        %721 = vmatmul.mubr.f32.gmra.mrb[0].mxu0 %v379
        %v722 = vpop.f32.mrb[0].mxu0
        %v723 = vadd.f32 0.0, %v722
        %v724 = vpop.f32.mrb[0].mxu0
        %v725 = vadd.f32 0.0, %v724
        %726 = vmatprep.mubr.f32.mxu0 0.0
        %727 = vmatmul.mubr.f32.gmra.mrb[0].mxu0 %v382
        %v728 = vpop.f32.mrb[0].mxu0
        %v729 = vadd.f32 0.0, %v728
        %v730 = vpop.f32.mrb[0].mxu0
        %v731 = vadd.f32 0.0, %v730
        %732 = vmatprep.mubr.f32.mxu0 0.0
        %733 = vmatmul.mubr.f32.gmra.mrb[0].mxu0 %v385
        %v734 = vpop.f32.mrb[0].mxu0
        %v735 = vadd.f32 0.0, %v734
        %v736 = vpop.f32.mrb[0].mxu0
        %v737 = vadd.f32 0.0, %v736
        %738 = vmatprep.mubr.f32.mxu0 0.0
        %739 = vmatmul.mubr.f32.gmra.mrb[0].mxu0 %v388
        %v740 = vpop.f32.mrb[0].mxu0
        %v741 = vadd.f32 0.0, %v740
        %v742 = vpop.f32.mrb[0].mxu0
        %v743 = vadd.f32 0.0, %v742
        %744 = vmatprep.mubr.f32.mxu0 0.0
        %745 = vmatmul.mubr.f32.gmra.mrb[0].mxu0 %v391
        %v746 = vpop.f32.mrb[0].mxu0
        %v747 = vadd.f32 0.0, %v746
        %v748 = vpop.f32.mrb[0].mxu0
        %v749 = vadd.f32 0.0, %v748
        %750 = vdwg.mxu0
        %751 = vxpose.xlu0.b32.start [1/16] %v561, 128
        %752 = vxpose.xlu0.b32.cont [2/16] %v567, 128
        %753 = vxpose.xlu0.b32.cont [3/16] %v573, 128
        %754 = vxpose.xlu0.b32.cont [4/16] %v579, 128
        %755 = vxpose.xlu0.b32.cont [5/16] 0.0, 128
        %756 = vxpose.xlu0.b32.cont [6/16] 0.0, 128
        %757 = vxpose.xlu0.b32.cont [7/16] 0.0, 128
        %758 = vxpose.xlu0.b32.cont [8/16] 0.0, 128
        %759 = vxpose.xlu0.b32.cont [9/16] 0.0, 128
        %760 = vxpose.xlu0.b32.cont [10/16] 0.0, 128
        %761 = vxpose.xlu0.b32.cont [11/16] 0.0, 128
        %762 = vxpose.xlu0.b32.cont [12/16] 0.0, 128
        %763 = vxpose.xlu0.b32.cont [13/16] 0.0, 128
        %764 = vxpose.xlu0.b32.cont [14/16] 0.0, 128
        %765 = vxpose.xlu0.b32.cont [15/16] 0.0, 128
        %766 = vxpose.xlu0.b32.end [16/16] 0.0, 128
        %v767 = vpop.trf.xlu0
        %v768 = vpop.trf.xlu0
        %v769 = vpop.trf.xlu0
        %v770 = vpop.trf.xlu0
        %v771 = vpop.trf.xlu0
        %v772 = vpop.trf.xlu0
        %v773 = vpop.trf.xlu0
        %v774 = vpop.trf.xlu0
        %v775 = vpop.trf.xlu0
        %v776 = vpop.trf.xlu0
        %v777 = vpop.trf.xlu0
        %v778 = vpop.trf.xlu0
        %v779 = vpop.trf.xlu0
        %v780 = vpop.trf.xlu0
        %v781 = vpop.trf.xlu0
        %v782 = vpop.trf.xlu0
        %783 = vxpose.xlu0.b32.start [1/16] %v563, 128
        %784 = vxpose.xlu0.b32.cont [2/16] %v569, 128
        %785 = vxpose.xlu0.b32.cont [3/16] %v575, 128
        %786 = vxpose.xlu0.b32.cont [4/16] %v581, 128
        %787 = vxpose.xlu0.b32.cont [5/16] 0.0, 128
        %788 = vxpose.xlu0.b32.cont [6/16] 0.0, 128
        %789 = vxpose.xlu0.b32.cont [7/16] 0.0, 128
        %790 = vxpose.xlu0.b32.cont [8/16] 0.0, 128
        %791 = vxpose.xlu0.b32.cont [9/16] 0.0, 128
        %792 = vxpose.xlu0.b32.cont [10/16] 0.0, 128
        %793 = vxpose.xlu0.b32.cont [11/16] 0.0, 128
        %794 = vxpose.xlu0.b32.cont [12/16] 0.0, 128
        %795 = vxpose.xlu0.b32.cont [13/16] 0.0, 128
        %796 = vxpose.xlu0.b32.cont [14/16] 0.0, 128
        %797 = vxpose.xlu0.b32.cont [15/16] 0.0, 128
        %798 = vxpose.xlu0.b32.end [16/16] 0.0, 128
        %v799 = vpop.trf.xlu0
        %v800 = vpop.trf.xlu0
        %v801 = vpop.trf.xlu0
        %v802 = vpop.trf.xlu0
        %v803 = vpop.trf.xlu0
        %v804 = vpop.trf.xlu0
        %v805 = vpop.trf.xlu0
        %v806 = vpop.trf.xlu0
        %v807 = vpop.trf.xlu0
        %v808 = vpop.trf.xlu0
        %v809 = vpop.trf.xlu0
        %v810 = vpop.trf.xlu0
        %v811 = vpop.trf.xlu0
        %v812 = vpop.trf.xlu0
        %v813 = vpop.trf.xlu0
        %v814 = vpop.trf.xlu0
        %v815 = vpack.c.bf16 %v768, %v767
        %v816 = vpack.c.bf16 %v770, %v769
        %v817 = vpack.c.bf16 %v772, %v771
        %v818 = vpack.c.bf16 %v774, %v773
        %v819 = vpack.c.bf16 %v776, %v775
        %v820 = vpack.c.bf16 %v778, %v777
        %v821 = vpack.c.bf16 %v780, %v779
        %v822 = vpack.c.bf16 %v782, %v781
        %v823 = vpack.c.bf16 %v800, %v799
        %v824 = vpack.c.bf16 %v802, %v801
        %v825 = vpack.c.bf16 %v804, %v803
        %v826 = vpack.c.bf16 %v806, %v805
        %v827 = vpack.c.bf16 %v808, %v807
        %v828 = vpack.c.bf16 %v810, %v809
        %v829 = vpack.c.bf16 %v812, %v811
        %v830 = vpack.c.bf16 %v814, %v813
        %v831 = vpack.c.bf16 %v471, %v465
        %v832 = vpack.c.bf16 %v473, %v467
        %v833 = vpack.c.bf16 %v483, %v477
        %v834 = vpack.c.bf16 %v485, %v479
        %vm835 = vcmask 261120
        %v837 = vsel %vm835, %v815, 0
        %v840 = vsel %vm835, %v816, 0
        %v843 = vsel %vm835, %v817, 0
        %v846 = vsel %vm835, %v818, 0
        %v849 = vsel %vm835, %v819, 0
        %v852 = vsel %vm835, %v820, 0
        %v855 = vsel %vm835, %v821, 0
        %v858 = vsel %vm835, %v822, 0
        %v861 = vsel %vm835, %v823, 0
        %v864 = vsel %vm835, %v824, 0
        %v867 = vsel %vm835, %v825, 0
        %v870 = vsel %vm835, %v826, 0
        %v873 = vsel %vm835, %v827, 0
        %v876 = vsel %vm835, %v828, 0
        %v879 = vsel %vm835, %v829, 0
        %v882 = vsel %vm835, %v830, 0
        %884 = vmatprep.subr.bf16.mxu0 %v832
        %885 = vmatpush1.bf16.msra.mxu0 %v831
        %886 = vmatprep.subr.bf16.mxu0 %v834
        %887 = vmatpush1.bf16.msra.mxu0 %v833
        %888 = vmatprep.subr.bf16.mxu0 0
        %889 = vmatpush1.bf16.msra.mxu0 0
        %890 = vmatprep.subr.bf16.mxu0 0
        %891 = vmatpush1.bf16.msra.mxu0 0
        %892 = vmatprep.subr.bf16.mxu0 0
        %893 = vmatpush1.bf16.msra.mxu0 0
        %894 = vmatprep.subr.bf16.mxu0 0
        %895 = vmatpush1.bf16.msra.mxu0 0
        %896 = vmatprep.subr.bf16.mxu0 0
        %897 = vmatpush1.bf16.msra.mxu0 0
        %898 = vmatprep.subr.bf16.mxu0 0
        %899 = vmatpush1.bf16.msra.mxu0 0
        %900 = vmatprep.subr.bf16.mxu0 0
        %901 = vmatpush1.bf16.msra.mxu0 0
        %902 = vmatprep.subr.bf16.mxu0 0
        %903 = vmatpush1.bf16.msra.mxu0 0
        %904 = vmatprep.subr.bf16.mxu0 0
        %905 = vmatpush1.bf16.msra.mxu0 0
        %906 = vmatprep.subr.bf16.mxu0 0
        %907 = vmatpush1.bf16.msra.mxu0 0
        %908 = vmatprep.subr.bf16.mxu0 0
        %909 = vmatpush1.bf16.msra.mxu0 0
        %910 = vmatprep.subr.bf16.mxu0 0
        %911 = vmatpush1.bf16.msra.mxu0 0
        %912 = vmatprep.subr.bf16.mxu0 0
        %913 = vmatpush1.bf16.msra.mxu0 0
        %914 = vmatprep.subr.bf16.mxu0 0
        %915 = vmatpush1.bf16.msra.mxu0 0
        %916 = vmatprep.mubr.bf16.mxu0 0
        %917 = vmatmul.mubr.bf16.gmra.mrb[0].mxu0 %v837
        %v918 = vpop.f32.mrb[0].mxu0
        %v919 = vadd.f32 0.0, %v918
        %v920 = vpop.f32.mrb[0].mxu0
        %v921 = vadd.f32 0.0, %v920
        %v922 = vpop.f32.mrb[0].mxu0
        %v923 = vadd.f32 0.0, %v922
        %v924 = vpop.f32.mrb[0].mxu0
        %v925 = vadd.f32 0.0, %v924
        %926 = vmatprep.mubr.bf16.mxu0 0
        %927 = vmatmul.mubr.bf16.gmra.mrb[0].mxu0 %v840
        %v928 = vpop.f32.mrb[0].mxu0
        %v929 = vadd.f32 0.0, %v928
        %v930 = vpop.f32.mrb[0].mxu0
        %v931 = vadd.f32 0.0, %v930
        %v932 = vpop.f32.mrb[0].mxu0
        %v933 = vadd.f32 0.0, %v932
        %v934 = vpop.f32.mrb[0].mxu0
        %v935 = vadd.f32 0.0, %v934
        %936 = vmatprep.mubr.bf16.mxu0 0
        %937 = vmatmul.mubr.bf16.gmra.mrb[0].mxu0 %v843
        %v938 = vpop.f32.mrb[0].mxu0
        %v939 = vadd.f32 0.0, %v938
        %v940 = vpop.f32.mrb[0].mxu0
        %v941 = vadd.f32 0.0, %v940
        %v942 = vpop.f32.mrb[0].mxu0
        %v943 = vadd.f32 0.0, %v942
        %v944 = vpop.f32.mrb[0].mxu0
        %v945 = vadd.f32 0.0, %v944
        %946 = vmatprep.mubr.bf16.mxu0 0
        %947 = vmatmul.mubr.bf16.gmra.mrb[0].mxu0 %v846
        %v948 = vpop.f32.mrb[0].mxu0
        %v949 = vadd.f32 0.0, %v948
        %v950 = vpop.f32.mrb[0].mxu0
        %v951 = vadd.f32 0.0, %v950
        %v952 = vpop.f32.mrb[0].mxu0
        %v953 = vadd.f32 0.0, %v952
        %v954 = vpop.f32.mrb[0].mxu0
        %v955 = vadd.f32 0.0, %v954
        %956 = vmatprep.mubr.bf16.mxu0 0
        %957 = vmatmul.mubr.bf16.gmra.mrb[0].mxu0 %v849
        %v958 = vpop.f32.mrb[0].mxu0
        %v959 = vadd.f32 0.0, %v958
        %v960 = vpop.f32.mrb[0].mxu0
        %v961 = vadd.f32 0.0, %v960
        %v962 = vpop.f32.mrb[0].mxu0
        %v963 = vadd.f32 0.0, %v962
        %v964 = vpop.f32.mrb[0].mxu0
        %v965 = vadd.f32 0.0, %v964
        %966 = vmatprep.mubr.bf16.mxu0 0
        %967 = vmatmul.mubr.bf16.gmra.mrb[0].mxu0 %v852
        %v968 = vpop.f32.mrb[0].mxu0
        %v969 = vadd.f32 0.0, %v968
        %v970 = vpop.f32.mrb[0].mxu0
        %v971 = vadd.f32 0.0, %v970
        %v972 = vpop.f32.mrb[0].mxu0
        %v973 = vadd.f32 0.0, %v972
        %v974 = vpop.f32.mrb[0].mxu0
        %v975 = vadd.f32 0.0, %v974
        %976 = vmatprep.mubr.bf16.mxu0 0
        %977 = vmatmul.mubr.bf16.gmra.mrb[0].mxu0 %v855
        %v978 = vpop.f32.mrb[0].mxu0
        %v979 = vadd.f32 0.0, %v978
        %v980 = vpop.f32.mrb[0].mxu0
        %v981 = vadd.f32 0.0, %v980
        %v982 = vpop.f32.mrb[0].mxu0
        %v983 = vadd.f32 0.0, %v982
        %v984 = vpop.f32.mrb[0].mxu0
        %v985 = vadd.f32 0.0, %v984
        %986 = vmatprep.mubr.bf16.mxu0 0
        %987 = vmatmul.mubr.bf16.gmra.mrb[0].mxu0 %v858
        %v988 = vpop.f32.mrb[0].mxu0
        %v989 = vadd.f32 0.0, %v988
        %v990 = vpop.f32.mrb[0].mxu0
        %v991 = vadd.f32 0.0, %v990
        %v992 = vpop.f32.mrb[0].mxu0
        %v993 = vadd.f32 0.0, %v992
        %v994 = vpop.f32.mrb[0].mxu0
        %v995 = vadd.f32 0.0, %v994
        %996 = vmatprep.mubr.bf16.mxu0 0
        %997 = vmatmul.mubr.bf16.gmra.mrb[0].mxu0 %v861
        %v998 = vpop.f32.mrb[0].mxu0
        %v999 = vadd.f32 0.0, %v998
        %v1000 = vpop.f32.mrb[0].mxu0
        %v1001 = vadd.f32 0.0, %v1000
        %v1002 = vpop.f32.mrb[0].mxu0
        %v1003 = vadd.f32 0.0, %v1002
        %v1004 = vpop.f32.mrb[0].mxu0
        %v1005 = vadd.f32 0.0, %v1004
        %1006 = vmatprep.mubr.bf16.mxu0 0
        %1007 = vmatmul.mubr.bf16.gmra.mrb[0].mxu0 %v864
        %v1008 = vpop.f32.mrb[0].mxu0
        %v1009 = vadd.f32 0.0, %v1008
        %v1010 = vpop.f32.mrb[0].mxu0
        %v1011 = vadd.f32 0.0, %v1010
        %v1012 = vpop.f32.mrb[0].mxu0
        %v1013 = vadd.f32 0.0, %v1012
        %v1014 = vpop.f32.mrb[0].mxu0
        %v1015 = vadd.f32 0.0, %v1014
        %1016 = vmatprep.mubr.bf16.mxu0 0
        %1017 = vmatmul.mubr.bf16.gmra.mrb[0].mxu0 %v867
        %v1018 = vpop.f32.mrb[0].mxu0
        %v1019 = vadd.f32 0.0, %v1018
        %v1020 = vpop.f32.mrb[0].mxu0
        %v1021 = vadd.f32 0.0, %v1020
        %v1022 = vpop.f32.mrb[0].mxu0
        %v1023 = vadd.f32 0.0, %v1022
        %v1024 = vpop.f32.mrb[0].mxu0
        %v1025 = vadd.f32 0.0, %v1024
        %1026 = vmatprep.mubr.bf16.mxu0 0
        %1027 = vmatmul.mubr.bf16.gmra.mrb[0].mxu0 %v870
        %v1028 = vpop.f32.mrb[0].mxu0
        %v1029 = vadd.f32 0.0, %v1028
        %v1030 = vpop.f32.mrb[0].mxu0
        %v1031 = vadd.f32 0.0, %v1030
        %v1032 = vpop.f32.mrb[0].mxu0
        %v1033 = vadd.f32 0.0, %v1032
        %v1034 = vpop.f32.mrb[0].mxu0
        %v1035 = vadd.f32 0.0, %v1034
        %1036 = vmatprep.mubr.bf16.mxu0 0
        %1037 = vmatmul.mubr.bf16.gmra.mrb[0].mxu0 %v873
        %v1038 = vpop.f32.mrb[0].mxu0
        %v1039 = vadd.f32 0.0, %v1038
        %v1040 = vpop.f32.mrb[0].mxu0
        %v1041 = vadd.f32 0.0, %v1040
        %v1042 = vpop.f32.mrb[0].mxu0
        %v1043 = vadd.f32 0.0, %v1042
        %v1044 = vpop.f32.mrb[0].mxu0
        %v1045 = vadd.f32 0.0, %v1044
        %1046 = vmatprep.mubr.bf16.mxu0 0
        %1047 = vmatmul.mubr.bf16.gmra.mrb[0].mxu0 %v876
        %v1048 = vpop.f32.mrb[0].mxu0
        %v1049 = vadd.f32 0.0, %v1048
        %v1050 = vpop.f32.mrb[0].mxu0
        %v1051 = vadd.f32 0.0, %v1050
        %v1052 = vpop.f32.mrb[0].mxu0
        %v1053 = vadd.f32 0.0, %v1052
        %v1054 = vpop.f32.mrb[0].mxu0
        %v1055 = vadd.f32 0.0, %v1054
        %1056 = vmatprep.mubr.bf16.mxu0 0
        %1057 = vmatmul.mubr.bf16.gmra.mrb[0].mxu0 %v879
        %v1058 = vpop.f32.mrb[0].mxu0
        %v1059 = vadd.f32 0.0, %v1058
        %v1060 = vpop.f32.mrb[0].mxu0
        %v1061 = vadd.f32 0.0, %v1060
        %v1062 = vpop.f32.mrb[0].mxu0
        %v1063 = vadd.f32 0.0, %v1062
        %v1064 = vpop.f32.mrb[0].mxu0
        %v1065 = vadd.f32 0.0, %v1064
        %1066 = vmatprep.mubr.bf16.mxu0 0
        %1067 = vmatmul.mubr.bf16.gmra.mrb[0].mxu0 %v882
        %v1068 = vpop.f32.mrb[0].mxu0
        %v1069 = vadd.f32 0.0, %v1068
        %v1070 = vpop.f32.mrb[0].mxu0
        %v1071 = vadd.f32 0.0, %v1070
        %v1072 = vpop.f32.mrb[0].mxu0
        %v1073 = vadd.f32 0.0, %v1072
        %v1074 = vpop.f32.mrb[0].mxu0
        %v1075 = vadd.f32 0.0, %v1074
        %1076 = vdwg.mxu0
        %v1077 = vmax.f32 %v919, %v929
        %v1078 = vmax.f32 %v923, %v933
        %v1079 = vmax.f32 %v1077, %v939
        %v1080 = vmax.f32 %v1078, %v943
        %v1081 = vmax.f32 %v1079, %v949
        %v1082 = vmax.f32 %v1080, %v953
        %v1083 = vmax.f32 %v1081, %v959
        %v1084 = vmax.f32 %v1082, %v963
        %v1085 = vmax.f32 %v1083, %v969
        %v1086 = vmax.f32 %v1084, %v973
        %v1087 = vmax.f32 %v1085, %v979
        %v1088 = vmax.f32 %v1086, %v983
        %v1089 = vmax.f32 %v1087, %v989
        %v1090 = vmax.f32 %v1088, %v993
        %v1091 = vmax.f32 %v1089, %v999
        %v1092 = vmax.f32 %v1090, %v1003
        %v1093 = vmax.f32 %v1091, %v1009
        %v1094 = vmax.f32 %v1092, %v1013
        %v1095 = vmax.f32 %v1093, %v1019
        %v1096 = vmax.f32 %v1094, %v1023
        %v1097 = vmax.f32 %v1095, %v1029
        %v1098 = vmax.f32 %v1096, %v1033
        %v1099 = vmax.f32 %v1097, %v1039
        %v1100 = vmax.f32 %v1098, %v1043
        %v1101 = vmax.f32 %v1099, %v1049
        %v1102 = vmax.f32 %v1100, %v1053
        %v1103 = vmax.f32 %v1101, %v1059
        %v1104 = vmax.f32 %v1102, %v1063
        %v1105 = vmax.f32 %v1103, %v1069
        %v1106 = vmax.f32 %v1104, %v1073
        %v1107 = vmax.f32 %v1105, %v1106
        %v1108 = vrot.slane %v1107, 4
        %v1109 = vmax.f32 %v1107, %v1108
        %v1110 = vrot.slane %v1109, 2
        %v1111 = vmax.f32 %v1109, %v1110
        %v1112 = vrot.slane %v1111, 1
        %v1113 = vmax.f32 %v1111, %v1112
        %v1114 = vmax.f32 %v921, %v931
        %v1115 = vmax.f32 %v925, %v935
        %v1116 = vmax.f32 %v1114, %v941
        %v1117 = vmax.f32 %v1115, %v945
        %v1118 = vmax.f32 %v1116, %v951
        %v1119 = vmax.f32 %v1117, %v955
        %v1120 = vmax.f32 %v1118, %v961
        %v1121 = vmax.f32 %v1119, %v965
        %v1122 = vmax.f32 %v1120, %v971
        %v1123 = vmax.f32 %v1121, %v975
        %v1124 = vmax.f32 %v1122, %v981
        %v1125 = vmax.f32 %v1123, %v985
        %v1126 = vmax.f32 %v1124, %v991
        %v1127 = vmax.f32 %v1125, %v995
        %v1128 = vmax.f32 %v1126, %v1001
        %v1129 = vmax.f32 %v1127, %v1005
        %v1130 = vmax.f32 %v1128, %v1011
        %v1131 = vmax.f32 %v1129, %v1015
        %v1132 = vmax.f32 %v1130, %v1021
        %v1133 = vmax.f32 %v1131, %v1025
        %v1134 = vmax.f32 %v1132, %v1031
        %v1135 = vmax.f32 %v1133, %v1035
        %v1136 = vmax.f32 %v1134, %v1041
        %v1137 = vmax.f32 %v1135, %v1045
        %v1138 = vmax.f32 %v1136, %v1051
        %v1139 = vmax.f32 %v1137, %v1055
        %v1140 = vmax.f32 %v1138, %v1061
        %v1141 = vmax.f32 %v1139, %v1065
        %v1142 = vmax.f32 %v1140, %v1071
        %v1143 = vmax.f32 %v1141, %v1075
        %v1144 = vmax.f32 %v1142, %v1143
        %v1145 = vrot.slane %v1144, 4
        %v1146 = vmax.f32 %v1144, %v1145
        %v1147 = vrot.slane %v1146, 2
        %v1148 = vmax.f32 %v1146, %v1147
        %v1149 = vrot.slane %v1148, 1
        %v1150 = vmax.f32 %v1148, %v1149
        %v1151 = vsub.f32 %v919, %v1113
        %v1152 = vsub.f32 %v921, %v1150
        %v1153 = vsub.f32 %v923, %v1113
        %v1154 = vsub.f32 %v925, %v1150
        %v1155 = vsub.f32 %v929, %v1113
        %v1156 = vsub.f32 %v931, %v1150
        %v1157 = vsub.f32 %v933, %v1113
        %v1158 = vsub.f32 %v935, %v1150
        %v1159 = vsub.f32 %v939, %v1113
        %v1160 = vsub.f32 %v941, %v1150
        %v1161 = vsub.f32 %v943, %v1113
        %v1162 = vsub.f32 %v945, %v1150
        %v1163 = vsub.f32 %v949, %v1113
        %v1164 = vsub.f32 %v951, %v1150
        %v1165 = vsub.f32 %v953, %v1113
        %v1166 = vsub.f32 %v955, %v1150
        %v1167 = vsub.f32 %v959, %v1113
        %v1168 = vsub.f32 %v961, %v1150
        %v1169 = vsub.f32 %v963, %v1113
        %v1170 = vsub.f32 %v965, %v1150
        %v1171 = vsub.f32 %v969, %v1113
        %v1172 = vsub.f32 %v971, %v1150
        %v1173 = vsub.f32 %v973, %v1113
        %v1174 = vsub.f32 %v975, %v1150
        %v1175 = vsub.f32 %v979, %v1113
        %v1176 = vsub.f32 %v981, %v1150
        %v1177 = vsub.f32 %v983, %v1113
        %v1178 = vsub.f32 %v985, %v1150
        %v1179 = vsub.f32 %v989, %v1113
        %v1180 = vsub.f32 %v991, %v1150
        %v1181 = vsub.f32 %v993, %v1113
        %v1182 = vsub.f32 %v995, %v1150
        %v1183 = vsub.f32 %v999, %v1113
        %v1184 = vsub.f32 %v1001, %v1150
        %v1185 = vsub.f32 %v1003, %v1113
        %v1186 = vsub.f32 %v1005, %v1150
        %v1187 = vsub.f32 %v1009, %v1113
        %v1188 = vsub.f32 %v1011, %v1150
        %v1189 = vsub.f32 %v1013, %v1113
        %v1190 = vsub.f32 %v1015, %v1150
        %v1191 = vsub.f32 %v1019, %v1113
        %v1192 = vsub.f32 %v1021, %v1150
        %v1193 = vsub.f32 %v1023, %v1113
        %v1194 = vsub.f32 %v1025, %v1150
        %v1195 = vsub.f32 %v1029, %v1113
        %v1196 = vsub.f32 %v1031, %v1150
        %v1197 = vsub.f32 %v1033, %v1113
        %v1198 = vsub.f32 %v1035, %v1150
        %v1199 = vsub.f32 %v1039, %v1113
        %v1200 = vsub.f32 %v1041, %v1150
        %v1201 = vsub.f32 %v1043, %v1113
        %v1202 = vsub.f32 %v1045, %v1150
        %v1203 = vsub.f32 %v1049, %v1113
        %v1204 = vsub.f32 %v1051, %v1150
        %v1205 = vsub.f32 %v1053, %v1113
        %v1206 = vsub.f32 %v1055, %v1150
        %v1207 = vsub.f32 %v1059, %v1113
        %v1208 = vsub.f32 %v1061, %v1150
        %v1209 = vsub.f32 %v1063, %v1113
        %v1210 = vsub.f32 %v1065, %v1150
        %v1211 = vsub.f32 %v1069, %v1113
        %v1212 = vsub.f32 %v1071, %v1150
        %v1213 = vsub.f32 %v1073, %v1113
        %v1214 = vsub.f32 %v1075, %v1150
        %v1215 = vmul.f32 %v1151, 1.442695
        %v1216 = vpow.pop %v1215
        %v1217 = vmul.f32 %v1152, 1.442695
        %v1218 = vpow.pop %v1217
        %v1219 = vmul.f32 %v1153, 1.442695
        %v1220 = vpow.pop %v1219
        %v1221 = vmul.f32 %v1154, 1.442695
        %v1222 = vpow.pop %v1221
        %v1223 = vmul.f32 %v1155, 1.442695
        %v1224 = vpow.pop %v1223
        %v1225 = vmul.f32 %v1156, 1.442695
        %v1226 = vpow.pop %v1225
        %v1227 = vmul.f32 %v1157, 1.442695
        %v1228 = vpow.pop %v1227
        %v1229 = vmul.f32 %v1158, 1.442695
        %v1230 = vpow.pop %v1229
        %v1231 = vmul.f32 %v1159, 1.442695
        %v1232 = vpow.pop %v1231
        %v1233 = vmul.f32 %v1160, 1.442695
        %v1234 = vpow.pop %v1233
        %v1235 = vmul.f32 %v1161, 1.442695
        %v1236 = vpow.pop %v1235
        %v1237 = vmul.f32 %v1162, 1.442695
        %v1238 = vpow.pop %v1237
        %v1239 = vmul.f32 %v1163, 1.442695
        %v1240 = vpow.pop %v1239
        %v1241 = vmul.f32 %v1164, 1.442695
        %v1242 = vpow.pop %v1241
        %v1243 = vmul.f32 %v1165, 1.442695
        %v1244 = vpow.pop %v1243
        %v1245 = vmul.f32 %v1166, 1.442695
        %v1246 = vpow.pop %v1245
        %v1247 = vmul.f32 %v1167, 1.442695
        %v1248 = vpow.pop %v1247
        %v1249 = vmul.f32 %v1168, 1.442695
        %v1250 = vpow.pop %v1249
        %v1251 = vmul.f32 %v1169, 1.442695
        %v1252 = vpow.pop %v1251
        %v1253 = vmul.f32 %v1170, 1.442695
        %v1254 = vpow.pop %v1253
        %v1255 = vmul.f32 %v1171, 1.442695
        %v1256 = vpow.pop %v1255
        %v1257 = vmul.f32 %v1172, 1.442695
        %v1258 = vpow.pop %v1257
        %v1259 = vmul.f32 %v1173, 1.442695
        %v1260 = vpow.pop %v1259
        %v1261 = vmul.f32 %v1174, 1.442695
        %v1262 = vpow.pop %v1261
        %v1263 = vmul.f32 %v1175, 1.442695
        %v1264 = vpow.pop %v1263
        %v1265 = vmul.f32 %v1176, 1.442695
        %v1266 = vpow.pop %v1265
        %v1267 = vmul.f32 %v1177, 1.442695
        %v1268 = vpow.pop %v1267
        %v1269 = vmul.f32 %v1178, 1.442695
        %v1270 = vpow.pop %v1269
        %v1271 = vmul.f32 %v1179, 1.442695
        %v1272 = vpow.pop %v1271
        %v1273 = vmul.f32 %v1180, 1.442695
        %v1274 = vpow.pop %v1273
        %v1275 = vmul.f32 %v1181, 1.442695
        %v1276 = vpow.pop %v1275
        %v1277 = vmul.f32 %v1182, 1.442695
        %v1278 = vpow.pop %v1277
        %v1279 = vmul.f32 %v1183, 1.442695
        %v1280 = vpow.pop %v1279
        %v1281 = vmul.f32 %v1184, 1.442695
        %v1282 = vpow.pop %v1281
        %v1283 = vmul.f32 %v1185, 1.442695
        %v1284 = vpow.pop %v1283
        %v1285 = vmul.f32 %v1186, 1.442695
        %v1286 = vpow.pop %v1285
        %v1287 = vmul.f32 %v1187, 1.442695
        %v1288 = vpow.pop %v1287
        %v1289 = vmul.f32 %v1188, 1.442695
        %v1290 = vpow.pop %v1289
        %v1291 = vmul.f32 %v1189, 1.442695
        %v1292 = vpow.pop %v1291
        %v1293 = vmul.f32 %v1190, 1.442695
        %v1294 = vpow.pop %v1293
        %v1295 = vmul.f32 %v1191, 1.442695
        %v1296 = vpow.pop %v1295
        %v1297 = vmul.f32 %v1192, 1.442695
        %v1298 = vpow.pop %v1297
        %v1299 = vmul.f32 %v1193, 1.442695
        %v1300 = vpow.pop %v1299
        %v1301 = vmul.f32 %v1194, 1.442695
        %v1302 = vpow.pop %v1301
        %v1303 = vmul.f32 %v1195, 1.442695
        %v1304 = vpow.pop %v1303
        %v1305 = vmul.f32 %v1196, 1.442695
        %v1306 = vpow.pop %v1305
        %v1307 = vmul.f32 %v1197, 1.442695
        %v1308 = vpow.pop %v1307
        %v1309 = vmul.f32 %v1198, 1.442695
        %v1310 = vpow.pop %v1309
        %v1311 = vmul.f32 %v1199, 1.442695
        %v1312 = vpow.pop %v1311
        %v1313 = vmul.f32 %v1200, 1.442695
        %v1314 = vpow.pop %v1313
        %v1315 = vmul.f32 %v1201, 1.442695
        %v1316 = vpow.pop %v1315
        %v1317 = vmul.f32 %v1202, 1.442695
        %v1318 = vpow.pop %v1317
        %v1319 = vmul.f32 %v1203, 1.442695
        %v1320 = vpow.pop %v1319
        %v1321 = vmul.f32 %v1204, 1.442695
        %v1322 = vpow.pop %v1321
        %v1323 = vmul.f32 %v1205, 1.442695
        %v1324 = vpow.pop %v1323
        %v1325 = vmul.f32 %v1206, 1.442695
        %v1326 = vpow.pop %v1325
        %v1327 = vmul.f32 %v1207, 1.442695
        %v1328 = vpow.pop %v1327
        %v1329 = vmul.f32 %v1208, 1.442695
        %v1330 = vpow.pop %v1329
        %v1331 = vmul.f32 %v1209, 1.442695
        %v1332 = vpow.pop %v1331
        %v1333 = vmul.f32 %v1210, 1.442695
        %v1334 = vpow.pop %v1333
        %v1335 = vmul.f32 %v1211, 1.442695
        %v1336 = vpow.pop %v1335
        %v1337 = vmul.f32 %v1212, 1.442695
        %v1338 = vpow.pop %v1337
        %v1339 = vmul.f32 %v1213, 1.442695
        %v1340 = vpow.pop %v1339
        %v1341 = vmul.f32 %v1214, 1.442695
        %v1342 = vpow.pop %v1341
        %v1343 = vadd.f32 %v1216, %v1220
        %v1344 = vadd.f32 %v1343, %v1224
        %v1345 = vadd.f32 %v1344, %v1228
        %v1346 = vadd.f32 %v1345, %v1232
        %v1347 = vadd.f32 %v1346, %v1236
        %v1348 = vadd.f32 %v1347, %v1240
        %v1349 = vadd.f32 %v1348, %v1244
        %v1350 = vadd.f32 %v1349, %v1248
        %v1351 = vadd.f32 %v1350, %v1252
        %v1352 = vadd.f32 %v1351, %v1256
        %v1353 = vadd.f32 %v1352, %v1260
        %v1354 = vadd.f32 %v1353, %v1264
        %v1355 = vadd.f32 %v1354, %v1268
        %v1356 = vadd.f32 %v1355, %v1272
        %v1357 = vadd.f32 %v1356, %v1276
        %v1358 = vadd.f32 %v1357, %v1280
        %v1359 = vadd.f32 %v1358, %v1284
        %v1360 = vadd.f32 %v1359, %v1288
        %v1361 = vadd.f32 %v1360, %v1292
        %v1362 = vadd.f32 %v1361, %v1296
        %v1363 = vadd.f32 %v1362, %v1300
        %v1364 = vadd.f32 %v1363, %v1304
        %v1365 = vadd.f32 %v1364, %v1308
        %v1366 = vadd.f32 %v1365, %v1312
        %v1367 = vadd.f32 %v1366, %v1316
        %v1368 = vadd.f32 %v1367, %v1320
        %v1369 = vadd.f32 %v1368, %v1324
        %v1370 = vadd.f32 %v1369, %v1328
        %v1371 = vadd.f32 %v1370, %v1332
        %v1372 = vadd.f32 %v1371, %v1336
        %v1373 = vadd.f32 %v1372, %v1340
        %v1374 = vrot.slane %v1373, 4
        %v1375 = vadd.f32 %v1373, %v1374
        %v1376 = vrot.slane %v1375, 2
        %v1377 = vadd.f32 %v1375, %v1376
        %v1378 = vrot.slane %v1377, 1
        %v1379 = vadd.f32 %v1377, %v1378
        %v1380 = vadd.f32 %v1218, %v1222
        %v1381 = vadd.f32 %v1380, %v1226
        %v1382 = vadd.f32 %v1381, %v1230
        %v1383 = vadd.f32 %v1382, %v1234
        %v1384 = vadd.f32 %v1383, %v1238
        %v1385 = vadd.f32 %v1384, %v1242
        %v1386 = vadd.f32 %v1385, %v1246
        %v1387 = vadd.f32 %v1386, %v1250
        %v1388 = vadd.f32 %v1387, %v1254
        %v1389 = vadd.f32 %v1388, %v1258
        %v1390 = vadd.f32 %v1389, %v1262
        %v1391 = vadd.f32 %v1390, %v1266
        %v1392 = vadd.f32 %v1391, %v1270
        %v1393 = vadd.f32 %v1392, %v1274
        %v1394 = vadd.f32 %v1393, %v1278
        %v1395 = vadd.f32 %v1394, %v1282
        %v1396 = vadd.f32 %v1395, %v1286
        %v1397 = vadd.f32 %v1396, %v1290
        %v1398 = vadd.f32 %v1397, %v1294
        %v1399 = vadd.f32 %v1398, %v1298
        %v1400 = vadd.f32 %v1399, %v1302
        %v1401 = vadd.f32 %v1400, %v1306
        %v1402 = vadd.f32 %v1401, %v1310
        %v1403 = vadd.f32 %v1402, %v1314
        %v1404 = vadd.f32 %v1403, %v1318
        %v1405 = vadd.f32 %v1404, %v1322
        %v1406 = vadd.f32 %v1405, %v1326
        %v1407 = vadd.f32 %v1406, %v1330
        %v1408 = vadd.f32 %v1407, %v1334
        %v1409 = vadd.f32 %v1408, %v1338
        %v1410 = vadd.f32 %v1409, %v1342
        %v1411 = vrot.slane %v1410, 4
        %v1412 = vadd.f32 %v1410, %v1411
        %v1413 = vrot.slane %v1412, 2
        %v1414 = vadd.f32 %v1412, %v1413
        %v1415 = vrot.slane %v1414, 1
        %v1416 = vadd.f32 %v1414, %v1415
        %v1417 = vpack.c.bf16 %v663, %v657
        %v1418 = vpack.c.bf16 %v665, %v659
        %v1419 = vpack.c.bf16 %v675, %v669
        %v1420 = vpack.c.bf16 %v677, %v671
        %v1421 = vpack.c.bf16 %v1220, %v1216
        %v1422 = vpack.c.bf16 %v1222, %v1218
        %v1423 = vpack.c.bf16 %v1228, %v1224
        %v1424 = vpack.c.bf16 %v1230, %v1226
        %v1425 = vpack.c.bf16 %v1236, %v1232
        %v1426 = vpack.c.bf16 %v1238, %v1234
        %v1427 = vpack.c.bf16 %v1244, %v1240
        %v1428 = vpack.c.bf16 %v1246, %v1242
        %v1429 = vpack.c.bf16 %v1252, %v1248
        %v1430 = vpack.c.bf16 %v1254, %v1250
        %v1431 = vpack.c.bf16 %v1260, %v1256
        %v1432 = vpack.c.bf16 %v1262, %v1258
        %v1433 = vpack.c.bf16 %v1268, %v1264
        %v1434 = vpack.c.bf16 %v1270, %v1266
        %v1435 = vpack.c.bf16 %v1276, %v1272
        %v1436 = vpack.c.bf16 %v1278, %v1274
        %v1437 = vpack.c.bf16 %v1284, %v1280
        %v1438 = vpack.c.bf16 %v1286, %v1282
        %v1439 = vpack.c.bf16 %v1292, %v1288
        %v1440 = vpack.c.bf16 %v1294, %v1290
        %v1441 = vpack.c.bf16 %v1300, %v1296
        %v1442 = vpack.c.bf16 %v1302, %v1298
        %v1443 = vpack.c.bf16 %v1308, %v1304
        %v1444 = vpack.c.bf16 %v1310, %v1306
        %v1445 = vpack.c.bf16 %v1316, %v1312
        %v1446 = vpack.c.bf16 %v1318, %v1314
        %v1447 = vpack.c.bf16 %v1324, %v1320
        %v1448 = vpack.c.bf16 %v1326, %v1322
        %v1449 = vpack.c.bf16 %v1332, %v1328
        %v1450 = vpack.c.bf16 %v1334, %v1330
        %v1451 = vpack.c.bf16 %v1340, %v1336
        %v1452 = vpack.c.bf16 %v1342, %v1338
        %1453 = vmatprep.subr.bf16.mxu0 %v1422
        %1454 = vmatpush1.bf16.msra.mxu0 %v1421
        %1455 = vmatprep.subr.bf16.mxu0 %v1424
        %1456 = vmatpush1.bf16.msra.mxu0 %v1423
        %1457 = vmatprep.subr.bf16.mxu0 %v1426
        %1458 = vmatpush1.bf16.msra.mxu0 %v1425
        %1459 = vmatprep.subr.bf16.mxu0 %v1428
        %1460 = vmatpush1.bf16.msra.mxu0 %v1427
        %1461 = vmatprep.subr.bf16.mxu0 %v1430
        %1462 = vmatpush1.bf16.msra.mxu0 %v1429
        %1463 = vmatprep.subr.bf16.mxu0 %v1432
        %1464 = vmatpush1.bf16.msra.mxu0 %v1431
        %1465 = vmatprep.subr.bf16.mxu0 %v1434
        %1466 = vmatpush1.bf16.msra.mxu0 %v1433
        %1467 = vmatprep.subr.bf16.mxu0 %v1436
        %1468 = vmatpush1.bf16.msra.mxu0 %v1435
        %1469 = vmatprep.subr.bf16.mxu0 %v1438
        %1470 = vmatpush1.bf16.msra.mxu0 %v1437
        %1471 = vmatprep.subr.bf16.mxu0 %v1440
        %1472 = vmatpush1.bf16.msra.mxu0 %v1439
        %1473 = vmatprep.subr.bf16.mxu0 %v1442
        %1474 = vmatpush1.bf16.msra.mxu0 %v1441
        %1475 = vmatprep.subr.bf16.mxu0 %v1444
        %1476 = vmatpush1.bf16.msra.mxu0 %v1443
        %1477 = vmatprep.subr.bf16.mxu0 %v1446
        %1478 = vmatpush1.bf16.msra.mxu0 %v1445
        %1479 = vmatprep.subr.bf16.mxu0 %v1448
        %1480 = vmatpush1.bf16.msra.mxu0 %v1447
        %1481 = vmatprep.subr.bf16.mxu0 %v1450
        %1482 = vmatpush1.bf16.msra.mxu0 %v1449
        %1483 = vmatprep.subr.bf16.mxu0 %v1452
        %1484 = vmatpush1.bf16.msra.mxu0 %v1451
        %1485 = vmatprep.mubr.bf16.mxu0 %v1418
        %1486 = vmatmul.mubr.bf16.gmra.mrb[0].mxu0 %v1417
        %v1487 = vpop.f32.mrb[0].mxu0
        %v1488 = vadd.f32 0.0, %v1487
        %v1489 = vpop.f32.mrb[0].mxu0
        %v1490 = vadd.f32 0.0, %v1489
        %v1491 = vpop.f32.mrb[0].mxu0
        %v1492 = vadd.f32 0.0, %v1491
        %v1493 = vpop.f32.mrb[0].mxu0
        %v1494 = vadd.f32 0.0, %v1493
        %1495 = vmatprep.mubr.bf16.mxu0 %v1420
        %1496 = vmatmul.mubr.bf16.gmra.mrb[0].mxu0 %v1419
        %v1497 = vpop.f32.mrb[0].mxu0
        %v1498 = vadd.f32 0.0, %v1497
        %v1499 = vpop.f32.mrb[0].mxu0
        %v1500 = vadd.f32 0.0, %v1499
        %v1501 = vpop.f32.mrb[0].mxu0
        %v1502 = vadd.f32 0.0, %v1501
        %v1503 = vpop.f32.mrb[0].mxu0
        %v1504 = vadd.f32 0.0, %v1503
        %1505 = vdwg.mxu0
        %v1506 = vrcp.pop %v1379
        %v1507 = vrcp.pop %v1416
        %v1508 = vmul.f32 %v1488, %v1506
        %v1509 = vmul.f32 %v1490, %v1507
        %v1510 = vmul.f32 %v1492, %v1506
        %v1511 = vmul.f32 %v1494, %v1507
        %v1512 = vmul.f32 %v1498, %v1506
        %v1513 = vmul.f32 %v1500, %v1507
        %v1514 = vmul.f32 %v1502, %v1506
        %v1515 = vmul.f32 %v1504, %v1507
        %v1516 = vld [vmem:[%s2] sm:$0xf]
        %1517 = vxpose.xlu0.b32.start [1/16] %v585, 128
        %1518 = vxpose.xlu0.b32.cont [2/16] %v591, 128
        %1519 = vxpose.xlu0.b32.cont [3/16] %v597, 128
        %1520 = vxpose.xlu0.b32.cont [4/16] %v603, 128
        %1521 = vxpose.xlu0.b32.cont [5/16] 0.0, 128
        %1522 = vxpose.xlu0.b32.cont [6/16] 0.0, 128
        %1523 = vxpose.xlu0.b32.cont [7/16] 0.0, 128
        %1524 = vxpose.xlu0.b32.cont [8/16] 0.0, 128
        %1525 = vxpose.xlu0.b32.cont [9/16] 0.0, 128
        %1526 = vxpose.xlu0.b32.cont [10/16] 0.0, 128
        %1527 = vxpose.xlu0.b32.cont [11/16] 0.0, 128
        %1528 = vxpose.xlu0.b32.cont [12/16] 0.0, 128
        %1529 = vxpose.xlu0.b32.cont [13/16] 0.0, 128
        %1530 = vxpose.xlu0.b32.cont [14/16] 0.0, 128
        %1531 = vxpose.xlu0.b32.cont [15/16] 0.0, 128
        %1532 = vxpose.xlu0.b32.end [16/16] 0.0, 128
        %v1533 = vpop.trf.xlu0
        %v1534 = vpop.trf.xlu0
        %v1535 = vpop.trf.xlu0
        %v1536 = vpop.trf.xlu0
        %v1537 = vpop.trf.xlu0
        %v1538 = vpop.trf.xlu0
        %v1539 = vpop.trf.xlu0
        %v1540 = vpop.trf.xlu0
        %v1541 = vpop.trf.xlu0
        %v1542 = vpop.trf.xlu0
        %v1543 = vpop.trf.xlu0
        %v1544 = vpop.trf.xlu0
        %v1545 = vpop.trf.xlu0
        %v1546 = vpop.trf.xlu0
        %v1547 = vpop.trf.xlu0
        %v1548 = vpop.trf.xlu0
        %1549 = vxpose.xlu0.b32.start [1/16] %v587, 128
        %1550 = vxpose.xlu0.b32.cont [2/16] %v593, 128
        %1551 = vxpose.xlu0.b32.cont [3/16] %v599, 128
        %1552 = vxpose.xlu0.b32.cont [4/16] %v605, 128
        %1553 = vxpose.xlu0.b32.cont [5/16] 0.0, 128
        %1554 = vxpose.xlu0.b32.cont [6/16] 0.0, 128
        %1555 = vxpose.xlu0.b32.cont [7/16] 0.0, 128
        %1556 = vxpose.xlu0.b32.cont [8/16] 0.0, 128
        %1557 = vxpose.xlu0.b32.cont [9/16] 0.0, 128
        %1558 = vxpose.xlu0.b32.cont [10/16] 0.0, 128
        %1559 = vxpose.xlu0.b32.cont [11/16] 0.0, 128
        %1560 = vxpose.xlu0.b32.cont [12/16] 0.0, 128
        %1561 = vxpose.xlu0.b32.cont [13/16] 0.0, 128
        %1562 = vxpose.xlu0.b32.cont [14/16] 0.0, 128
        %1563 = vxpose.xlu0.b32.cont [15/16] 0.0, 128
        %1564 = vxpose.xlu0.b32.end [16/16] 0.0, 128
        %v1565 = vpop.trf.xlu0
        %v1566 = vpop.trf.xlu0
        %v1567 = vpop.trf.xlu0
        %v1568 = vpop.trf.xlu0
        %v1569 = vpop.trf.xlu0
        %v1570 = vpop.trf.xlu0
        %v1571 = vpop.trf.xlu0
        %v1572 = vpop.trf.xlu0
        %v1573 = vpop.trf.xlu0
        %v1574 = vpop.trf.xlu0
        %v1575 = vpop.trf.xlu0
        %v1576 = vpop.trf.xlu0
        %v1577 = vpop.trf.xlu0
        %v1578 = vpop.trf.xlu0
        %v1579 = vpop.trf.xlu0
        %v1580 = vpop.trf.xlu0
        %v1581 = vpack.c.bf16 %v1534, %v1533
        %v1582 = vpack.c.bf16 %v1536, %v1535
        %v1583 = vpack.c.bf16 %v1538, %v1537
        %v1584 = vpack.c.bf16 %v1540, %v1539
        %v1585 = vpack.c.bf16 %v1542, %v1541
        %v1586 = vpack.c.bf16 %v1544, %v1543
        %v1587 = vpack.c.bf16 %v1546, %v1545
        %v1588 = vpack.c.bf16 %v1548, %v1547
        %v1589 = vpack.c.bf16 %v1566, %v1565
        %v1590 = vpack.c.bf16 %v1568, %v1567
        %v1591 = vpack.c.bf16 %v1570, %v1569
        %v1592 = vpack.c.bf16 %v1572, %v1571
        %v1593 = vpack.c.bf16 %v1574, %v1573
        %v1594 = vpack.c.bf16 %v1576, %v1575
        %v1595 = vpack.c.bf16 %v1578, %v1577
        %v1596 = vpack.c.bf16 %v1580, %v1579
        %v1597 = vpack.c.bf16 %v495, %v489
        %v1598 = vpack.c.bf16 %v497, %v491
        %v1599 = vpack.c.bf16 %v507, %v501
        %v1600 = vpack.c.bf16 %v509, %v503
        %v1602 = vsel %vm835, %v1581, 0
        %v1605 = vsel %vm835, %v1582, 0
        %v1608 = vsel %vm835, %v1583, 0
        %v1611 = vsel %vm835, %v1584, 0
        %v1614 = vsel %vm835, %v1585, 0
        %v1617 = vsel %vm835, %v1586, 0
        %v1620 = vsel %vm835, %v1587, 0
        %v1623 = vsel %vm835, %v1588, 0
        %v1626 = vsel %vm835, %v1589, 0
        %v1629 = vsel %vm835, %v1590, 0
        %v1632 = vsel %vm835, %v1591, 0
        %v1635 = vsel %vm835, %v1592, 0
        %v1638 = vsel %vm835, %v1593, 0
        %v1641 = vsel %vm835, %v1594, 0
        %v1644 = vsel %vm835, %v1595, 0
        %v1647 = vsel %vm835, %v1596, 0
        %1649 = vmatprep.subr.bf16.mxu0 %v1598
        %1650 = vmatpush1.bf16.msra.mxu0 %v1597
        %1651 = vmatprep.subr.bf16.mxu0 %v1600
        %1652 = vmatpush1.bf16.msra.mxu0 %v1599
        %1653 = vmatprep.subr.bf16.mxu0 0
        %1654 = vmatpush1.bf16.msra.mxu0 0
        %1655 = vmatprep.subr.bf16.mxu0 0
        %1656 = vmatpush1.bf16.msra.mxu0 0
        %1657 = vmatprep.subr.bf16.mxu0 0
        %1658 = vmatpush1.bf16.msra.mxu0 0
        %1659 = vmatprep.subr.bf16.mxu0 0
        %1660 = vmatpush1.bf16.msra.mxu0 0
        %1661 = vmatprep.subr.bf16.mxu0 0
        %1662 = vmatpush1.bf16.msra.mxu0 0
        %1663 = vmatprep.subr.bf16.mxu0 0
        %1664 = vmatpush1.bf16.msra.mxu0 0
        %1665 = vmatprep.subr.bf16.mxu0 0
        %1666 = vmatpush1.bf16.msra.mxu0 0
        %1667 = vmatprep.subr.bf16.mxu0 0
        %1668 = vmatpush1.bf16.msra.mxu0 0
        %1669 = vmatprep.subr.bf16.mxu0 0
        %1670 = vmatpush1.bf16.msra.mxu0 0
        %1671 = vmatprep.subr.bf16.mxu0 0
        %1672 = vmatpush1.bf16.msra.mxu0 0
        %1673 = vmatprep.subr.bf16.mxu0 0
        %1674 = vmatpush1.bf16.msra.mxu0 0
        %1675 = vmatprep.subr.bf16.mxu0 0
        %1676 = vmatpush1.bf16.msra.mxu0 0
        %1677 = vmatprep.subr.bf16.mxu0 0
        %1678 = vmatpush1.bf16.msra.mxu0 0
        %1679 = vmatprep.subr.bf16.mxu0 0
        %1680 = vmatpush1.bf16.msra.mxu0 0
        %1681 = vmatprep.mubr.bf16.mxu0 0
        %1682 = vmatmul.mubr.bf16.gmra.mrb[0].mxu0 %v1602
        %v1683 = vpop.f32.mrb[0].mxu0
        %v1684 = vadd.f32 0.0, %v1683
        %v1685 = vpop.f32.mrb[0].mxu0
        %v1686 = vadd.f32 0.0, %v1685
        %v1687 = vpop.f32.mrb[0].mxu0
        %v1688 = vadd.f32 0.0, %v1687
        %v1689 = vpop.f32.mrb[0].mxu0
        %v1690 = vadd.f32 0.0, %v1689
        %1691 = vmatprep.mubr.bf16.mxu0 0
        %1692 = vmatmul.mubr.bf16.gmra.mrb[0].mxu0 %v1605
        %v1693 = vpop.f32.mrb[0].mxu0
        %v1694 = vadd.f32 0.0, %v1693
        %v1695 = vpop.f32.mrb[0].mxu0
        %v1696 = vadd.f32 0.0, %v1695
        %v1697 = vpop.f32.mrb[0].mxu0
        %v1698 = vadd.f32 0.0, %v1697
        %v1699 = vpop.f32.mrb[0].mxu0
        %v1700 = vadd.f32 0.0, %v1699
        %1701 = vmatprep.mubr.bf16.mxu0 0
        %1702 = vmatmul.mubr.bf16.gmra.mrb[0].mxu0 %v1608
        %v1703 = vpop.f32.mrb[0].mxu0
        %v1704 = vadd.f32 0.0, %v1703
        %v1705 = vpop.f32.mrb[0].mxu0
        %v1706 = vadd.f32 0.0, %v1705
        %v1707 = vpop.f32.mrb[0].mxu0
        %v1708 = vadd.f32 0.0, %v1707
        %v1709 = vpop.f32.mrb[0].mxu0
        %v1710 = vadd.f32 0.0, %v1709
        %1711 = vmatprep.mubr.bf16.mxu0 0
        %1712 = vmatmul.mubr.bf16.gmra.mrb[0].mxu0 %v1611
        %v1713 = vpop.f32.mrb[0].mxu0
        %v1714 = vadd.f32 0.0, %v1713
        %v1715 = vpop.f32.mrb[0].mxu0
        %v1716 = vadd.f32 0.0, %v1715
        %v1717 = vpop.f32.mrb[0].mxu0
        %v1718 = vadd.f32 0.0, %v1717
        %v1719 = vpop.f32.mrb[0].mxu0
        %v1720 = vadd.f32 0.0, %v1719
        %1721 = vmatprep.mubr.bf16.mxu0 0
        %1722 = vmatmul.mubr.bf16.gmra.mrb[0].mxu0 %v1614
        %v1723 = vpop.f32.mrb[0].mxu0
        %v1724 = vadd.f32 0.0, %v1723
        %v1725 = vpop.f32.mrb[0].mxu0
        %v1726 = vadd.f32 0.0, %v1725
        %v1727 = vpop.f32.mrb[0].mxu0
        %v1728 = vadd.f32 0.0, %v1727
        %v1729 = vpop.f32.mrb[0].mxu0
        %v1730 = vadd.f32 0.0, %v1729
        %1731 = vmatprep.mubr.bf16.mxu0 0
        %1732 = vmatmul.mubr.bf16.gmra.mrb[0].mxu0 %v1617
        %v1733 = vpop.f32.mrb[0].mxu0
        %v1734 = vadd.f32 0.0, %v1733
        %v1735 = vpop.f32.mrb[0].mxu0
        %v1736 = vadd.f32 0.0, %v1735
        %v1737 = vpop.f32.mrb[0].mxu0
        %v1738 = vadd.f32 0.0, %v1737
        %v1739 = vpop.f32.mrb[0].mxu0
        %v1740 = vadd.f32 0.0, %v1739
        %1741 = vmatprep.mubr.bf16.mxu0 0
        %1742 = vmatmul.mubr.bf16.gmra.mrb[0].mxu0 %v1620
        %v1743 = vpop.f32.mrb[0].mxu0
        %v1744 = vadd.f32 0.0, %v1743
        %v1745 = vpop.f32.mrb[0].mxu0
        %v1746 = vadd.f32 0.0, %v1745
        %v1747 = vpop.f32.mrb[0].mxu0
        %v1748 = vadd.f32 0.0, %v1747
        %v1749 = vpop.f32.mrb[0].mxu0
        %v1750 = vadd.f32 0.0, %v1749
        %1751 = vmatprep.mubr.bf16.mxu0 0
        %1752 = vmatmul.mubr.bf16.gmra.mrb[0].mxu0 %v1623
        %v1753 = vpop.f32.mrb[0].mxu0
        %v1754 = vadd.f32 0.0, %v1753
        %v1755 = vpop.f32.mrb[0].mxu0
        %v1756 = vadd.f32 0.0, %v1755
        %v1757 = vpop.f32.mrb[0].mxu0
        %v1758 = vadd.f32 0.0, %v1757
        %v1759 = vpop.f32.mrb[0].mxu0
        %v1760 = vadd.f32 0.0, %v1759
        %1761 = vmatprep.mubr.bf16.mxu0 0
        %1762 = vmatmul.mubr.bf16.gmra.mrb[0].mxu0 %v1626
        %v1763 = vpop.f32.mrb[0].mxu0
        %v1764 = vadd.f32 0.0, %v1763
        %v1765 = vpop.f32.mrb[0].mxu0
        %v1766 = vadd.f32 0.0, %v1765
        %v1767 = vpop.f32.mrb[0].mxu0
        %v1768 = vadd.f32 0.0, %v1767
        %v1769 = vpop.f32.mrb[0].mxu0
        %v1770 = vadd.f32 0.0, %v1769
        %1771 = vmatprep.mubr.bf16.mxu0 0
        %1772 = vmatmul.mubr.bf16.gmra.mrb[0].mxu0 %v1629
        %v1773 = vpop.f32.mrb[0].mxu0
        %v1774 = vadd.f32 0.0, %v1773
        %v1775 = vpop.f32.mrb[0].mxu0
        %v1776 = vadd.f32 0.0, %v1775
        %v1777 = vpop.f32.mrb[0].mxu0
        %v1778 = vadd.f32 0.0, %v1777
        %v1779 = vpop.f32.mrb[0].mxu0
        %v1780 = vadd.f32 0.0, %v1779
        %1781 = vmatprep.mubr.bf16.mxu0 0
        %1782 = vmatmul.mubr.bf16.gmra.mrb[0].mxu0 %v1632
        %v1783 = vpop.f32.mrb[0].mxu0
        %v1784 = vadd.f32 0.0, %v1783
        %v1785 = vpop.f32.mrb[0].mxu0
        %v1786 = vadd.f32 0.0, %v1785
        %v1787 = vpop.f32.mrb[0].mxu0
        %v1788 = vadd.f32 0.0, %v1787
        %v1789 = vpop.f32.mrb[0].mxu0
        %v1790 = vadd.f32 0.0, %v1789
        %1791 = vmatprep.mubr.bf16.mxu0 0
        %1792 = vmatmul.mubr.bf16.gmra.mrb[0].mxu0 %v1635
        %v1793 = vpop.f32.mrb[0].mxu0
        %v1794 = vadd.f32 0.0, %v1793
        %v1795 = vpop.f32.mrb[0].mxu0
        %v1796 = vadd.f32 0.0, %v1795
        %v1797 = vpop.f32.mrb[0].mxu0
        %v1798 = vadd.f32 0.0, %v1797
        %v1799 = vpop.f32.mrb[0].mxu0
        %v1800 = vadd.f32 0.0, %v1799
        %1801 = vmatprep.mubr.bf16.mxu0 0
        %1802 = vmatmul.mubr.bf16.gmra.mrb[0].mxu0 %v1638
        %v1803 = vpop.f32.mrb[0].mxu0
        %v1804 = vadd.f32 0.0, %v1803
        %v1805 = vpop.f32.mrb[0].mxu0
        %v1806 = vadd.f32 0.0, %v1805
        %v1807 = vpop.f32.mrb[0].mxu0
        %v1808 = vadd.f32 0.0, %v1807
        %v1809 = vpop.f32.mrb[0].mxu0
        %v1810 = vadd.f32 0.0, %v1809
        %1811 = vmatprep.mubr.bf16.mxu0 0
        %1812 = vmatmul.mubr.bf16.gmra.mrb[0].mxu0 %v1641
        %v1813 = vpop.f32.mrb[0].mxu0
        %v1814 = vadd.f32 0.0, %v1813
        %v1815 = vpop.f32.mrb[0].mxu0
        %v1816 = vadd.f32 0.0, %v1815
        %v1817 = vpop.f32.mrb[0].mxu0
        %v1818 = vadd.f32 0.0, %v1817
        %v1819 = vpop.f32.mrb[0].mxu0
        %v1820 = vadd.f32 0.0, %v1819
        %1821 = vmatprep.mubr.bf16.mxu0 0
        %1822 = vmatmul.mubr.bf16.gmra.mrb[0].mxu0 %v1644
        %v1823 = vpop.f32.mrb[0].mxu0
        %v1824 = vadd.f32 0.0, %v1823
        %v1825 = vpop.f32.mrb[0].mxu0
        %v1826 = vadd.f32 0.0, %v1825
        %v1827 = vpop.f32.mrb[0].mxu0
        %v1828 = vadd.f32 0.0, %v1827
        %v1829 = vpop.f32.mrb[0].mxu0
        %v1830 = vadd.f32 0.0, %v1829
        %1831 = vmatprep.mubr.bf16.mxu0 0
        %1832 = vmatmul.mubr.bf16.gmra.mrb[0].mxu0 %v1647
        %v1833 = vpop.f32.mrb[0].mxu0
        %v1834 = vadd.f32 0.0, %v1833
        %v1835 = vpop.f32.mrb[0].mxu0
        %v1836 = vadd.f32 0.0, %v1835
        %v1837 = vpop.f32.mrb[0].mxu0
        %v1838 = vadd.f32 0.0, %v1837
        %v1839 = vpop.f32.mrb[0].mxu0
        %v1840 = vadd.f32 0.0, %v1839
        %1841 = vdwg.mxu0
        %v1842 = vmax.f32 %v1684, %v1694
        %v1843 = vmax.f32 %v1688, %v1698
        %v1844 = vmax.f32 %v1842, %v1704
        %v1845 = vmax.f32 %v1843, %v1708
        %v1846 = vmax.f32 %v1844, %v1714
        %v1847 = vmax.f32 %v1845, %v1718
        %v1848 = vmax.f32 %v1846, %v1724
        %v1849 = vmax.f32 %v1847, %v1728
        %v1850 = vmax.f32 %v1848, %v1734
        %v1851 = vmax.f32 %v1849, %v1738
        %v1852 = vmax.f32 %v1850, %v1744
        %v1853 = vmax.f32 %v1851, %v1748
        %v1854 = vmax.f32 %v1852, %v1754
        %v1855 = vmax.f32 %v1853, %v1758
        %v1856 = vmax.f32 %v1854, %v1764
        %v1857 = vmax.f32 %v1855, %v1768
        %v1858 = vmax.f32 %v1856, %v1774
        %v1859 = vmax.f32 %v1857, %v1778
        %v1860 = vmax.f32 %v1858, %v1784
        %v1861 = vmax.f32 %v1859, %v1788
        %v1862 = vmax.f32 %v1860, %v1794
        %v1863 = vmax.f32 %v1861, %v1798
        %v1864 = vmax.f32 %v1862, %v1804
        %v1865 = vmax.f32 %v1863, %v1808
        %v1866 = vmax.f32 %v1864, %v1814
        %v1867 = vmax.f32 %v1865, %v1818
        %v1868 = vmax.f32 %v1866, %v1824
        %v1869 = vmax.f32 %v1867, %v1828
        %v1870 = vmax.f32 %v1868, %v1834
        %v1871 = vmax.f32 %v1869, %v1838
        %v1872 = vmax.f32 %v1870, %v1871
        %v1873 = vrot.slane %v1872, 4
        %v1874 = vmax.f32 %v1872, %v1873
        %v1875 = vrot.slane %v1874, 2
        %v1876 = vmax.f32 %v1874, %v1875
        %v1877 = vrot.slane %v1876, 1
        %v1878 = vmax.f32 %v1876, %v1877
        %v1879 = vmax.f32 %v1686, %v1696
        %v1880 = vmax.f32 %v1690, %v1700
        %v1881 = vmax.f32 %v1879, %v1706
        %v1882 = vmax.f32 %v1880, %v1710
        %v1883 = vmax.f32 %v1881, %v1716
        %v1884 = vmax.f32 %v1882, %v1720
        %v1885 = vmax.f32 %v1883, %v1726
        %v1886 = vmax.f32 %v1884, %v1730
        %v1887 = vmax.f32 %v1885, %v1736
        %v1888 = vmax.f32 %v1886, %v1740
        %v1889 = vmax.f32 %v1887, %v1746
        %v1890 = vmax.f32 %v1888, %v1750
        %v1891 = vmax.f32 %v1889, %v1756
        %v1892 = vmax.f32 %v1890, %v1760
        %v1893 = vmax.f32 %v1891, %v1766
        %v1894 = vmax.f32 %v1892, %v1770
        %v1895 = vmax.f32 %v1893, %v1776
        %v1896 = vmax.f32 %v1894, %v1780
        %v1897 = vmax.f32 %v1895, %v1786
        %v1898 = vmax.f32 %v1896, %v1790
        %v1899 = vmax.f32 %v1897, %v1796
        %v1900 = vmax.f32 %v1898, %v1800
        %v1901 = vmax.f32 %v1899, %v1806
        %v1902 = vmax.f32 %v1900, %v1810
        %v1903 = vmax.f32 %v1901, %v1816
        %v1904 = vmax.f32 %v1902, %v1820
        %v1905 = vmax.f32 %v1903, %v1826
        %v1906 = vmax.f32 %v1904, %v1830
        %v1907 = vmax.f32 %v1905, %v1836
        %v1908 = vmax.f32 %v1906, %v1840
        %v1909 = vmax.f32 %v1907, %v1908
        %v1910 = vrot.slane %v1909, 4
        %v1911 = vmax.f32 %v1909, %v1910
        %v1912 = vrot.slane %v1911, 2
        %v1913 = vmax.f32 %v1911, %v1912
        %v1914 = vrot.slane %v1913, 1
        %v1915 = vmax.f32 %v1913, %v1914
        %v1916 = vsub.f32 %v1684, %v1878
        %v1917 = vsub.f32 %v1686, %v1915
        %v1918 = vsub.f32 %v1688, %v1878
        %v1919 = vsub.f32 %v1690, %v1915
        %v1920 = vsub.f32 %v1694, %v1878
        %v1921 = vsub.f32 %v1696, %v1915
        %v1922 = vsub.f32 %v1698, %v1878
        %v1923 = vsub.f32 %v1700, %v1915
        %v1924 = vsub.f32 %v1704, %v1878
        %v1925 = vsub.f32 %v1706, %v1915
        %v1926 = vsub.f32 %v1708, %v1878
        %v1927 = vsub.f32 %v1710, %v1915
        %v1928 = vsub.f32 %v1714, %v1878
        %v1929 = vsub.f32 %v1716, %v1915
        %v1930 = vsub.f32 %v1718, %v1878
        %v1931 = vsub.f32 %v1720, %v1915
        %v1932 = vsub.f32 %v1724, %v1878
        %v1933 = vsub.f32 %v1726, %v1915
        %v1934 = vsub.f32 %v1728, %v1878
        %v1935 = vsub.f32 %v1730, %v1915
        %v1936 = vsub.f32 %v1734, %v1878
        %v1937 = vsub.f32 %v1736, %v1915
        %v1938 = vsub.f32 %v1738, %v1878
        %v1939 = vsub.f32 %v1740, %v1915
        %v1940 = vsub.f32 %v1744, %v1878
        %v1941 = vsub.f32 %v1746, %v1915
        %v1942 = vsub.f32 %v1748, %v1878
        %v1943 = vsub.f32 %v1750, %v1915
        %v1944 = vsub.f32 %v1754, %v1878
        %v1945 = vsub.f32 %v1756, %v1915
        %v1946 = vsub.f32 %v1758, %v1878
        %v1947 = vsub.f32 %v1760, %v1915
        %v1948 = vsub.f32 %v1764, %v1878
        %v1949 = vsub.f32 %v1766, %v1915
        %v1950 = vsub.f32 %v1768, %v1878
        %v1951 = vsub.f32 %v1770, %v1915
        %v1952 = vsub.f32 %v1774, %v1878
        %v1953 = vsub.f32 %v1776, %v1915
        %v1954 = vsub.f32 %v1778, %v1878
        %v1955 = vsub.f32 %v1780, %v1915
        %v1956 = vsub.f32 %v1784, %v1878
        %v1957 = vsub.f32 %v1786, %v1915
        %v1958 = vsub.f32 %v1788, %v1878
        %v1959 = vsub.f32 %v1790, %v1915
        %v1960 = vsub.f32 %v1794, %v1878
        %v1961 = vsub.f32 %v1796, %v1915
        %v1962 = vsub.f32 %v1798, %v1878
        %v1963 = vsub.f32 %v1800, %v1915
        %v1964 = vsub.f32 %v1804, %v1878
        %v1965 = vsub.f32 %v1806, %v1915
        %v1966 = vsub.f32 %v1808, %v1878
        %v1967 = vsub.f32 %v1810, %v1915
        %v1968 = vsub.f32 %v1814, %v1878
        %v1969 = vsub.f32 %v1816, %v1915
        %v1970 = vsub.f32 %v1818, %v1878
        %v1971 = vsub.f32 %v1820, %v1915
        %v1972 = vsub.f32 %v1824, %v1878
        %v1973 = vsub.f32 %v1826, %v1915
        %v1974 = vsub.f32 %v1828, %v1878
        %v1975 = vsub.f32 %v1830, %v1915
        %v1976 = vsub.f32 %v1834, %v1878
        %v1977 = vsub.f32 %v1836, %v1915
        %v1978 = vsub.f32 %v1838, %v1878
        %v1979 = vsub.f32 %v1840, %v1915
        %v1980 = vmul.f32 %v1916, 1.442695
        %v1981 = vpow.pop %v1980
        %v1982 = vmul.f32 %v1917, 1.442695
        %v1983 = vpow.pop %v1982
        %v1984 = vmul.f32 %v1918, 1.442695
        %v1985 = vpow.pop %v1984
        %v1986 = vmul.f32 %v1919, 1.442695
        %v1987 = vpow.pop %v1986
        %v1988 = vmul.f32 %v1920, 1.442695
        %v1989 = vpow.pop %v1988
        %v1990 = vmul.f32 %v1921, 1.442695
        %v1991 = vpow.pop %v1990
        %v1992 = vmul.f32 %v1922, 1.442695
        %v1993 = vpow.pop %v1992
        %v1994 = vmul.f32 %v1923, 1.442695
        %v1995 = vpow.pop %v1994
        %v1996 = vmul.f32 %v1924, 1.442695
        %v1997 = vpow.pop %v1996
        %v1998 = vmul.f32 %v1925, 1.442695
        %v1999 = vpow.pop %v1998
        %v2000 = vmul.f32 %v1926, 1.442695
        %v2001 = vpow.pop %v2000
        %v2002 = vmul.f32 %v1927, 1.442695
        %v2003 = vpow.pop %v2002
        %v2004 = vmul.f32 %v1928, 1.442695
        %v2005 = vpow.pop %v2004
        %v2006 = vmul.f32 %v1929, 1.442695
        %v2007 = vpow.pop %v2006
        %v2008 = vmul.f32 %v1930, 1.442695
        %v2009 = vpow.pop %v2008
        %v2010 = vmul.f32 %v1931, 1.442695
        %v2011 = vpow.pop %v2010
        %v2012 = vmul.f32 %v1932, 1.442695
        %v2013 = vpow.pop %v2012
        %v2014 = vmul.f32 %v1933, 1.442695
        %v2015 = vpow.pop %v2014
        %v2016 = vmul.f32 %v1934, 1.442695
        %v2017 = vpow.pop %v2016
        %v2018 = vmul.f32 %v1935, 1.442695
        %v2019 = vpow.pop %v2018
        %v2020 = vmul.f32 %v1936, 1.442695
        %v2021 = vpow.pop %v2020
        %v2022 = vmul.f32 %v1937, 1.442695
        %v2023 = vpow.pop %v2022
        %v2024 = vmul.f32 %v1938, 1.442695
        %v2025 = vpow.pop %v2024
        %v2026 = vmul.f32 %v1939, 1.442695
        %v2027 = vpow.pop %v2026
        %v2028 = vmul.f32 %v1940, 1.442695
        %v2029 = vpow.pop %v2028
        %v2030 = vmul.f32 %v1941, 1.442695
        %v2031 = vpow.pop %v2030
        %v2032 = vmul.f32 %v1942, 1.442695
        %v2033 = vpow.pop %v2032
        %v2034 = vmul.f32 %v1943, 1.442695
        %v2035 = vpow.pop %v2034
        %v2036 = vmul.f32 %v1944, 1.442695
        %v2037 = vpow.pop %v2036
        %v2038 = vmul.f32 %v1945, 1.442695
        %v2039 = vpow.pop %v2038
        %v2040 = vmul.f32 %v1946, 1.442695
        %v2041 = vpow.pop %v2040
        %v2042 = vmul.f32 %v1947, 1.442695
        %v2043 = vpow.pop %v2042
        %v2044 = vmul.f32 %v1948, 1.442695
        %v2045 = vpow.pop %v2044
        %v2046 = vmul.f32 %v1949, 1.442695
        %v2047 = vpow.pop %v2046
        %v2048 = vmul.f32 %v1950, 1.442695
        %v2049 = vpow.pop %v2048
        %v2050 = vmul.f32 %v1951, 1.442695
        %v2051 = vpow.pop %v2050
        %v2052 = vmul.f32 %v1952, 1.442695
        %v2053 = vpow.pop %v2052
        %v2054 = vmul.f32 %v1953, 1.442695
        %v2055 = vpow.pop %v2054
        %v2056 = vmul.f32 %v1954, 1.442695
        %v2057 = vpow.pop %v2056
        %v2058 = vmul.f32 %v1955, 1.442695
        %v2059 = vpow.pop %v2058
        %v2060 = vmul.f32 %v1956, 1.442695
        %v2061 = vpow.pop %v2060
        %v2062 = vmul.f32 %v1957, 1.442695
        %v2063 = vpow.pop %v2062
        %v2064 = vmul.f32 %v1958, 1.442695
        %v2065 = vpow.pop %v2064
        %v2066 = vmul.f32 %v1959, 1.442695
        %v2067 = vpow.pop %v2066
        %v2068 = vmul.f32 %v1960, 1.442695
        %v2069 = vpow.pop %v2068
        %v2070 = vmul.f32 %v1961, 1.442695
        %v2071 = vpow.pop %v2070
        %v2072 = vmul.f32 %v1962, 1.442695
        %v2073 = vpow.pop %v2072
        %v2074 = vmul.f32 %v1963, 1.442695
        %v2075 = vpow.pop %v2074
        %v2076 = vmul.f32 %v1964, 1.442695
        %v2077 = vpow.pop %v2076
        %v2078 = vmul.f32 %v1965, 1.442695
        %v2079 = vpow.pop %v2078
        %v2080 = vmul.f32 %v1966, 1.442695
        %v2081 = vpow.pop %v2080
        %v2082 = vmul.f32 %v1967, 1.442695
        %v2083 = vpow.pop %v2082
        %v2084 = vmul.f32 %v1968, 1.442695
        %v2085 = vpow.pop %v2084
        %v2086 = vmul.f32 %v1969, 1.442695
        %v2087 = vpow.pop %v2086
        %v2088 = vmul.f32 %v1970, 1.442695
        %v2089 = vpow.pop %v2088
        %v2090 = vmul.f32 %v1971, 1.442695
        %v2091 = vpow.pop %v2090
        %v2092 = vmul.f32 %v1972, 1.442695
        %v2093 = vpow.pop %v2092
        %v2094 = vmul.f32 %v1973, 1.442695
        %v2095 = vpow.pop %v2094
        %v2096 = vmul.f32 %v1974, 1.442695
        %v2097 = vpow.pop %v2096
        %v2098 = vmul.f32 %v1975, 1.442695
        %v2099 = vpow.pop %v2098
        %v2100 = vmul.f32 %v1976, 1.442695
        %v2101 = vpow.pop %v2100
        %v2102 = vmul.f32 %v1977, 1.442695
        %v2103 = vpow.pop %v2102
        %v2104 = vmul.f32 %v1978, 1.442695
        %v2105 = vpow.pop %v2104
        %v2106 = vmul.f32 %v1979, 1.442695
        %v2107 = vpow.pop %v2106
        %v2108 = vadd.f32 %v1981, %v1985
        %v2109 = vadd.f32 %v2108, %v1989
        %v2110 = vadd.f32 %v2109, %v1993
        %v2111 = vadd.f32 %v2110, %v1997
        %v2112 = vadd.f32 %v2111, %v2001
        %v2113 = vadd.f32 %v2112, %v2005
        %v2114 = vadd.f32 %v2113, %v2009
        %v2115 = vadd.f32 %v2114, %v2013
        %v2116 = vadd.f32 %v2115, %v2017
        %v2117 = vadd.f32 %v2116, %v2021
        %v2118 = vadd.f32 %v2117, %v2025
        %v2119 = vadd.f32 %v2118, %v2029
        %v2120 = vadd.f32 %v2119, %v2033
        %v2121 = vadd.f32 %v2120, %v2037
        %v2122 = vadd.f32 %v2121, %v2041
        %v2123 = vadd.f32 %v2122, %v2045
        %v2124 = vadd.f32 %v2123, %v2049
        %v2125 = vadd.f32 %v2124, %v2053
        %v2126 = vadd.f32 %v2125, %v2057
        %v2127 = vadd.f32 %v2126, %v2061
        %v2128 = vadd.f32 %v2127, %v2065
        %v2129 = vadd.f32 %v2128, %v2069
        %v2130 = vadd.f32 %v2129, %v2073
        %v2131 = vadd.f32 %v2130, %v2077
        %v2132 = vadd.f32 %v2131, %v2081
        %v2133 = vadd.f32 %v2132, %v2085
        %v2134 = vadd.f32 %v2133, %v2089
        %v2135 = vadd.f32 %v2134, %v2093
        %v2136 = vadd.f32 %v2135, %v2097
        %v2137 = vadd.f32 %v2136, %v2101
        %v2138 = vadd.f32 %v2137, %v2105
        %v2139 = vrot.slane %v2138, 4
        %v2140 = vadd.f32 %v2138, %v2139
        %v2141 = vrot.slane %v2140, 2
        %v2142 = vadd.f32 %v2140, %v2141
        %v2143 = vrot.slane %v2142, 1
        %v2144 = vadd.f32 %v2142, %v2143
        %v2145 = vadd.f32 %v1983, %v1987
        %v2146 = vadd.f32 %v2145, %v1991
        %v2147 = vadd.f32 %v2146, %v1995
        %v2148 = vadd.f32 %v2147, %v1999
        %v2149 = vadd.f32 %v2148, %v2003
        %v2150 = vadd.f32 %v2149, %v2007
        %v2151 = vadd.f32 %v2150, %v2011
        %v2152 = vadd.f32 %v2151, %v2015
        %v2153 = vadd.f32 %v2152, %v2019
        %v2154 = vadd.f32 %v2153, %v2023
        %v2155 = vadd.f32 %v2154, %v2027
        %v2156 = vadd.f32 %v2155, %v2031
        %v2157 = vadd.f32 %v2156, %v2035
        %v2158 = vadd.f32 %v2157, %v2039
        %v2159 = vadd.f32 %v2158, %v2043
        %v2160 = vadd.f32 %v2159, %v2047
        %v2161 = vadd.f32 %v2160, %v2051
        %v2162 = vadd.f32 %v2161, %v2055
        %v2163 = vadd.f32 %v2162, %v2059
        %v2164 = vadd.f32 %v2163, %v2063
        %v2165 = vadd.f32 %v2164, %v2067
        %v2166 = vadd.f32 %v2165, %v2071
        %v2167 = vadd.f32 %v2166, %v2075
        %v2168 = vadd.f32 %v2167, %v2079
        %v2169 = vadd.f32 %v2168, %v2083
        %v2170 = vadd.f32 %v2169, %v2087
        %v2171 = vadd.f32 %v2170, %v2091
        %v2172 = vadd.f32 %v2171, %v2095
        %v2173 = vadd.f32 %v2172, %v2099
        %v2174 = vadd.f32 %v2173, %v2103
        %v2175 = vadd.f32 %v2174, %v2107
        %v2176 = vrot.slane %v2175, 4
        %v2177 = vadd.f32 %v2175, %v2176
        %v2178 = vrot.slane %v2177, 2
        %v2179 = vadd.f32 %v2177, %v2178
        %v2180 = vrot.slane %v2179, 1
        %v2181 = vadd.f32 %v2179, %v2180
        %v2182 = vpack.c.bf16 %v687, %v681
        %v2183 = vpack.c.bf16 %v689, %v683
        %v2184 = vpack.c.bf16 %v699, %v693
        %v2185 = vpack.c.bf16 %v701, %v695
        %v2186 = vpack.c.bf16 %v1985, %v1981
        %v2187 = vpack.c.bf16 %v1987, %v1983
        %v2188 = vpack.c.bf16 %v1993, %v1989
        %v2189 = vpack.c.bf16 %v1995, %v1991
        %v2190 = vpack.c.bf16 %v2001, %v1997
        %v2191 = vpack.c.bf16 %v2003, %v1999
        %v2192 = vpack.c.bf16 %v2009, %v2005
        %v2193 = vpack.c.bf16 %v2011, %v2007
        %v2194 = vpack.c.bf16 %v2017, %v2013
        %v2195 = vpack.c.bf16 %v2019, %v2015
        %v2196 = vpack.c.bf16 %v2025, %v2021
        %v2197 = vpack.c.bf16 %v2027, %v2023
        %v2198 = vpack.c.bf16 %v2033, %v2029
        %v2199 = vpack.c.bf16 %v2035, %v2031
        %v2200 = vpack.c.bf16 %v2041, %v2037
        %v2201 = vpack.c.bf16 %v2043, %v2039
        %v2202 = vpack.c.bf16 %v2049, %v2045
        %v2203 = vpack.c.bf16 %v2051, %v2047
        %v2204 = vpack.c.bf16 %v2057, %v2053
        %v2205 = vpack.c.bf16 %v2059, %v2055
        %v2206 = vpack.c.bf16 %v2065, %v2061
        %v2207 = vpack.c.bf16 %v2067, %v2063
        %v2208 = vpack.c.bf16 %v2073, %v2069
        %v2209 = vpack.c.bf16 %v2075, %v2071
        %v2210 = vpack.c.bf16 %v2081, %v2077
        %v2211 = vpack.c.bf16 %v2083, %v2079
        %v2212 = vpack.c.bf16 %v2089, %v2085
        %v2213 = vpack.c.bf16 %v2091, %v2087
        %v2214 = vpack.c.bf16 %v2097, %v2093
        %v2215 = vpack.c.bf16 %v2099, %v2095
        %v2216 = vpack.c.bf16 %v2105, %v2101
        %v2217 = vpack.c.bf16 %v2107, %v2103
        %2218 = vmatprep.subr.bf16.mxu0 %v2187
        %2219 = vmatpush1.bf16.msra.mxu0 %v2186
        %2220 = vmatprep.subr.bf16.mxu0 %v2189
        %2221 = vmatpush1.bf16.msra.mxu0 %v2188
        %2222 = vmatprep.subr.bf16.mxu0 %v2191
        %2223 = vmatpush1.bf16.msra.mxu0 %v2190
        %2224 = vmatprep.subr.bf16.mxu0 %v2193
        %2225 = vmatpush1.bf16.msra.mxu0 %v2192
        %2226 = vmatprep.subr.bf16.mxu0 %v2195
        %2227 = vmatpush1.bf16.msra.mxu0 %v2194
        %2228 = vmatprep.subr.bf16.mxu0 %v2197
        %2229 = vmatpush1.bf16.msra.mxu0 %v2196
        %2230 = vmatprep.subr.bf16.mxu0 %v2199
        %2231 = vmatpush1.bf16.msra.mxu0 %v2198
        %2232 = vmatprep.subr.bf16.mxu0 %v2201
        %2233 = vmatpush1.bf16.msra.mxu0 %v2200
        %2234 = vmatprep.subr.bf16.mxu0 %v2203
        %2235 = vmatpush1.bf16.msra.mxu0 %v2202
        %2236 = vmatprep.subr.bf16.mxu0 %v2205
        %2237 = vmatpush1.bf16.msra.mxu0 %v2204
        %2238 = vmatprep.subr.bf16.mxu0 %v2207
        %2239 = vmatpush1.bf16.msra.mxu0 %v2206
        %2240 = vmatprep.subr.bf16.mxu0 %v2209
        %2241 = vmatpush1.bf16.msra.mxu0 %v2208
        %2242 = vmatprep.subr.bf16.mxu0 %v2211
        %2243 = vmatpush1.bf16.msra.mxu0 %v2210
        %2244 = vmatprep.subr.bf16.mxu0 %v2213
        %2245 = vmatpush1.bf16.msra.mxu0 %v2212
        %2246 = vmatprep.subr.bf16.mxu0 %v2215
        %2247 = vmatpush1.bf16.msra.mxu0 %v2214
        %2248 = vmatprep.subr.bf16.mxu0 %v2217
        %2249 = vmatpush1.bf16.msra.mxu0 %v2216
        %2250 = vmatprep.mubr.bf16.mxu0 %v2183
        %2251 = vmatmul.mubr.bf16.gmra.mrb[0].mxu0 %v2182
        %v2252 = vpop.f32.mrb[0].mxu0
        %v2253 = vadd.f32 0.0, %v2252
        %v2254 = vpop.f32.mrb[0].mxu0
        %v2255 = vadd.f32 0.0, %v2254
        %v2256 = vpop.f32.mrb[0].mxu0
        %v2257 = vadd.f32 0.0, %v2256
        %v2258 = vpop.f32.mrb[0].mxu0
        %v2259 = vadd.f32 0.0, %v2258
        %2260 = vmatprep.mubr.bf16.mxu0 %v2185
        %2261 = vmatmul.mubr.bf16.gmra.mrb[0].mxu0 %v2184
        %v2262 = vpop.f32.mrb[0].mxu0
        %v2263 = vadd.f32 0.0, %v2262
        %v2264 = vpop.f32.mrb[0].mxu0
        %v2265 = vadd.f32 0.0, %v2264
        %v2266 = vpop.f32.mrb[0].mxu0
        %v2267 = vadd.f32 0.0, %v2266
        %v2268 = vpop.f32.mrb[0].mxu0
        %v2269 = vadd.f32 0.0, %v2268
        %2270 = vdwg.mxu0
        %v2271 = vrcp.pop %v2144
        %v2272 = vrcp.pop %v2181
        %v2273 = vmul.f32 %v2253, %v2271
        %v2274 = vmul.f32 %v2255, %v2272
        %v2275 = vmul.f32 %v2257, %v2271
        %v2276 = vmul.f32 %v2259, %v2272
        %v2277 = vmul.f32 %v2263, %v2271
        %v2278 = vmul.f32 %v2265, %v2272
        %v2279 = vmul.f32 %v2267, %v2271
        %v2280 = vmul.f32 %v2269, %v2272
        %s2281 = scalar_lea.vmem %s2, 4
        %v2282 = vld [vmem:[%s2281] sm:$0xf]
        %v2284 = vsel %vm835, %v2282, 0
        %2286 = vmatprep.subr.mxu0 %v2274
        %2287 = vmatpush1.msra.mxu0 %v2273
        %2288 = vmatprep.subr.mxu0 %v2276
        %2289 = vmatpush1.msra.mxu0 %v2275
        %2290 = vmatprep.subr.mxu0 %v2278
        %2291 = vmatpush1.msra.mxu0 %v2277
        %2292 = vmatprep.subr.mxu0 %v2280
        %2293 = vmatpush1.msra.mxu0 %v2279
        %2294 = vmatprep.subr.mxu0 0.0
        %2295 = vmatpush1.msra.mxu0 0.0
        %2296 = vmatprep.subr.mxu0 0.0
        %2297 = vmatpush1.msra.mxu0 0.0
        %2298 = vmatprep.subr.mxu0 0.0
        %2299 = vmatpush1.msra.mxu0 0.0
        %2300 = vmatprep.subr.mxu0 0.0
        %2301 = vmatpush1.msra.mxu0 0.0
        %2302 = vmatprep.subr.mxu0 0.0
        %2303 = vmatpush1.msra.mxu0 0.0
        %2304 = vmatprep.subr.mxu0 0.0
        %2305 = vmatpush1.msra.mxu0 0.0
        %2306 = vmatprep.subr.mxu0 0.0
        %2307 = vmatpush1.msra.mxu0 0.0
        %2308 = vmatprep.subr.mxu0 0.0
        %2309 = vmatpush1.msra.mxu0 0.0
        %2310 = vmatprep.subr.mxu0 0.0
        %2311 = vmatpush1.msra.mxu0 0.0
        %2312 = vmatprep.subr.mxu0 0.0
        %2313 = vmatpush1.msra.mxu0 0.0
        %2314 = vmatprep.subr.mxu0 0.0
        %2315 = vmatpush1.msra.mxu0 0.0
        %2316 = vmatprep.subr.mxu0 0.0
        %2317 = vmatpush1.msra.mxu0 0.0
        %2318 = vmatprep.subr.mxu0 0.0
        %2319 = vmatpush1.msra.mxu0 0.0
        %2320 = vmatprep.subr.mxu0 0.0
        %2321 = vmatpush1.msra.mxu0 0.0
        %2322 = vmatprep.subr.mxu0 0.0
        %2323 = vmatpush1.msra.mxu0 0.0
        %2324 = vmatprep.subr.mxu0 0.0
        %2325 = vmatpush1.msra.mxu0 0.0
        %2326 = vmatprep.subr.mxu0 0.0
        %2327 = vmatpush1.msra.mxu0 0.0
        %2328 = vmatprep.subr.mxu0 0.0
        %2329 = vmatpush1.msra.mxu0 0.0
        %2330 = vmatprep.subr.mxu0 0.0
        %2331 = vmatpush1.msra.mxu0 0.0
        %2332 = vmatprep.subr.mxu0 0.0
        %2333 = vmatpush1.msra.mxu0 0.0
        %2334 = vmatprep.subr.mxu0 0.0
        %2335 = vmatpush1.msra.mxu0 0.0
        %2336 = vmatprep.subr.mxu0 0.0
        %2337 = vmatpush1.msra.mxu0 0.0
        %2338 = vmatprep.subr.mxu0 0.0
        %2339 = vmatpush1.msra.mxu0 0.0
        %2340 = vmatprep.subr.mxu0 0.0
        %2341 = vmatpush1.msra.mxu0 0.0
        %2342 = vmatprep.subr.mxu0 0.0
        %2343 = vmatpush1.msra.mxu0 0.0
        %2344 = vmatprep.subr.mxu0 0.0
        %2345 = vmatpush1.msra.mxu0 0.0
        %2346 = vmatprep.subr.mxu0 0.0
        %2347 = vmatpush1.msra.mxu0 0.0
        %2348 = vmatprep.subr.mxu0 0.0
        %2349 = vmatpush1.msra.mxu0 0.0
        %2350 = vmatprep.mubr.f32.mxu0 0.0
        %2351 = vmatmul.mubr.f32.gmra.mrb[0].mxu0 %v2284
        %v2352 = vpop.f32.mrb[0].mxu0
        %v2353 = vadd.f32 0.0, %v2352
        %v2354 = vpop.f32.mrb[0].mxu0
        %v2355 = vadd.f32 0.0, %v2354
        %2356 = vdwg.mxu0
        %v2358 = vsel %vm835, %v1516, 0
        %2360 = vmatprep.subr.mxu0 %v1509
        %2361 = vmatpush1.msra.mxu0 %v1508
        %2362 = vmatprep.subr.mxu0 %v1511
        %2363 = vmatpush1.msra.mxu0 %v1510
        %2364 = vmatprep.subr.mxu0 %v1513
        %2365 = vmatpush1.msra.mxu0 %v1512
        %2366 = vmatprep.subr.mxu0 %v1515
        %2367 = vmatpush1.msra.mxu0 %v1514
        %2368 = vmatprep.subr.mxu0 0.0
        %2369 = vmatpush1.msra.mxu0 0.0
        %2370 = vmatprep.subr.mxu0 0.0
        %2371 = vmatpush1.msra.mxu0 0.0
        %2372 = vmatprep.subr.mxu0 0.0
        %2373 = vmatpush1.msra.mxu0 0.0
        %2374 = vmatprep.subr.mxu0 0.0
        %2375 = vmatpush1.msra.mxu0 0.0
        %2376 = vmatprep.subr.mxu0 0.0
        %2377 = vmatpush1.msra.mxu0 0.0
        %2378 = vmatprep.subr.mxu0 0.0
        %2379 = vmatpush1.msra.mxu0 0.0
        %2380 = vmatprep.subr.mxu0 0.0
        %2381 = vmatpush1.msra.mxu0 0.0
        %2382 = vmatprep.subr.mxu0 0.0
        %2383 = vmatpush1.msra.mxu0 0.0
        %2384 = vmatprep.subr.mxu0 0.0
        %2385 = vmatpush1.msra.mxu0 0.0
        %2386 = vmatprep.subr.mxu0 0.0
        %2387 = vmatpush1.msra.mxu0 0.0
        %2388 = vmatprep.subr.mxu0 0.0
        %2389 = vmatpush1.msra.mxu0 0.0
        %2390 = vmatprep.subr.mxu0 0.0
        %2391 = vmatpush1.msra.mxu0 0.0
        %2392 = vmatprep.subr.mxu0 0.0
        %2393 = vmatpush1.msra.mxu0 0.0
        %2394 = vmatprep.subr.mxu0 0.0
        %2395 = vmatpush1.msra.mxu0 0.0
        %2396 = vmatprep.subr.mxu0 0.0
        %2397 = vmatpush1.msra.mxu0 0.0
        %2398 = vmatprep.subr.mxu0 0.0
        %2399 = vmatpush1.msra.mxu0 0.0
        %2400 = vmatprep.subr.mxu0 0.0
        %2401 = vmatpush1.msra.mxu0 0.0
        %2402 = vmatprep.subr.mxu0 0.0
        %2403 = vmatpush1.msra.mxu0 0.0
        %2404 = vmatprep.subr.mxu0 0.0
        %2405 = vmatpush1.msra.mxu0 0.0
        %2406 = vmatprep.subr.mxu0 0.0
        %2407 = vmatpush1.msra.mxu0 0.0
        %2408 = vmatprep.subr.mxu0 0.0
        %2409 = vmatpush1.msra.mxu0 0.0
        %2410 = vmatprep.subr.mxu0 0.0
        %2411 = vmatpush1.msra.mxu0 0.0
        %2412 = vmatprep.subr.mxu0 0.0
        %2413 = vmatpush1.msra.mxu0 0.0
        %2414 = vmatprep.subr.mxu0 0.0
        %2415 = vmatpush1.msra.mxu0 0.0
        %2416 = vmatprep.subr.mxu0 0.0
        %2417 = vmatpush1.msra.mxu0 0.0
        %2418 = vmatprep.subr.mxu0 0.0
        %2419 = vmatpush1.msra.mxu0 0.0
        %2420 = vmatprep.subr.mxu0 0.0
        %2421 = vmatpush1.msra.mxu0 0.0
        %2422 = vmatprep.subr.mxu0 0.0
        %2423 = vmatpush1.msra.mxu0 0.0
        %2424 = vmatprep.mubr.f32.mxu0 0.0
        %2425 = vmatmul.mubr.f32.gmra.mrb[0].mxu0 %v2358
        %v2426 = vpop.f32.mrb[0].mxu0
        %v2427 = vadd.f32 %v2353, %v2426
        %v2428 = vpop.f32.mrb[0].mxu0
        %v2429 = vadd.f32 %v2355, %v2428
        %2430 = vdwg.mxu0
        %2431 = vxpose.xlu0.b32.start [1/16] %v609, 128
        %2432 = vxpose.xlu0.b32.cont [2/16] %v615, 128
        %2433 = vxpose.xlu0.b32.cont [3/16] %v621, 128
        %2434 = vxpose.xlu0.b32.cont [4/16] %v627, 128
        %2435 = vxpose.xlu0.b32.cont [5/16] 0.0, 128
        %2436 = vxpose.xlu0.b32.cont [6/16] 0.0, 128
        %2437 = vxpose.xlu0.b32.cont [7/16] 0.0, 128
        %2438 = vxpose.xlu0.b32.cont [8/16] 0.0, 128
        %2439 = vxpose.xlu0.b32.cont [9/16] 0.0, 128
        %2440 = vxpose.xlu0.b32.cont [10/16] 0.0, 128
        %2441 = vxpose.xlu0.b32.cont [11/16] 0.0, 128
        %2442 = vxpose.xlu0.b32.cont [12/16] 0.0, 128
        %2443 = vxpose.xlu0.b32.cont [13/16] 0.0, 128
        %2444 = vxpose.xlu0.b32.cont [14/16] 0.0, 128
        %2445 = vxpose.xlu0.b32.cont [15/16] 0.0, 128
        %2446 = vxpose.xlu0.b32.end [16/16] 0.0, 128
        %v2447 = vpop.trf.xlu0
        %v2448 = vpop.trf.xlu0
        %v2449 = vpop.trf.xlu0
        %v2450 = vpop.trf.xlu0
        %v2451 = vpop.trf.xlu0
        %v2452 = vpop.trf.xlu0
        %v2453 = vpop.trf.xlu0
        %v2454 = vpop.trf.xlu0
        %v2455 = vpop.trf.xlu0
        %v2456 = vpop.trf.xlu0
        %v2457 = vpop.trf.xlu0
        %v2458 = vpop.trf.xlu0
        %v2459 = vpop.trf.xlu0
        %v2460 = vpop.trf.xlu0
        %v2461 = vpop.trf.xlu0
        %v2462 = vpop.trf.xlu0
        %2463 = vxpose.xlu0.b32.start [1/16] %v611, 128
        %2464 = vxpose.xlu0.b32.cont [2/16] %v617, 128
        %2465 = vxpose.xlu0.b32.cont [3/16] %v623, 128
        %2466 = vxpose.xlu0.b32.cont [4/16] %v629, 128
        %2467 = vxpose.xlu0.b32.cont [5/16] 0.0, 128
        %2468 = vxpose.xlu0.b32.cont [6/16] 0.0, 128
        %2469 = vxpose.xlu0.b32.cont [7/16] 0.0, 128
        %2470 = vxpose.xlu0.b32.cont [8/16] 0.0, 128
        %2471 = vxpose.xlu0.b32.cont [9/16] 0.0, 128
        %2472 = vxpose.xlu0.b32.cont [10/16] 0.0, 128
        %2473 = vxpose.xlu0.b32.cont [11/16] 0.0, 128
        %2474 = vxpose.xlu0.b32.cont [12/16] 0.0, 128
        %2475 = vxpose.xlu0.b32.cont [13/16] 0.0, 128
        %2476 = vxpose.xlu0.b32.cont [14/16] 0.0, 128
        %2477 = vxpose.xlu0.b32.cont [15/16] 0.0, 128
        %2478 = vxpose.xlu0.b32.end [16/16] 0.0, 128
        %v2479 = vpop.trf.xlu0
        %v2480 = vpop.trf.xlu0
        %v2481 = vpop.trf.xlu0
        %v2482 = vpop.trf.xlu0
        %v2483 = vpop.trf.xlu0
        %v2484 = vpop.trf.xlu0
        %v2485 = vpop.trf.xlu0
        %v2486 = vpop.trf.xlu0
        %v2487 = vpop.trf.xlu0
        %v2488 = vpop.trf.xlu0
        %v2489 = vpop.trf.xlu0
        %v2490 = vpop.trf.xlu0
        %v2491 = vpop.trf.xlu0
        %v2492 = vpop.trf.xlu0
        %v2493 = vpop.trf.xlu0
        %v2494 = vpop.trf.xlu0
        %v2495 = vpack.c.bf16 %v2448, %v2447
        %v2496 = vpack.c.bf16 %v2450, %v2449
        %v2497 = vpack.c.bf16 %v2452, %v2451
        %v2498 = vpack.c.bf16 %v2454, %v2453
        %v2499 = vpack.c.bf16 %v2456, %v2455
        %v2500 = vpack.c.bf16 %v2458, %v2457
        %v2501 = vpack.c.bf16 %v2460, %v2459
        %v2502 = vpack.c.bf16 %v2462, %v2461
        %v2503 = vpack.c.bf16 %v2480, %v2479
        %v2504 = vpack.c.bf16 %v2482, %v2481
        %v2505 = vpack.c.bf16 %v2484, %v2483
        %v2506 = vpack.c.bf16 %v2486, %v2485
        %v2507 = vpack.c.bf16 %v2488, %v2487
        %v2508 = vpack.c.bf16 %v2490, %v2489
        %v2509 = vpack.c.bf16 %v2492, %v2491
        %v2510 = vpack.c.bf16 %v2494, %v2493
        %v2511 = vpack.c.bf16 %v519, %v513
        %v2512 = vpack.c.bf16 %v521, %v515
        %v2513 = vpack.c.bf16 %v531, %v525
        %v2514 = vpack.c.bf16 %v533, %v527
        %v2516 = vsel %vm835, %v2495, 0
        %v2519 = vsel %vm835, %v2496, 0
        %v2522 = vsel %vm835, %v2497, 0
        %v2525 = vsel %vm835, %v2498, 0
        %v2528 = vsel %vm835, %v2499, 0
        %v2531 = vsel %vm835, %v2500, 0
        %v2534 = vsel %vm835, %v2501, 0
        %v2537 = vsel %vm835, %v2502, 0
        %v2540 = vsel %vm835, %v2503, 0
        %v2543 = vsel %vm835, %v2504, 0
        %v2546 = vsel %vm835, %v2505, 0
        %v2549 = vsel %vm835, %v2506, 0
        %v2552 = vsel %vm835, %v2507, 0
        %v2555 = vsel %vm835, %v2508, 0
        %v2558 = vsel %vm835, %v2509, 0
        %v2561 = vsel %vm835, %v2510, 0
        %2563 = vmatprep.subr.bf16.mxu0 %v2512
        %2564 = vmatpush1.bf16.msra.mxu0 %v2511
        %2565 = vmatprep.subr.bf16.mxu0 %v2514
        %2566 = vmatpush1.bf16.msra.mxu0 %v2513
        %2567 = vmatprep.subr.bf16.mxu0 0
        %2568 = vmatpush1.bf16.msra.mxu0 0
        %2569 = vmatprep.subr.bf16.mxu0 0
        %2570 = vmatpush1.bf16.msra.mxu0 0
        %2571 = vmatprep.subr.bf16.mxu0 0
        %2572 = vmatpush1.bf16.msra.mxu0 0
        %2573 = vmatprep.subr.bf16.mxu0 0
        %2574 = vmatpush1.bf16.msra.mxu0 0
        %2575 = vmatprep.subr.bf16.mxu0 0
        %2576 = vmatpush1.bf16.msra.mxu0 0
        %2577 = vmatprep.subr.bf16.mxu0 0
        %2578 = vmatpush1.bf16.msra.mxu0 0
        %2579 = vmatprep.subr.bf16.mxu0 0
        %2580 = vmatpush1.bf16.msra.mxu0 0
        %2581 = vmatprep.subr.bf16.mxu0 0
        %2582 = vmatpush1.bf16.msra.mxu0 0
        %2583 = vmatprep.subr.bf16.mxu0 0
        %2584 = vmatpush1.bf16.msra.mxu0 0
        %2585 = vmatprep.subr.bf16.mxu0 0
        %2586 = vmatpush1.bf16.msra.mxu0 0
        %2587 = vmatprep.subr.bf16.mxu0 0
        %2588 = vmatpush1.bf16.msra.mxu0 0
        %2589 = vmatprep.subr.bf16.mxu0 0
        %2590 = vmatpush1.bf16.msra.mxu0 0
        %2591 = vmatprep.subr.bf16.mxu0 0
        %2592 = vmatpush1.bf16.msra.mxu0 0
        %2593 = vmatprep.subr.bf16.mxu0 0
        %2594 = vmatpush1.bf16.msra.mxu0 0
        %2595 = vmatprep.mubr.bf16.mxu0 0
        %2596 = vmatmul.mubr.bf16.gmra.mrb[0].mxu0 %v2516
        %v2597 = vpop.f32.mrb[0].mxu0
        %v2598 = vadd.f32 0.0, %v2597
        %v2599 = vpop.f32.mrb[0].mxu0
        %v2600 = vadd.f32 0.0, %v2599
        %v2601 = vpop.f32.mrb[0].mxu0
        %v2602 = vadd.f32 0.0, %v2601
        %v2603 = vpop.f32.mrb[0].mxu0
        %v2604 = vadd.f32 0.0, %v2603
        %2605 = vmatprep.mubr.bf16.mxu0 0
        %2606 = vmatmul.mubr.bf16.gmra.mrb[0].mxu0 %v2519
        %v2607 = vpop.f32.mrb[0].mxu0
        %v2608 = vadd.f32 0.0, %v2607
        %v2609 = vpop.f32.mrb[0].mxu0
        %v2610 = vadd.f32 0.0, %v2609
        %v2611 = vpop.f32.mrb[0].mxu0
        %v2612 = vadd.f32 0.0, %v2611
        %v2613 = vpop.f32.mrb[0].mxu0
        %v2614 = vadd.f32 0.0, %v2613
        %2615 = vmatprep.mubr.bf16.mxu0 0
        %2616 = vmatmul.mubr.bf16.gmra.mrb[0].mxu0 %v2522
        %v2617 = vpop.f32.mrb[0].mxu0
        %v2618 = vadd.f32 0.0, %v2617
        %v2619 = vpop.f32.mrb[0].mxu0
        %v2620 = vadd.f32 0.0, %v2619
        %v2621 = vpop.f32.mrb[0].mxu0
        %v2622 = vadd.f32 0.0, %v2621
        %v2623 = vpop.f32.mrb[0].mxu0
        %v2624 = vadd.f32 0.0, %v2623
        %2625 = vmatprep.mubr.bf16.mxu0 0
        %2626 = vmatmul.mubr.bf16.gmra.mrb[0].mxu0 %v2525
        %v2627 = vpop.f32.mrb[0].mxu0
        %v2628 = vadd.f32 0.0, %v2627
        %v2629 = vpop.f32.mrb[0].mxu0
        %v2630 = vadd.f32 0.0, %v2629
        %v2631 = vpop.f32.mrb[0].mxu0
        %v2632 = vadd.f32 0.0, %v2631
        %v2633 = vpop.f32.mrb[0].mxu0
        %v2634 = vadd.f32 0.0, %v2633
        %2635 = vmatprep.mubr.bf16.mxu0 0
        %2636 = vmatmul.mubr.bf16.gmra.mrb[0].mxu0 %v2528
        %v2637 = vpop.f32.mrb[0].mxu0
        %v2638 = vadd.f32 0.0, %v2637
        %v2639 = vpop.f32.mrb[0].mxu0
        %v2640 = vadd.f32 0.0, %v2639
        %v2641 = vpop.f32.mrb[0].mxu0
        %v2642 = vadd.f32 0.0, %v2641
        %v2643 = vpop.f32.mrb[0].mxu0
        %v2644 = vadd.f32 0.0, %v2643
        %2645 = vmatprep.mubr.bf16.mxu0 0
        %2646 = vmatmul.mubr.bf16.gmra.mrb[0].mxu0 %v2531
        %v2647 = vpop.f32.mrb[0].mxu0
        %v2648 = vadd.f32 0.0, %v2647
        %v2649 = vpop.f32.mrb[0].mxu0
        %v2650 = vadd.f32 0.0, %v2649
        %v2651 = vpop.f32.mrb[0].mxu0
        %v2652 = vadd.f32 0.0, %v2651
        %v2653 = vpop.f32.mrb[0].mxu0
        %v2654 = vadd.f32 0.0, %v2653
        %2655 = vmatprep.mubr.bf16.mxu0 0
        %2656 = vmatmul.mubr.bf16.gmra.mrb[0].mxu0 %v2534
        %v2657 = vpop.f32.mrb[0].mxu0
        %v2658 = vadd.f32 0.0, %v2657
        %v2659 = vpop.f32.mrb[0].mxu0
        %v2660 = vadd.f32 0.0, %v2659
        %v2661 = vpop.f32.mrb[0].mxu0
        %v2662 = vadd.f32 0.0, %v2661
        %v2663 = vpop.f32.mrb[0].mxu0
        %v2664 = vadd.f32 0.0, %v2663
        %2665 = vmatprep.mubr.bf16.mxu0 0
        %2666 = vmatmul.mubr.bf16.gmra.mrb[0].mxu0 %v2537
        %v2667 = vpop.f32.mrb[0].mxu0
        %v2668 = vadd.f32 0.0, %v2667
        %v2669 = vpop.f32.mrb[0].mxu0
        %v2670 = vadd.f32 0.0, %v2669
        %v2671 = vpop.f32.mrb[0].mxu0
        %v2672 = vadd.f32 0.0, %v2671
        %v2673 = vpop.f32.mrb[0].mxu0
        %v2674 = vadd.f32 0.0, %v2673
        %2675 = vmatprep.mubr.bf16.mxu0 0
        %2676 = vmatmul.mubr.bf16.gmra.mrb[0].mxu0 %v2540
        %v2677 = vpop.f32.mrb[0].mxu0
        %v2678 = vadd.f32 0.0, %v2677
        %v2679 = vpop.f32.mrb[0].mxu0
        %v2680 = vadd.f32 0.0, %v2679
        %v2681 = vpop.f32.mrb[0].mxu0
        %v2682 = vadd.f32 0.0, %v2681
        %v2683 = vpop.f32.mrb[0].mxu0
        %v2684 = vadd.f32 0.0, %v2683
        %2685 = vmatprep.mubr.bf16.mxu0 0
        %2686 = vmatmul.mubr.bf16.gmra.mrb[0].mxu0 %v2543
        %v2687 = vpop.f32.mrb[0].mxu0
        %v2688 = vadd.f32 0.0, %v2687
        %v2689 = vpop.f32.mrb[0].mxu0
        %v2690 = vadd.f32 0.0, %v2689
        %v2691 = vpop.f32.mrb[0].mxu0
        %v2692 = vadd.f32 0.0, %v2691
        %v2693 = vpop.f32.mrb[0].mxu0
        %v2694 = vadd.f32 0.0, %v2693
        %2695 = vmatprep.mubr.bf16.mxu0 0
        %2696 = vmatmul.mubr.bf16.gmra.mrb[0].mxu0 %v2546
        %v2697 = vpop.f32.mrb[0].mxu0
        %v2698 = vadd.f32 0.0, %v2697
        %v2699 = vpop.f32.mrb[0].mxu0
        %v2700 = vadd.f32 0.0, %v2699
        %v2701 = vpop.f32.mrb[0].mxu0
        %v2702 = vadd.f32 0.0, %v2701
        %v2703 = vpop.f32.mrb[0].mxu0
        %v2704 = vadd.f32 0.0, %v2703
        %2705 = vmatprep.mubr.bf16.mxu0 0
        %2706 = vmatmul.mubr.bf16.gmra.mrb[0].mxu0 %v2549
        %v2707 = vpop.f32.mrb[0].mxu0
        %v2708 = vadd.f32 0.0, %v2707
        %v2709 = vpop.f32.mrb[0].mxu0
        %v2710 = vadd.f32 0.0, %v2709
        %v2711 = vpop.f32.mrb[0].mxu0
        %v2712 = vadd.f32 0.0, %v2711
        %v2713 = vpop.f32.mrb[0].mxu0
        %v2714 = vadd.f32 0.0, %v2713
        %2715 = vmatprep.mubr.bf16.mxu0 0
        %2716 = vmatmul.mubr.bf16.gmra.mrb[0].mxu0 %v2552
        %v2717 = vpop.f32.mrb[0].mxu0
        %v2718 = vadd.f32 0.0, %v2717
        %v2719 = vpop.f32.mrb[0].mxu0
        %v2720 = vadd.f32 0.0, %v2719
        %v2721 = vpop.f32.mrb[0].mxu0
        %v2722 = vadd.f32 0.0, %v2721
        %v2723 = vpop.f32.mrb[0].mxu0
        %v2724 = vadd.f32 0.0, %v2723
        %2725 = vmatprep.mubr.bf16.mxu0 0
        %2726 = vmatmul.mubr.bf16.gmra.mrb[0].mxu0 %v2555
        %v2727 = vpop.f32.mrb[0].mxu0
        %v2728 = vadd.f32 0.0, %v2727
        %v2729 = vpop.f32.mrb[0].mxu0
        %v2730 = vadd.f32 0.0, %v2729
        %v2731 = vpop.f32.mrb[0].mxu0
        %v2732 = vadd.f32 0.0, %v2731
        %v2733 = vpop.f32.mrb[0].mxu0
        %v2734 = vadd.f32 0.0, %v2733
        %2735 = vmatprep.mubr.bf16.mxu0 0
        %2736 = vmatmul.mubr.bf16.gmra.mrb[0].mxu0 %v2558
        %v2737 = vpop.f32.mrb[0].mxu0
        %v2738 = vadd.f32 0.0, %v2737
        %v2739 = vpop.f32.mrb[0].mxu0
        %v2740 = vadd.f32 0.0, %v2739
        %v2741 = vpop.f32.mrb[0].mxu0
        %v2742 = vadd.f32 0.0, %v2741
        %v2743 = vpop.f32.mrb[0].mxu0
        %v2744 = vadd.f32 0.0, %v2743
        %2745 = vmatprep.mubr.bf16.mxu0 0
        %2746 = vmatmul.mubr.bf16.gmra.mrb[0].mxu0 %v2561
        %v2747 = vpop.f32.mrb[0].mxu0
        %v2748 = vadd.f32 0.0, %v2747
        %v2749 = vpop.f32.mrb[0].mxu0
        %v2750 = vadd.f32 0.0, %v2749
        %v2751 = vpop.f32.mrb[0].mxu0
        %v2752 = vadd.f32 0.0, %v2751
        %v2753 = vpop.f32.mrb[0].mxu0
        %v2754 = vadd.f32 0.0, %v2753
        %2755 = vdwg.mxu0
        %v2756 = vmax.f32 %v2598, %v2608
        %v2757 = vmax.f32 %v2602, %v2612
        %v2758 = vmax.f32 %v2756, %v2618
        %v2759 = vmax.f32 %v2757, %v2622
        %v2760 = vmax.f32 %v2758, %v2628
        %v2761 = vmax.f32 %v2759, %v2632
        %v2762 = vmax.f32 %v2760, %v2638
        %v2763 = vmax.f32 %v2761, %v2642
        %v2764 = vmax.f32 %v2762, %v2648
        %v2765 = vmax.f32 %v2763, %v2652
        %v2766 = vmax.f32 %v2764, %v2658
        %v2767 = vmax.f32 %v2765, %v2662
        %v2768 = vmax.f32 %v2766, %v2668
        %v2769 = vmax.f32 %v2767, %v2672
        %v2770 = vmax.f32 %v2768, %v2678
        %v2771 = vmax.f32 %v2769, %v2682
        %v2772 = vmax.f32 %v2770, %v2688
        %v2773 = vmax.f32 %v2771, %v2692
        %v2774 = vmax.f32 %v2772, %v2698
        %v2775 = vmax.f32 %v2773, %v2702
        %v2776 = vmax.f32 %v2774, %v2708
        %v2777 = vmax.f32 %v2775, %v2712
        %v2778 = vmax.f32 %v2776, %v2718
        %v2779 = vmax.f32 %v2777, %v2722
        %v2780 = vmax.f32 %v2778, %v2728
        %v2781 = vmax.f32 %v2779, %v2732
        %v2782 = vmax.f32 %v2780, %v2738
        %v2783 = vmax.f32 %v2781, %v2742
        %v2784 = vmax.f32 %v2782, %v2748
        %v2785 = vmax.f32 %v2783, %v2752
        %v2786 = vmax.f32 %v2784, %v2785
        %v2787 = vrot.slane %v2786, 4
        %v2788 = vmax.f32 %v2786, %v2787
        %v2789 = vrot.slane %v2788, 2
        %v2790 = vmax.f32 %v2788, %v2789
        %v2791 = vrot.slane %v2790, 1
        %v2792 = vmax.f32 %v2790, %v2791
        %v2793 = vmax.f32 %v2600, %v2610
        %v2794 = vmax.f32 %v2604, %v2614
        %v2795 = vmax.f32 %v2793, %v2620
        %v2796 = vmax.f32 %v2794, %v2624
        %v2797 = vmax.f32 %v2795, %v2630
        %v2798 = vmax.f32 %v2796, %v2634
        %v2799 = vmax.f32 %v2797, %v2640
        %v2800 = vmax.f32 %v2798, %v2644
        %v2801 = vmax.f32 %v2799, %v2650
        %v2802 = vmax.f32 %v2800, %v2654
        %v2803 = vmax.f32 %v2801, %v2660
        %v2804 = vmax.f32 %v2802, %v2664
        %v2805 = vmax.f32 %v2803, %v2670
        %v2806 = vmax.f32 %v2804, %v2674
        %v2807 = vmax.f32 %v2805, %v2680
        %v2808 = vmax.f32 %v2806, %v2684
        %v2809 = vmax.f32 %v2807, %v2690
        %v2810 = vmax.f32 %v2808, %v2694
        %v2811 = vmax.f32 %v2809, %v2700
        %v2812 = vmax.f32 %v2810, %v2704
        %v2813 = vmax.f32 %v2811, %v2710
        %v2814 = vmax.f32 %v2812, %v2714
        %v2815 = vmax.f32 %v2813, %v2720
        %v2816 = vmax.f32 %v2814, %v2724
        %v2817 = vmax.f32 %v2815, %v2730
        %v2818 = vmax.f32 %v2816, %v2734
        %v2819 = vmax.f32 %v2817, %v2740
        %v2820 = vmax.f32 %v2818, %v2744
        %v2821 = vmax.f32 %v2819, %v2750
        %v2822 = vmax.f32 %v2820, %v2754
        %v2823 = vmax.f32 %v2821, %v2822
        %v2824 = vrot.slane %v2823, 4
        %v2825 = vmax.f32 %v2823, %v2824
        %v2826 = vrot.slane %v2825, 2
        %v2827 = vmax.f32 %v2825, %v2826
        %v2828 = vrot.slane %v2827, 1
        %v2829 = vmax.f32 %v2827, %v2828
        %v2830 = vsub.f32 %v2598, %v2792
        %v2831 = vsub.f32 %v2600, %v2829
        %v2832 = vsub.f32 %v2602, %v2792
        %v2833 = vsub.f32 %v2604, %v2829
        %v2834 = vsub.f32 %v2608, %v2792
        %v2835 = vsub.f32 %v2610, %v2829
        %v2836 = vsub.f32 %v2612, %v2792
        %v2837 = vsub.f32 %v2614, %v2829
        %v2838 = vsub.f32 %v2618, %v2792
        %v2839 = vsub.f32 %v2620, %v2829
        %v2840 = vsub.f32 %v2622, %v2792
        %v2841 = vsub.f32 %v2624, %v2829
        %v2842 = vsub.f32 %v2628, %v2792
        %v2843 = vsub.f32 %v2630, %v2829
        %v2844 = vsub.f32 %v2632, %v2792
        %v2845 = vsub.f32 %v2634, %v2829
        %v2846 = vsub.f32 %v2638, %v2792
        %v2847 = vsub.f32 %v2640, %v2829
        %v2848 = vsub.f32 %v2642, %v2792
        %v2849 = vsub.f32 %v2644, %v2829
        %v2850 = vsub.f32 %v2648, %v2792
        %v2851 = vsub.f32 %v2650, %v2829
        %v2852 = vsub.f32 %v2652, %v2792
        %v2853 = vsub.f32 %v2654, %v2829
        %v2854 = vsub.f32 %v2658, %v2792
        %v2855 = vsub.f32 %v2660, %v2829
        %v2856 = vsub.f32 %v2662, %v2792
        %v2857 = vsub.f32 %v2664, %v2829
        %v2858 = vsub.f32 %v2668, %v2792
        %v2859 = vsub.f32 %v2670, %v2829
        %v2860 = vsub.f32 %v2672, %v2792
        %v2861 = vsub.f32 %v2674, %v2829
        %v2862 = vsub.f32 %v2678, %v2792
        %v2863 = vsub.f32 %v2680, %v2829
        %v2864 = vsub.f32 %v2682, %v2792
        %v2865 = vsub.f32 %v2684, %v2829
        %v2866 = vsub.f32 %v2688, %v2792
        %v2867 = vsub.f32 %v2690, %v2829
        %v2868 = vsub.f32 %v2692, %v2792
        %v2869 = vsub.f32 %v2694, %v2829
        %v2870 = vsub.f32 %v2698, %v2792
        %v2871 = vsub.f32 %v2700, %v2829
        %v2872 = vsub.f32 %v2702, %v2792
        %v2873 = vsub.f32 %v2704, %v2829
        %v2874 = vsub.f32 %v2708, %v2792
        %v2875 = vsub.f32 %v2710, %v2829
        %v2876 = vsub.f32 %v2712, %v2792
        %v2877 = vsub.f32 %v2714, %v2829
        %v2878 = vsub.f32 %v2718, %v2792
        %v2879 = vsub.f32 %v2720, %v2829
        %v2880 = vsub.f32 %v2722, %v2792
        %v2881 = vsub.f32 %v2724, %v2829
        %v2882 = vsub.f32 %v2728, %v2792
        %v2883 = vsub.f32 %v2730, %v2829
        %v2884 = vsub.f32 %v2732, %v2792
        %v2885 = vsub.f32 %v2734, %v2829
        %v2886 = vsub.f32 %v2738, %v2792
        %v2887 = vsub.f32 %v2740, %v2829
        %v2888 = vsub.f32 %v2742, %v2792
        %v2889 = vsub.f32 %v2744, %v2829
        %v2890 = vsub.f32 %v2748, %v2792
        %v2891 = vsub.f32 %v2750, %v2829
        %v2892 = vsub.f32 %v2752, %v2792
        %v2893 = vsub.f32 %v2754, %v2829
        %v2894 = vmul.f32 %v2830, 1.442695
        %v2895 = vpow.pop %v2894
        %v2896 = vmul.f32 %v2831, 1.442695
        %v2897 = vpow.pop %v2896
        %v2898 = vmul.f32 %v2832, 1.442695
        %v2899 = vpow.pop %v2898
        %v2900 = vmul.f32 %v2833, 1.442695
        %v2901 = vpow.pop %v2900
        %v2902 = vmul.f32 %v2834, 1.442695
        %v2903 = vpow.pop %v2902
        %v2904 = vmul.f32 %v2835, 1.442695
        %v2905 = vpow.pop %v2904
        %v2906 = vmul.f32 %v2836, 1.442695
        %v2907 = vpow.pop %v2906
        %v2908 = vmul.f32 %v2837, 1.442695
        %v2909 = vpow.pop %v2908
        %v2910 = vmul.f32 %v2838, 1.442695
        %v2911 = vpow.pop %v2910
        %v2912 = vmul.f32 %v2839, 1.442695
        %v2913 = vpow.pop %v2912
        %v2914 = vmul.f32 %v2840, 1.442695
        %v2915 = vpow.pop %v2914
        %v2916 = vmul.f32 %v2841, 1.442695
        %v2917 = vpow.pop %v2916
        %v2918 = vmul.f32 %v2842, 1.442695
        %v2919 = vpow.pop %v2918
        %v2920 = vmul.f32 %v2843, 1.442695
        %v2921 = vpow.pop %v2920
        %v2922 = vmul.f32 %v2844, 1.442695
        %v2923 = vpow.pop %v2922
        %v2924 = vmul.f32 %v2845, 1.442695
        %v2925 = vpow.pop %v2924
        %v2926 = vmul.f32 %v2846, 1.442695
        %v2927 = vpow.pop %v2926
        %v2928 = vmul.f32 %v2847, 1.442695
        %v2929 = vpow.pop %v2928
        %v2930 = vmul.f32 %v2848, 1.442695
        %v2931 = vpow.pop %v2930
        %v2932 = vmul.f32 %v2849, 1.442695
        %v2933 = vpow.pop %v2932
        %v2934 = vmul.f32 %v2850, 1.442695
        %v2935 = vpow.pop %v2934
        %v2936 = vmul.f32 %v2851, 1.442695
        %v2937 = vpow.pop %v2936
        %v2938 = vmul.f32 %v2852, 1.442695
        %v2939 = vpow.pop %v2938
        %v2940 = vmul.f32 %v2853, 1.442695
        %v2941 = vpow.pop %v2940
        %v2942 = vmul.f32 %v2854, 1.442695
        %v2943 = vpow.pop %v2942
        %v2944 = vmul.f32 %v2855, 1.442695
        %v2945 = vpow.pop %v2944
        %v2946 = vmul.f32 %v2856, 1.442695
        %v2947 = vpow.pop %v2946
        %v2948 = vmul.f32 %v2857, 1.442695
        %v2949 = vpow.pop %v2948
        %v2950 = vmul.f32 %v2858, 1.442695
        %v2951 = vpow.pop %v2950
        %v2952 = vmul.f32 %v2859, 1.442695
        %v2953 = vpow.pop %v2952
        %v2954 = vmul.f32 %v2860, 1.442695
        %v2955 = vpow.pop %v2954
        %v2956 = vmul.f32 %v2861, 1.442695
        %v2957 = vpow.pop %v2956
        %v2958 = vmul.f32 %v2862, 1.442695
        %v2959 = vpow.pop %v2958
        %v2960 = vmul.f32 %v2863, 1.442695
        %v2961 = vpow.pop %v2960
        %v2962 = vmul.f32 %v2864, 1.442695
        %v2963 = vpow.pop %v2962
        %v2964 = vmul.f32 %v2865, 1.442695
        %v2965 = vpow.pop %v2964
        %v2966 = vmul.f32 %v2866, 1.442695
        %v2967 = vpow.pop %v2966
        %v2968 = vmul.f32 %v2867, 1.442695
        %v2969 = vpow.pop %v2968
        %v2970 = vmul.f32 %v2868, 1.442695
        %v2971 = vpow.pop %v2970
        %v2972 = vmul.f32 %v2869, 1.442695
        %v2973 = vpow.pop %v2972
        %v2974 = vmul.f32 %v2870, 1.442695
        %v2975 = vpow.pop %v2974
        %v2976 = vmul.f32 %v2871, 1.442695
        %v2977 = vpow.pop %v2976
        %v2978 = vmul.f32 %v2872, 1.442695
        %v2979 = vpow.pop %v2978
        %v2980 = vmul.f32 %v2873, 1.442695
        %v2981 = vpow.pop %v2980
        %v2982 = vmul.f32 %v2874, 1.442695
        %v2983 = vpow.pop %v2982
        %v2984 = vmul.f32 %v2875, 1.442695
        %v2985 = vpow.pop %v2984
        %v2986 = vmul.f32 %v2876, 1.442695
        %v2987 = vpow.pop %v2986
        %v2988 = vmul.f32 %v2877, 1.442695
        %v2989 = vpow.pop %v2988
        %v2990 = vmul.f32 %v2878, 1.442695
        %v2991 = vpow.pop %v2990
        %v2992 = vmul.f32 %v2879, 1.442695
        %v2993 = vpow.pop %v2992
        %v2994 = vmul.f32 %v2880, 1.442695
        %v2995 = vpow.pop %v2994
        %v2996 = vmul.f32 %v2881, 1.442695
        %v2997 = vpow.pop %v2996
        %v2998 = vmul.f32 %v2882, 1.442695
        %v2999 = vpow.pop %v2998
        %v3000 = vmul.f32 %v2883, 1.442695
        %v3001 = vpow.pop %v3000
        %v3002 = vmul.f32 %v2884, 1.442695
        %v3003 = vpow.pop %v3002
        %v3004 = vmul.f32 %v2885, 1.442695
        %v3005 = vpow.pop %v3004
        %v3006 = vmul.f32 %v2886, 1.442695
        %v3007 = vpow.pop %v3006
        %v3008 = vmul.f32 %v2887, 1.442695
        %v3009 = vpow.pop %v3008
        %v3010 = vmul.f32 %v2888, 1.442695
        %v3011 = vpow.pop %v3010
        %v3012 = vmul.f32 %v2889, 1.442695
        %v3013 = vpow.pop %v3012
        %v3014 = vmul.f32 %v2890, 1.442695
        %v3015 = vpow.pop %v3014
        %v3016 = vmul.f32 %v2891, 1.442695
        %v3017 = vpow.pop %v3016
        %v3018 = vmul.f32 %v2892, 1.442695
        %v3019 = vpow.pop %v3018
        %v3020 = vmul.f32 %v2893, 1.442695
        %v3021 = vpow.pop %v3020
        %v3022 = vadd.f32 %v2895, %v2899
        %v3023 = vadd.f32 %v3022, %v2903
        %v3024 = vadd.f32 %v3023, %v2907
        %v3025 = vadd.f32 %v3024, %v2911
        %v3026 = vadd.f32 %v3025, %v2915
        %v3027 = vadd.f32 %v3026, %v2919
        %v3028 = vadd.f32 %v3027, %v2923
        %v3029 = vadd.f32 %v3028, %v2927
        %v3030 = vadd.f32 %v3029, %v2931
        %v3031 = vadd.f32 %v3030, %v2935
        %v3032 = vadd.f32 %v3031, %v2939
        %v3033 = vadd.f32 %v3032, %v2943
        %v3034 = vadd.f32 %v3033, %v2947
        %v3035 = vadd.f32 %v3034, %v2951
        %v3036 = vadd.f32 %v3035, %v2955
        %v3037 = vadd.f32 %v3036, %v2959
        %v3038 = vadd.f32 %v3037, %v2963
        %v3039 = vadd.f32 %v3038, %v2967
        %v3040 = vadd.f32 %v3039, %v2971
        %v3041 = vadd.f32 %v3040, %v2975
        %v3042 = vadd.f32 %v3041, %v2979
        %v3043 = vadd.f32 %v3042, %v2983
        %v3044 = vadd.f32 %v3043, %v2987
        %v3045 = vadd.f32 %v3044, %v2991
        %v3046 = vadd.f32 %v3045, %v2995
        %v3047 = vadd.f32 %v3046, %v2999
        %v3048 = vadd.f32 %v3047, %v3003
        %v3049 = vadd.f32 %v3048, %v3007
        %v3050 = vadd.f32 %v3049, %v3011
        %v3051 = vadd.f32 %v3050, %v3015
        %v3052 = vadd.f32 %v3051, %v3019
        %v3053 = vrot.slane %v3052, 4
        %v3054 = vadd.f32 %v3052, %v3053
        %v3055 = vrot.slane %v3054, 2
        %v3056 = vadd.f32 %v3054, %v3055
        %v3057 = vrot.slane %v3056, 1
        %v3058 = vadd.f32 %v3056, %v3057
        %v3059 = vadd.f32 %v2897, %v2901
        %v3060 = vadd.f32 %v3059, %v2905
        %v3061 = vadd.f32 %v3060, %v2909
        %v3062 = vadd.f32 %v3061, %v2913
        %v3063 = vadd.f32 %v3062, %v2917
        %v3064 = vadd.f32 %v3063, %v2921
        %v3065 = vadd.f32 %v3064, %v2925
        %v3066 = vadd.f32 %v3065, %v2929
        %v3067 = vadd.f32 %v3066, %v2933
        %v3068 = vadd.f32 %v3067, %v2937
        %v3069 = vadd.f32 %v3068, %v2941
        %v3070 = vadd.f32 %v3069, %v2945
        %v3071 = vadd.f32 %v3070, %v2949
        %v3072 = vadd.f32 %v3071, %v2953
        %v3073 = vadd.f32 %v3072, %v2957
        %v3074 = vadd.f32 %v3073, %v2961
        %v3075 = vadd.f32 %v3074, %v2965
        %v3076 = vadd.f32 %v3075, %v2969
        %v3077 = vadd.f32 %v3076, %v2973
        %v3078 = vadd.f32 %v3077, %v2977
        %v3079 = vadd.f32 %v3078, %v2981
        %v3080 = vadd.f32 %v3079, %v2985
        %v3081 = vadd.f32 %v3080, %v2989
        %v3082 = vadd.f32 %v3081, %v2993
        %v3083 = vadd.f32 %v3082, %v2997
        %v3084 = vadd.f32 %v3083, %v3001
        %v3085 = vadd.f32 %v3084, %v3005
        %v3086 = vadd.f32 %v3085, %v3009
        %v3087 = vadd.f32 %v3086, %v3013
        %v3088 = vadd.f32 %v3087, %v3017
        %v3089 = vadd.f32 %v3088, %v3021
        %v3090 = vrot.slane %v3089, 4
        %v3091 = vadd.f32 %v3089, %v3090
        %v3092 = vrot.slane %v3091, 2
        %v3093 = vadd.f32 %v3091, %v3092
        %v3094 = vrot.slane %v3093, 1
        %v3095 = vadd.f32 %v3093, %v3094
        %v3096 = vpack.c.bf16 %v711, %v705
        %v3097 = vpack.c.bf16 %v713, %v707
        %v3098 = vpack.c.bf16 %v723, %v717
        %v3099 = vpack.c.bf16 %v725, %v719
        %v3100 = vpack.c.bf16 %v2899, %v2895
        %v3101 = vpack.c.bf16 %v2901, %v2897
        %v3102 = vpack.c.bf16 %v2907, %v2903
        %v3103 = vpack.c.bf16 %v2909, %v2905
        %v3104 = vpack.c.bf16 %v2915, %v2911
        %v3105 = vpack.c.bf16 %v2917, %v2913
        %v3106 = vpack.c.bf16 %v2923, %v2919
        %v3107 = vpack.c.bf16 %v2925, %v2921
        %v3108 = vpack.c.bf16 %v2931, %v2927
        %v3109 = vpack.c.bf16 %v2933, %v2929
        %v3110 = vpack.c.bf16 %v2939, %v2935
        %v3111 = vpack.c.bf16 %v2941, %v2937
        %v3112 = vpack.c.bf16 %v2947, %v2943
        %v3113 = vpack.c.bf16 %v2949, %v2945
        %v3114 = vpack.c.bf16 %v2955, %v2951
        %v3115 = vpack.c.bf16 %v2957, %v2953
        %v3116 = vpack.c.bf16 %v2963, %v2959
        %v3117 = vpack.c.bf16 %v2965, %v2961
        %v3118 = vpack.c.bf16 %v2971, %v2967
        %v3119 = vpack.c.bf16 %v2973, %v2969
        %v3120 = vpack.c.bf16 %v2979, %v2975
        %v3121 = vpack.c.bf16 %v2981, %v2977
        %v3122 = vpack.c.bf16 %v2987, %v2983
        %v3123 = vpack.c.bf16 %v2989, %v2985
        %v3124 = vpack.c.bf16 %v2995, %v2991
        %v3125 = vpack.c.bf16 %v2997, %v2993
        %v3126 = vpack.c.bf16 %v3003, %v2999
        %v3127 = vpack.c.bf16 %v3005, %v3001
        %v3128 = vpack.c.bf16 %v3011, %v3007
        %v3129 = vpack.c.bf16 %v3013, %v3009
        %v3130 = vpack.c.bf16 %v3019, %v3015
        %v3131 = vpack.c.bf16 %v3021, %v3017
        %3132 = vmatprep.subr.bf16.mxu0 %v3101
        %3133 = vmatpush1.bf16.msra.mxu0 %v3100
        %3134 = vmatprep.subr.bf16.mxu0 %v3103
        %3135 = vmatpush1.bf16.msra.mxu0 %v3102
        %3136 = vmatprep.subr.bf16.mxu0 %v3105
        %3137 = vmatpush1.bf16.msra.mxu0 %v3104
        %3138 = vmatprep.subr.bf16.mxu0 %v3107
        %3139 = vmatpush1.bf16.msra.mxu0 %v3106
        %3140 = vmatprep.subr.bf16.mxu0 %v3109
        %3141 = vmatpush1.bf16.msra.mxu0 %v3108
        %3142 = vmatprep.subr.bf16.mxu0 %v3111
        %3143 = vmatpush1.bf16.msra.mxu0 %v3110
        %3144 = vmatprep.subr.bf16.mxu0 %v3113
        %3145 = vmatpush1.bf16.msra.mxu0 %v3112
        %3146 = vmatprep.subr.bf16.mxu0 %v3115
        %3147 = vmatpush1.bf16.msra.mxu0 %v3114
        %3148 = vmatprep.subr.bf16.mxu0 %v3117
        %3149 = vmatpush1.bf16.msra.mxu0 %v3116
        %3150 = vmatprep.subr.bf16.mxu0 %v3119
        %3151 = vmatpush1.bf16.msra.mxu0 %v3118
        %3152 = vmatprep.subr.bf16.mxu0 %v3121
        %3153 = vmatpush1.bf16.msra.mxu0 %v3120
        %3154 = vmatprep.subr.bf16.mxu0 %v3123
        %3155 = vmatpush1.bf16.msra.mxu0 %v3122
        %3156 = vmatprep.subr.bf16.mxu0 %v3125
        %3157 = vmatpush1.bf16.msra.mxu0 %v3124
        %3158 = vmatprep.subr.bf16.mxu0 %v3127
        %3159 = vmatpush1.bf16.msra.mxu0 %v3126
        %3160 = vmatprep.subr.bf16.mxu0 %v3129
        %3161 = vmatpush1.bf16.msra.mxu0 %v3128
        %3162 = vmatprep.subr.bf16.mxu0 %v3131
        %3163 = vmatpush1.bf16.msra.mxu0 %v3130
        %3164 = vmatprep.mubr.bf16.mxu0 %v3097
        %3165 = vmatmul.mubr.bf16.gmra.mrb[0].mxu0 %v3096
        %v3166 = vpop.f32.mrb[0].mxu0
        %v3167 = vadd.f32 0.0, %v3166
        %v3168 = vpop.f32.mrb[0].mxu0
        %v3169 = vadd.f32 0.0, %v3168
        %v3170 = vpop.f32.mrb[0].mxu0
        %v3171 = vadd.f32 0.0, %v3170
        %v3172 = vpop.f32.mrb[0].mxu0
        %v3173 = vadd.f32 0.0, %v3172
        %3174 = vmatprep.mubr.bf16.mxu0 %v3099
        %3175 = vmatmul.mubr.bf16.gmra.mrb[0].mxu0 %v3098
        %v3176 = vpop.f32.mrb[0].mxu0
        %v3177 = vadd.f32 0.0, %v3176
        %v3178 = vpop.f32.mrb[0].mxu0
        %v3179 = vadd.f32 0.0, %v3178
        %v3180 = vpop.f32.mrb[0].mxu0
        %v3181 = vadd.f32 0.0, %v3180
        %v3182 = vpop.f32.mrb[0].mxu0
        %v3183 = vadd.f32 0.0, %v3182
        %3184 = vdwg.mxu0
        %v3185 = vrcp.pop %v3058
        %v3186 = vrcp.pop %v3095
        %v3187 = vmul.f32 %v3167, %v3185
        %v3188 = vmul.f32 %v3169, %v3186
        %v3189 = vmul.f32 %v3171, %v3185
        %v3190 = vmul.f32 %v3173, %v3186
        %v3191 = vmul.f32 %v3177, %v3185
        %v3192 = vmul.f32 %v3179, %v3186
        %v3193 = vmul.f32 %v3181, %v3185
        %v3194 = vmul.f32 %v3183, %v3186
        %s3195 = scalar_lea.vmem %s2, 8
        %v3196 = vld [vmem:[%s3195] sm:$0xf]
        %v3198 = vsel %vm835, %v3196, 0
        %3200 = vmatprep.subr.mxu0 %v3188
        %3201 = vmatpush1.msra.mxu0 %v3187
        %3202 = vmatprep.subr.mxu0 %v3190
        %3203 = vmatpush1.msra.mxu0 %v3189
        %3204 = vmatprep.subr.mxu0 %v3192
        %3205 = vmatpush1.msra.mxu0 %v3191
        %3206 = vmatprep.subr.mxu0 %v3194
        %3207 = vmatpush1.msra.mxu0 %v3193
        %3208 = vmatprep.subr.mxu0 0.0
        %3209 = vmatpush1.msra.mxu0 0.0
        %3210 = vmatprep.subr.mxu0 0.0
        %3211 = vmatpush1.msra.mxu0 0.0
        %3212 = vmatprep.subr.mxu0 0.0
        %3213 = vmatpush1.msra.mxu0 0.0
        %3214 = vmatprep.subr.mxu0 0.0
        %3215 = vmatpush1.msra.mxu0 0.0
        %3216 = vmatprep.subr.mxu0 0.0
        %3217 = vmatpush1.msra.mxu0 0.0
        %3218 = vmatprep.subr.mxu0 0.0
        %3219 = vmatpush1.msra.mxu0 0.0
        %3220 = vmatprep.subr.mxu0 0.0
        %3221 = vmatpush1.msra.mxu0 0.0
        %3222 = vmatprep.subr.mxu0 0.0
        %3223 = vmatpush1.msra.mxu0 0.0
        %3224 = vmatprep.subr.mxu0 0.0
        %3225 = vmatpush1.msra.mxu0 0.0
        %3226 = vmatprep.subr.mxu0 0.0
        %3227 = vmatpush1.msra.mxu0 0.0
        %3228 = vmatprep.subr.mxu0 0.0
        %3229 = vmatpush1.msra.mxu0 0.0
        %3230 = vmatprep.subr.mxu0 0.0
        %3231 = vmatpush1.msra.mxu0 0.0
        %3232 = vmatprep.subr.mxu0 0.0
        %3233 = vmatpush1.msra.mxu0 0.0
        %3234 = vmatprep.subr.mxu0 0.0
        %3235 = vmatpush1.msra.mxu0 0.0
        %3236 = vmatprep.subr.mxu0 0.0
        %3237 = vmatpush1.msra.mxu0 0.0
        %3238 = vmatprep.subr.mxu0 0.0
        %3239 = vmatpush1.msra.mxu0 0.0
        %3240 = vmatprep.subr.mxu0 0.0
        %3241 = vmatpush1.msra.mxu0 0.0
        %3242 = vmatprep.subr.mxu0 0.0
        %3243 = vmatpush1.msra.mxu0 0.0
        %3244 = vmatprep.subr.mxu0 0.0
        %3245 = vmatpush1.msra.mxu0 0.0
        %3246 = vmatprep.subr.mxu0 0.0
        %3247 = vmatpush1.msra.mxu0 0.0
        %3248 = vmatprep.subr.mxu0 0.0
        %3249 = vmatpush1.msra.mxu0 0.0
        %3250 = vmatprep.subr.mxu0 0.0
        %3251 = vmatpush1.msra.mxu0 0.0
        %3252 = vmatprep.subr.mxu0 0.0
        %3253 = vmatpush1.msra.mxu0 0.0
        %3254 = vmatprep.subr.mxu0 0.0
        %3255 = vmatpush1.msra.mxu0 0.0
        %3256 = vmatprep.subr.mxu0 0.0
        %3257 = vmatpush1.msra.mxu0 0.0
        %3258 = vmatprep.subr.mxu0 0.0
        %3259 = vmatpush1.msra.mxu0 0.0
        %3260 = vmatprep.subr.mxu0 0.0
        %3261 = vmatpush1.msra.mxu0 0.0
        %3262 = vmatprep.subr.mxu0 0.0
        %3263 = vmatpush1.msra.mxu0 0.0
        %3264 = vmatprep.mubr.f32.mxu0 0.0
        %3265 = vmatmul.mubr.f32.gmra.mrb[0].mxu0 %v3198
        %v3266 = vpop.f32.mrb[0].mxu0
        %v3267 = vadd.f32 0.0, %v3266
        %v3268 = vpop.f32.mrb[0].mxu0
        %v3269 = vadd.f32 0.0, %v3268
        %3270 = vdwg.mxu0
        %v3271 = vadd.f32 %v2427, %v3267
        %v3272 = vadd.f32 %v2429, %v3269
        %3273 = vxpose.xlu0.b32.start [1/16] %v633, 128
        %3274 = vxpose.xlu0.b32.cont [2/16] %v639, 128
        %3275 = vxpose.xlu0.b32.cont [3/16] %v645, 128
        %3276 = vxpose.xlu0.b32.cont [4/16] %v651, 128
        %3277 = vxpose.xlu0.b32.cont [5/16] 0.0, 128
        %3278 = vxpose.xlu0.b32.cont [6/16] 0.0, 128
        %3279 = vxpose.xlu0.b32.cont [7/16] 0.0, 128
        %3280 = vxpose.xlu0.b32.cont [8/16] 0.0, 128
        %3281 = vxpose.xlu0.b32.cont [9/16] 0.0, 128
        %3282 = vxpose.xlu0.b32.cont [10/16] 0.0, 128
        %3283 = vxpose.xlu0.b32.cont [11/16] 0.0, 128
        %3284 = vxpose.xlu0.b32.cont [12/16] 0.0, 128
        %3285 = vxpose.xlu0.b32.cont [13/16] 0.0, 128
        %3286 = vxpose.xlu0.b32.cont [14/16] 0.0, 128
        %3287 = vxpose.xlu0.b32.cont [15/16] 0.0, 128
        %3288 = vxpose.xlu0.b32.end [16/16] 0.0, 128
        %v3289 = vpop.trf.xlu0
        %v3290 = vpop.trf.xlu0
        %v3291 = vpop.trf.xlu0
        %v3292 = vpop.trf.xlu0
        %v3293 = vpop.trf.xlu0
        %v3294 = vpop.trf.xlu0
        %v3295 = vpop.trf.xlu0
        %v3296 = vpop.trf.xlu0
        %v3297 = vpop.trf.xlu0
        %v3298 = vpop.trf.xlu0
        %v3299 = vpop.trf.xlu0
        %v3300 = vpop.trf.xlu0
        %v3301 = vpop.trf.xlu0
        %v3302 = vpop.trf.xlu0
        %v3303 = vpop.trf.xlu0
        %v3304 = vpop.trf.xlu0
        %3305 = vxpose.xlu0.b32.start [1/16] %v635, 128
        %3306 = vxpose.xlu0.b32.cont [2/16] %v641, 128
        %3307 = vxpose.xlu0.b32.cont [3/16] %v647, 128
        %3308 = vxpose.xlu0.b32.cont [4/16] %v653, 128
        %3309 = vxpose.xlu0.b32.cont [5/16] 0.0, 128
        %3310 = vxpose.xlu0.b32.cont [6/16] 0.0, 128
        %3311 = vxpose.xlu0.b32.cont [7/16] 0.0, 128
        %3312 = vxpose.xlu0.b32.cont [8/16] 0.0, 128
        %3313 = vxpose.xlu0.b32.cont [9/16] 0.0, 128
        %3314 = vxpose.xlu0.b32.cont [10/16] 0.0, 128
        %3315 = vxpose.xlu0.b32.cont [11/16] 0.0, 128
        %3316 = vxpose.xlu0.b32.cont [12/16] 0.0, 128
        %3317 = vxpose.xlu0.b32.cont [13/16] 0.0, 128
        %3318 = vxpose.xlu0.b32.cont [14/16] 0.0, 128
        %3319 = vxpose.xlu0.b32.cont [15/16] 0.0, 128
        %3320 = vxpose.xlu0.b32.end [16/16] 0.0, 128
        %v3321 = vpop.trf.xlu0
        %v3322 = vpop.trf.xlu0
        %v3323 = vpop.trf.xlu0
        %v3324 = vpop.trf.xlu0
        %v3325 = vpop.trf.xlu0
        %v3326 = vpop.trf.xlu0
        %v3327 = vpop.trf.xlu0
        %v3328 = vpop.trf.xlu0
        %v3329 = vpop.trf.xlu0
        %v3330 = vpop.trf.xlu0
        %v3331 = vpop.trf.xlu0
        %v3332 = vpop.trf.xlu0
        %v3333 = vpop.trf.xlu0
        %v3334 = vpop.trf.xlu0
        %v3335 = vpop.trf.xlu0
        %v3336 = vpop.trf.xlu0
        %v3337 = vpack.c.bf16 %v3290, %v3289
        %v3338 = vpack.c.bf16 %v3292, %v3291
        %v3339 = vpack.c.bf16 %v3294, %v3293
        %v3340 = vpack.c.bf16 %v3296, %v3295
        %v3341 = vpack.c.bf16 %v3298, %v3297
        %v3342 = vpack.c.bf16 %v3300, %v3299
        %v3343 = vpack.c.bf16 %v3302, %v3301
        %v3344 = vpack.c.bf16 %v3304, %v3303
        %v3345 = vpack.c.bf16 %v3322, %v3321
        %v3346 = vpack.c.bf16 %v3324, %v3323
        %v3347 = vpack.c.bf16 %v3326, %v3325
        %v3348 = vpack.c.bf16 %v3328, %v3327
        %v3349 = vpack.c.bf16 %v3330, %v3329
        %v3350 = vpack.c.bf16 %v3332, %v3331
        %v3351 = vpack.c.bf16 %v3334, %v3333
        %v3352 = vpack.c.bf16 %v3336, %v3335
        %v3353 = vpack.c.bf16 %v543, %v537
        %v3354 = vpack.c.bf16 %v545, %v539
        %v3355 = vpack.c.bf16 %v555, %v549
        %v3356 = vpack.c.bf16 %v557, %v551
        %v3358 = vsel %vm835, %v3337, 0
        %v3361 = vsel %vm835, %v3338, 0
        %v3364 = vsel %vm835, %v3339, 0
        %v3367 = vsel %vm835, %v3340, 0
        %v3370 = vsel %vm835, %v3341, 0
        %v3373 = vsel %vm835, %v3342, 0
        %v3376 = vsel %vm835, %v3343, 0
        %v3379 = vsel %vm835, %v3344, 0
        %v3382 = vsel %vm835, %v3345, 0
        %v3385 = vsel %vm835, %v3346, 0
        %v3388 = vsel %vm835, %v3347, 0
        %v3391 = vsel %vm835, %v3348, 0
        %v3394 = vsel %vm835, %v3349, 0
        %v3397 = vsel %vm835, %v3350, 0
        %v3400 = vsel %vm835, %v3351, 0
        %v3403 = vsel %vm835, %v3352, 0
        %3405 = vmatprep.subr.bf16.mxu0 %v3354
        %3406 = vmatpush1.bf16.msra.mxu0 %v3353
        %3407 = vmatprep.subr.bf16.mxu0 %v3356
        %3408 = vmatpush1.bf16.msra.mxu0 %v3355
        %3409 = vmatprep.subr.bf16.mxu0 0
        %3410 = vmatpush1.bf16.msra.mxu0 0
        %3411 = vmatprep.subr.bf16.mxu0 0
        %3412 = vmatpush1.bf16.msra.mxu0 0
        %3413 = vmatprep.subr.bf16.mxu0 0
        %3414 = vmatpush1.bf16.msra.mxu0 0
        %3415 = vmatprep.subr.bf16.mxu0 0
        %3416 = vmatpush1.bf16.msra.mxu0 0
        %3417 = vmatprep.subr.bf16.mxu0 0
        %3418 = vmatpush1.bf16.msra.mxu0 0
        %3419 = vmatprep.subr.bf16.mxu0 0
        %3420 = vmatpush1.bf16.msra.mxu0 0
        %3421 = vmatprep.subr.bf16.mxu0 0
        %3422 = vmatpush1.bf16.msra.mxu0 0
        %3423 = vmatprep.subr.bf16.mxu0 0
        %3424 = vmatpush1.bf16.msra.mxu0 0
        %3425 = vmatprep.subr.bf16.mxu0 0
        %3426 = vmatpush1.bf16.msra.mxu0 0
        %3427 = vmatprep.subr.bf16.mxu0 0
        %3428 = vmatpush1.bf16.msra.mxu0 0
        %3429 = vmatprep.subr.bf16.mxu0 0
        %3430 = vmatpush1.bf16.msra.mxu0 0
        %3431 = vmatprep.subr.bf16.mxu0 0
        %3432 = vmatpush1.bf16.msra.mxu0 0
        %3433 = vmatprep.subr.bf16.mxu0 0
        %3434 = vmatpush1.bf16.msra.mxu0 0
        %3435 = vmatprep.subr.bf16.mxu0 0
        %3436 = vmatpush1.bf16.msra.mxu0 0
        %3437 = vmatprep.mubr.bf16.mxu0 0
        %3438 = vmatmul.mubr.bf16.gmra.mrb[0].mxu0 %v3358
        %v3439 = vpop.f32.mrb[0].mxu0
        %v3440 = vadd.f32 0.0, %v3439
        %v3441 = vpop.f32.mrb[0].mxu0
        %v3442 = vadd.f32 0.0, %v3441
        %v3443 = vpop.f32.mrb[0].mxu0
        %v3444 = vadd.f32 0.0, %v3443
        %v3445 = vpop.f32.mrb[0].mxu0
        %v3446 = vadd.f32 0.0, %v3445
        %3447 = vmatprep.mubr.bf16.mxu0 0
        %3448 = vmatmul.mubr.bf16.gmra.mrb[0].mxu0 %v3361
        %v3449 = vpop.f32.mrb[0].mxu0
        %v3450 = vadd.f32 0.0, %v3449
        %v3451 = vpop.f32.mrb[0].mxu0
        %v3452 = vadd.f32 0.0, %v3451
        %v3453 = vpop.f32.mrb[0].mxu0
        %v3454 = vadd.f32 0.0, %v3453
        %v3455 = vpop.f32.mrb[0].mxu0
        %v3456 = vadd.f32 0.0, %v3455
        %3457 = vmatprep.mubr.bf16.mxu0 0
        %3458 = vmatmul.mubr.bf16.gmra.mrb[0].mxu0 %v3364
        %v3459 = vpop.f32.mrb[0].mxu0
        %v3460 = vadd.f32 0.0, %v3459
        %v3461 = vpop.f32.mrb[0].mxu0
        %v3462 = vadd.f32 0.0, %v3461
        %v3463 = vpop.f32.mrb[0].mxu0
        %v3464 = vadd.f32 0.0, %v3463
        %v3465 = vpop.f32.mrb[0].mxu0
        %v3466 = vadd.f32 0.0, %v3465
        %3467 = vmatprep.mubr.bf16.mxu0 0
        %3468 = vmatmul.mubr.bf16.gmra.mrb[0].mxu0 %v3367
        %v3469 = vpop.f32.mrb[0].mxu0
        %v3470 = vadd.f32 0.0, %v3469
        %v3471 = vpop.f32.mrb[0].mxu0
        %v3472 = vadd.f32 0.0, %v3471
        %v3473 = vpop.f32.mrb[0].mxu0
        %v3474 = vadd.f32 0.0, %v3473
        %v3475 = vpop.f32.mrb[0].mxu0
        %v3476 = vadd.f32 0.0, %v3475
        %3477 = vmatprep.mubr.bf16.mxu0 0
        %3478 = vmatmul.mubr.bf16.gmra.mrb[0].mxu0 %v3370
        %v3479 = vpop.f32.mrb[0].mxu0
        %v3480 = vadd.f32 0.0, %v3479
        %v3481 = vpop.f32.mrb[0].mxu0
        %v3482 = vadd.f32 0.0, %v3481
        %v3483 = vpop.f32.mrb[0].mxu0
        %v3484 = vadd.f32 0.0, %v3483
        %v3485 = vpop.f32.mrb[0].mxu0
        %v3486 = vadd.f32 0.0, %v3485
        %3487 = vmatprep.mubr.bf16.mxu0 0
        %3488 = vmatmul.mubr.bf16.gmra.mrb[0].mxu0 %v3373
        %v3489 = vpop.f32.mrb[0].mxu0
        %v3490 = vadd.f32 0.0, %v3489
        %v3491 = vpop.f32.mrb[0].mxu0
        %v3492 = vadd.f32 0.0, %v3491
        %v3493 = vpop.f32.mrb[0].mxu0
        %v3494 = vadd.f32 0.0, %v3493
        %v3495 = vpop.f32.mrb[0].mxu0
        %v3496 = vadd.f32 0.0, %v3495
        %3497 = vmatprep.mubr.bf16.mxu0 0
        %3498 = vmatmul.mubr.bf16.gmra.mrb[0].mxu0 %v3376
        %v3499 = vpop.f32.mrb[0].mxu0
        %v3500 = vadd.f32 0.0, %v3499
        %v3501 = vpop.f32.mrb[0].mxu0
        %v3502 = vadd.f32 0.0, %v3501
        %v3503 = vpop.f32.mrb[0].mxu0
        %v3504 = vadd.f32 0.0, %v3503
        %v3505 = vpop.f32.mrb[0].mxu0
        %v3506 = vadd.f32 0.0, %v3505
        %3507 = vmatprep.mubr.bf16.mxu0 0
        %3508 = vmatmul.mubr.bf16.gmra.mrb[0].mxu0 %v3379
        %v3509 = vpop.f32.mrb[0].mxu0
        %v3510 = vadd.f32 0.0, %v3509
        %v3511 = vpop.f32.mrb[0].mxu0
        %v3512 = vadd.f32 0.0, %v3511
        %v3513 = vpop.f32.mrb[0].mxu0
        %v3514 = vadd.f32 0.0, %v3513
        %v3515 = vpop.f32.mrb[0].mxu0
        %v3516 = vadd.f32 0.0, %v3515
        %3517 = vmatprep.mubr.bf16.mxu0 0
        %3518 = vmatmul.mubr.bf16.gmra.mrb[0].mxu0 %v3382
        %v3519 = vpop.f32.mrb[0].mxu0
        %v3520 = vadd.f32 0.0, %v3519
        %v3521 = vpop.f32.mrb[0].mxu0
        %v3522 = vadd.f32 0.0, %v3521
        %v3523 = vpop.f32.mrb[0].mxu0
        %v3524 = vadd.f32 0.0, %v3523
        %v3525 = vpop.f32.mrb[0].mxu0
        %v3526 = vadd.f32 0.0, %v3525
        %3527 = vmatprep.mubr.bf16.mxu0 0
        %3528 = vmatmul.mubr.bf16.gmra.mrb[0].mxu0 %v3385
        %v3529 = vpop.f32.mrb[0].mxu0
        %v3530 = vadd.f32 0.0, %v3529
        %v3531 = vpop.f32.mrb[0].mxu0
        %v3532 = vadd.f32 0.0, %v3531
        %v3533 = vpop.f32.mrb[0].mxu0
        %v3534 = vadd.f32 0.0, %v3533
        %v3535 = vpop.f32.mrb[0].mxu0
        %v3536 = vadd.f32 0.0, %v3535
        %3537 = vmatprep.mubr.bf16.mxu0 0
        %3538 = vmatmul.mubr.bf16.gmra.mrb[0].mxu0 %v3388
        %v3539 = vpop.f32.mrb[0].mxu0
        %v3540 = vadd.f32 0.0, %v3539
        %v3541 = vpop.f32.mrb[0].mxu0
        %v3542 = vadd.f32 0.0, %v3541
        %v3543 = vpop.f32.mrb[0].mxu0
        %v3544 = vadd.f32 0.0, %v3543
        %v3545 = vpop.f32.mrb[0].mxu0
        %v3546 = vadd.f32 0.0, %v3545
        %3547 = vmatprep.mubr.bf16.mxu0 0
        %3548 = vmatmul.mubr.bf16.gmra.mrb[0].mxu0 %v3391
        %v3549 = vpop.f32.mrb[0].mxu0
        %v3550 = vadd.f32 0.0, %v3549
        %v3551 = vpop.f32.mrb[0].mxu0
        %v3552 = vadd.f32 0.0, %v3551
        %v3553 = vpop.f32.mrb[0].mxu0
        %v3554 = vadd.f32 0.0, %v3553
        %v3555 = vpop.f32.mrb[0].mxu0
        %v3556 = vadd.f32 0.0, %v3555
        %3557 = vmatprep.mubr.bf16.mxu0 0
        %3558 = vmatmul.mubr.bf16.gmra.mrb[0].mxu0 %v3394
        %v3559 = vpop.f32.mrb[0].mxu0
        %v3560 = vadd.f32 0.0, %v3559
        %v3561 = vpop.f32.mrb[0].mxu0
        %v3562 = vadd.f32 0.0, %v3561
        %v3563 = vpop.f32.mrb[0].mxu0
        %v3564 = vadd.f32 0.0, %v3563
        %v3565 = vpop.f32.mrb[0].mxu0
        %v3566 = vadd.f32 0.0, %v3565
        %3567 = vmatprep.mubr.bf16.mxu0 0
        %3568 = vmatmul.mubr.bf16.gmra.mrb[0].mxu0 %v3397
        %v3569 = vpop.f32.mrb[0].mxu0
        %v3570 = vadd.f32 0.0, %v3569
        %v3571 = vpop.f32.mrb[0].mxu0
        %v3572 = vadd.f32 0.0, %v3571
        %v3573 = vpop.f32.mrb[0].mxu0
        %v3574 = vadd.f32 0.0, %v3573
        %v3575 = vpop.f32.mrb[0].mxu0
        %v3576 = vadd.f32 0.0, %v3575
        %3577 = vmatprep.mubr.bf16.mxu0 0
        %3578 = vmatmul.mubr.bf16.gmra.mrb[0].mxu0 %v3400
        %v3579 = vpop.f32.mrb[0].mxu0
        %v3580 = vadd.f32 0.0, %v3579
        %v3581 = vpop.f32.mrb[0].mxu0
        %v3582 = vadd.f32 0.0, %v3581
        %v3583 = vpop.f32.mrb[0].mxu0
        %v3584 = vadd.f32 0.0, %v3583
        %v3585 = vpop.f32.mrb[0].mxu0
        %v3586 = vadd.f32 0.0, %v3585
        %3587 = vmatprep.mubr.bf16.mxu0 0
        %3588 = vmatmul.mubr.bf16.gmra.mrb[0].mxu0 %v3403
        %v3589 = vpop.f32.mrb[0].mxu0
        %v3590 = vadd.f32 0.0, %v3589
        %v3591 = vpop.f32.mrb[0].mxu0
        %v3592 = vadd.f32 0.0, %v3591
        %v3593 = vpop.f32.mrb[0].mxu0
        %v3594 = vadd.f32 0.0, %v3593
        %v3595 = vpop.f32.mrb[0].mxu0
        %v3596 = vadd.f32 0.0, %v3595
        %3597 = vdwg.mxu0
        %v3598 = vmax.f32 %v3440, %v3450
        %v3599 = vmax.f32 %v3444, %v3454
        %v3600 = vmax.f32 %v3598, %v3460
        %v3601 = vmax.f32 %v3599, %v3464
        %v3602 = vmax.f32 %v3600, %v3470
        %v3603 = vmax.f32 %v3601, %v3474
        %v3604 = vmax.f32 %v3602, %v3480
        %v3605 = vmax.f32 %v3603, %v3484
        %v3606 = vmax.f32 %v3604, %v3490
        %v3607 = vmax.f32 %v3605, %v3494
        %v3608 = vmax.f32 %v3606, %v3500
        %v3609 = vmax.f32 %v3607, %v3504
        %v3610 = vmax.f32 %v3608, %v3510
        %v3611 = vmax.f32 %v3609, %v3514
        %v3612 = vmax.f32 %v3610, %v3520
        %v3613 = vmax.f32 %v3611, %v3524
        %v3614 = vmax.f32 %v3612, %v3530
        %v3615 = vmax.f32 %v3613, %v3534
        %v3616 = vmax.f32 %v3614, %v3540
        %v3617 = vmax.f32 %v3615, %v3544
        %v3618 = vmax.f32 %v3616, %v3550
        %v3619 = vmax.f32 %v3617, %v3554
        %v3620 = vmax.f32 %v3618, %v3560
        %v3621 = vmax.f32 %v3619, %v3564
        %v3622 = vmax.f32 %v3620, %v3570
        %v3623 = vmax.f32 %v3621, %v3574
        %v3624 = vmax.f32 %v3622, %v3580
        %v3625 = vmax.f32 %v3623, %v3584
        %v3626 = vmax.f32 %v3624, %v3590
        %v3627 = vmax.f32 %v3625, %v3594
        %v3628 = vmax.f32 %v3626, %v3627
        %v3629 = vrot.slane %v3628, 4
        %v3630 = vmax.f32 %v3628, %v3629
        %v3631 = vrot.slane %v3630, 2
        %v3632 = vmax.f32 %v3630, %v3631
        %v3633 = vrot.slane %v3632, 1
        %v3634 = vmax.f32 %v3632, %v3633
        %v3635 = vmax.f32 %v3442, %v3452
        %v3636 = vmax.f32 %v3446, %v3456
        %v3637 = vmax.f32 %v3635, %v3462
        %v3638 = vmax.f32 %v3636, %v3466
        %v3639 = vmax.f32 %v3637, %v3472
        %v3640 = vmax.f32 %v3638, %v3476
        %v3641 = vmax.f32 %v3639, %v3482
        %v3642 = vmax.f32 %v3640, %v3486
        %v3643 = vmax.f32 %v3641, %v3492
        %v3644 = vmax.f32 %v3642, %v3496
        %v3645 = vmax.f32 %v3643, %v3502
        %v3646 = vmax.f32 %v3644, %v3506
        %v3647 = vmax.f32 %v3645, %v3512
        %v3648 = vmax.f32 %v3646, %v3516
        %v3649 = vmax.f32 %v3647, %v3522
        %v3650 = vmax.f32 %v3648, %v3526
        %v3651 = vmax.f32 %v3649, %v3532
        %v3652 = vmax.f32 %v3650, %v3536
        %v3653 = vmax.f32 %v3651, %v3542
        %v3654 = vmax.f32 %v3652, %v3546
        %v3655 = vmax.f32 %v3653, %v3552
        %v3656 = vmax.f32 %v3654, %v3556
        %v3657 = vmax.f32 %v3655, %v3562
        %v3658 = vmax.f32 %v3656, %v3566
        %v3659 = vmax.f32 %v3657, %v3572
        %v3660 = vmax.f32 %v3658, %v3576
        %v3661 = vmax.f32 %v3659, %v3582
        %v3662 = vmax.f32 %v3660, %v3586
        %v3663 = vmax.f32 %v3661, %v3592
        %v3664 = vmax.f32 %v3662, %v3596
        %v3665 = vmax.f32 %v3663, %v3664
        %v3666 = vrot.slane %v3665, 4
        %v3667 = vmax.f32 %v3665, %v3666
        %v3668 = vrot.slane %v3667, 2
        %v3669 = vmax.f32 %v3667, %v3668
        %v3670 = vrot.slane %v3669, 1
        %v3671 = vmax.f32 %v3669, %v3670
        %v3672 = vsub.f32 %v3440, %v3634
        %v3673 = vsub.f32 %v3442, %v3671
        %v3674 = vsub.f32 %v3444, %v3634
        %v3675 = vsub.f32 %v3446, %v3671
        %v3676 = vsub.f32 %v3450, %v3634
        %v3677 = vsub.f32 %v3452, %v3671
        %v3678 = vsub.f32 %v3454, %v3634
        %v3679 = vsub.f32 %v3456, %v3671
        %v3680 = vsub.f32 %v3460, %v3634
        %v3681 = vsub.f32 %v3462, %v3671
        %v3682 = vsub.f32 %v3464, %v3634
        %v3683 = vsub.f32 %v3466, %v3671
        %v3684 = vsub.f32 %v3470, %v3634
        %v3685 = vsub.f32 %v3472, %v3671
        %v3686 = vsub.f32 %v3474, %v3634
        %v3687 = vsub.f32 %v3476, %v3671
        %v3688 = vsub.f32 %v3480, %v3634
        %v3689 = vsub.f32 %v3482, %v3671
        %v3690 = vsub.f32 %v3484, %v3634
        %v3691 = vsub.f32 %v3486, %v3671
        %v3692 = vsub.f32 %v3490, %v3634
        %v3693 = vsub.f32 %v3492, %v3671
        %v3694 = vsub.f32 %v3494, %v3634
        %v3695 = vsub.f32 %v3496, %v3671
        %v3696 = vsub.f32 %v3500, %v3634
        %v3697 = vsub.f32 %v3502, %v3671
        %v3698 = vsub.f32 %v3504, %v3634
        %v3699 = vsub.f32 %v3506, %v3671
        %v3700 = vsub.f32 %v3510, %v3634
        %v3701 = vsub.f32 %v3512, %v3671
        %v3702 = vsub.f32 %v3514, %v3634
        %v3703 = vsub.f32 %v3516, %v3671
        %v3704 = vsub.f32 %v3520, %v3634
        %v3705 = vsub.f32 %v3522, %v3671
        %v3706 = vsub.f32 %v3524, %v3634
        %v3707 = vsub.f32 %v3526, %v3671
        %v3708 = vsub.f32 %v3530, %v3634
        %v3709 = vsub.f32 %v3532, %v3671
        %v3710 = vsub.f32 %v3534, %v3634
        %v3711 = vsub.f32 %v3536, %v3671
        %v3712 = vsub.f32 %v3540, %v3634
        %v3713 = vsub.f32 %v3542, %v3671
        %v3714 = vsub.f32 %v3544, %v3634
        %v3715 = vsub.f32 %v3546, %v3671
        %v3716 = vsub.f32 %v3550, %v3634
        %v3717 = vsub.f32 %v3552, %v3671
        %v3718 = vsub.f32 %v3554, %v3634
        %v3719 = vsub.f32 %v3556, %v3671
        %v3720 = vsub.f32 %v3560, %v3634
        %v3721 = vsub.f32 %v3562, %v3671
        %v3722 = vsub.f32 %v3564, %v3634
        %v3723 = vsub.f32 %v3566, %v3671
        %v3724 = vsub.f32 %v3570, %v3634
        %v3725 = vsub.f32 %v3572, %v3671
        %v3726 = vsub.f32 %v3574, %v3634
        %v3727 = vsub.f32 %v3576, %v3671
        %v3728 = vsub.f32 %v3580, %v3634
        %v3729 = vsub.f32 %v3582, %v3671
        %v3730 = vsub.f32 %v3584, %v3634
        %v3731 = vsub.f32 %v3586, %v3671
        %v3732 = vsub.f32 %v3590, %v3634
        %v3733 = vsub.f32 %v3592, %v3671
        %v3734 = vsub.f32 %v3594, %v3634
        %v3735 = vsub.f32 %v3596, %v3671
        %v3736 = vmul.f32 %v3672, 1.442695
        %v3737 = vpow.pop %v3736
        %v3738 = vmul.f32 %v3673, 1.442695
        %v3739 = vpow.pop %v3738
        %v3740 = vmul.f32 %v3674, 1.442695
        %v3741 = vpow.pop %v3740
        %v3742 = vmul.f32 %v3675, 1.442695
        %v3743 = vpow.pop %v3742
        %v3744 = vmul.f32 %v3676, 1.442695
        %v3745 = vpow.pop %v3744
        %v3746 = vmul.f32 %v3677, 1.442695
        %v3747 = vpow.pop %v3746
        %v3748 = vmul.f32 %v3678, 1.442695
        %v3749 = vpow.pop %v3748
        %v3750 = vmul.f32 %v3679, 1.442695
        %v3751 = vpow.pop %v3750
        %v3752 = vmul.f32 %v3680, 1.442695
        %v3753 = vpow.pop %v3752
        %v3754 = vmul.f32 %v3681, 1.442695
        %v3755 = vpow.pop %v3754
        %v3756 = vmul.f32 %v3682, 1.442695
        %v3757 = vpow.pop %v3756
        %v3758 = vmul.f32 %v3683, 1.442695
        %v3759 = vpow.pop %v3758
        %v3760 = vmul.f32 %v3684, 1.442695
        %v3761 = vpow.pop %v3760
        %v3762 = vmul.f32 %v3685, 1.442695
        %v3763 = vpow.pop %v3762
        %v3764 = vmul.f32 %v3686, 1.442695
        %v3765 = vpow.pop %v3764
        %v3766 = vmul.f32 %v3687, 1.442695
        %v3767 = vpow.pop %v3766
        %v3768 = vmul.f32 %v3688, 1.442695
        %v3769 = vpow.pop %v3768
        %v3770 = vmul.f32 %v3689, 1.442695
        %v3771 = vpow.pop %v3770
        %v3772 = vmul.f32 %v3690, 1.442695
        %v3773 = vpow.pop %v3772
        %v3774 = vmul.f32 %v3691, 1.442695
        %v3775 = vpow.pop %v3774
        %v3776 = vmul.f32 %v3692, 1.442695
        %v3777 = vpow.pop %v3776
        %v3778 = vmul.f32 %v3693, 1.442695
        %v3779 = vpow.pop %v3778
        %v3780 = vmul.f32 %v3694, 1.442695
        %v3781 = vpow.pop %v3780
        %v3782 = vmul.f32 %v3695, 1.442695
        %v3783 = vpow.pop %v3782
        %v3784 = vmul.f32 %v3696, 1.442695
        %v3785 = vpow.pop %v3784
        %v3786 = vmul.f32 %v3697, 1.442695
        %v3787 = vpow.pop %v3786
        %v3788 = vmul.f32 %v3698, 1.442695
        %v3789 = vpow.pop %v3788
        %v3790 = vmul.f32 %v3699, 1.442695
        %v3791 = vpow.pop %v3790
        %v3792 = vmul.f32 %v3700, 1.442695
        %v3793 = vpow.pop %v3792
        %v3794 = vmul.f32 %v3701, 1.442695
        %v3795 = vpow.pop %v3794
        %v3796 = vmul.f32 %v3702, 1.442695
        %v3797 = vpow.pop %v3796
        %v3798 = vmul.f32 %v3703, 1.442695
        %v3799 = vpow.pop %v3798
        %v3800 = vmul.f32 %v3704, 1.442695
        %v3801 = vpow.pop %v3800
        %v3802 = vmul.f32 %v3705, 1.442695
        %v3803 = vpow.pop %v3802
        %v3804 = vmul.f32 %v3706, 1.442695
        %v3805 = vpow.pop %v3804
        %v3806 = vmul.f32 %v3707, 1.442695
        %v3807 = vpow.pop %v3806
        %v3808 = vmul.f32 %v3708, 1.442695
        %v3809 = vpow.pop %v3808
        %v3810 = vmul.f32 %v3709, 1.442695
        %v3811 = vpow.pop %v3810
        %v3812 = vmul.f32 %v3710, 1.442695
        %v3813 = vpow.pop %v3812
        %v3814 = vmul.f32 %v3711, 1.442695
        %v3815 = vpow.pop %v3814
        %v3816 = vmul.f32 %v3712, 1.442695
        %v3817 = vpow.pop %v3816
        %v3818 = vmul.f32 %v3713, 1.442695
        %v3819 = vpow.pop %v3818
        %v3820 = vmul.f32 %v3714, 1.442695
        %v3821 = vpow.pop %v3820
        %v3822 = vmul.f32 %v3715, 1.442695
        %v3823 = vpow.pop %v3822
        %v3824 = vmul.f32 %v3716, 1.442695
        %v3825 = vpow.pop %v3824
        %v3826 = vmul.f32 %v3717, 1.442695
        %v3827 = vpow.pop %v3826
        %v3828 = vmul.f32 %v3718, 1.442695
        %v3829 = vpow.pop %v3828
        %v3830 = vmul.f32 %v3719, 1.442695
        %v3831 = vpow.pop %v3830
        %v3832 = vmul.f32 %v3720, 1.442695
        %v3833 = vpow.pop %v3832
        %v3834 = vmul.f32 %v3721, 1.442695
        %v3835 = vpow.pop %v3834
        %v3836 = vmul.f32 %v3722, 1.442695
        %v3837 = vpow.pop %v3836
        %v3838 = vmul.f32 %v3723, 1.442695
        %v3839 = vpow.pop %v3838
        %v3840 = vmul.f32 %v3724, 1.442695
        %v3841 = vpow.pop %v3840
        %v3842 = vmul.f32 %v3725, 1.442695
        %v3843 = vpow.pop %v3842
        %v3844 = vmul.f32 %v3726, 1.442695
        %v3845 = vpow.pop %v3844
        %v3846 = vmul.f32 %v3727, 1.442695
        %v3847 = vpow.pop %v3846
        %v3848 = vmul.f32 %v3728, 1.442695
        %v3849 = vpow.pop %v3848
        %v3850 = vmul.f32 %v3729, 1.442695
        %v3851 = vpow.pop %v3850
        %v3852 = vmul.f32 %v3730, 1.442695
        %v3853 = vpow.pop %v3852
        %v3854 = vmul.f32 %v3731, 1.442695
        %v3855 = vpow.pop %v3854
        %v3856 = vmul.f32 %v3732, 1.442695
        %v3857 = vpow.pop %v3856
        %v3858 = vmul.f32 %v3733, 1.442695
        %v3859 = vpow.pop %v3858
        %v3860 = vmul.f32 %v3734, 1.442695
        %v3861 = vpow.pop %v3860
        %v3862 = vmul.f32 %v3735, 1.442695
        %v3863 = vpow.pop %v3862
        %v3864 = vadd.f32 %v3737, %v3741
        %v3865 = vadd.f32 %v3864, %v3745
        %v3866 = vadd.f32 %v3865, %v3749
        %v3867 = vadd.f32 %v3866, %v3753
        %v3868 = vadd.f32 %v3867, %v3757
        %v3869 = vadd.f32 %v3868, %v3761
        %v3870 = vadd.f32 %v3869, %v3765
        %v3871 = vadd.f32 %v3870, %v3769
        %v3872 = vadd.f32 %v3871, %v3773
        %v3873 = vadd.f32 %v3872, %v3777
        %v3874 = vadd.f32 %v3873, %v3781
        %v3875 = vadd.f32 %v3874, %v3785
        %v3876 = vadd.f32 %v3875, %v3789
        %v3877 = vadd.f32 %v3876, %v3793
        %v3878 = vadd.f32 %v3877, %v3797
        %v3879 = vadd.f32 %v3878, %v3801
        %v3880 = vadd.f32 %v3879, %v3805
        %v3881 = vadd.f32 %v3880, %v3809
        %v3882 = vadd.f32 %v3881, %v3813
        %v3883 = vadd.f32 %v3882, %v3817
        %v3884 = vadd.f32 %v3883, %v3821
        %v3885 = vadd.f32 %v3884, %v3825
        %v3886 = vadd.f32 %v3885, %v3829
        %v3887 = vadd.f32 %v3886, %v3833
        %v3888 = vadd.f32 %v3887, %v3837
        %v3889 = vadd.f32 %v3888, %v3841
        %v3890 = vadd.f32 %v3889, %v3845
        %v3891 = vadd.f32 %v3890, %v3849
        %v3892 = vadd.f32 %v3891, %v3853
        %v3893 = vadd.f32 %v3892, %v3857
        %v3894 = vadd.f32 %v3893, %v3861
        %v3895 = vrot.slane %v3894, 4
        %v3896 = vadd.f32 %v3894, %v3895
        %v3897 = vrot.slane %v3896, 2
        %v3898 = vadd.f32 %v3896, %v3897
        %v3899 = vrot.slane %v3898, 1
        %v3900 = vadd.f32 %v3898, %v3899
        %v3901 = vadd.f32 %v3739, %v3743
        %v3902 = vadd.f32 %v3901, %v3747
        %v3903 = vadd.f32 %v3902, %v3751
        %v3904 = vadd.f32 %v3903, %v3755
        %v3905 = vadd.f32 %v3904, %v3759
        %v3906 = vadd.f32 %v3905, %v3763
        %v3907 = vadd.f32 %v3906, %v3767
        %v3908 = vadd.f32 %v3907, %v3771
        %v3909 = vadd.f32 %v3908, %v3775
        %v3910 = vadd.f32 %v3909, %v3779
        %v3911 = vadd.f32 %v3910, %v3783
        %v3912 = vadd.f32 %v3911, %v3787
        %v3913 = vadd.f32 %v3912, %v3791
        %v3914 = vadd.f32 %v3913, %v3795
        %v3915 = vadd.f32 %v3914, %v3799
        %v3916 = vadd.f32 %v3915, %v3803
        %v3917 = vadd.f32 %v3916, %v3807
        %v3918 = vadd.f32 %v3917, %v3811
        %v3919 = vadd.f32 %v3918, %v3815
        %v3920 = vadd.f32 %v3919, %v3819
        %v3921 = vadd.f32 %v3920, %v3823
        %v3922 = vadd.f32 %v3921, %v3827
        %v3923 = vadd.f32 %v3922, %v3831
        %v3924 = vadd.f32 %v3923, %v3835
        %v3925 = vadd.f32 %v3924, %v3839
        %v3926 = vadd.f32 %v3925, %v3843
        %v3927 = vadd.f32 %v3926, %v3847
        %v3928 = vadd.f32 %v3927, %v3851
        %v3929 = vadd.f32 %v3928, %v3855
        %v3930 = vadd.f32 %v3929, %v3859
        %v3931 = vadd.f32 %v3930, %v3863
        %v3932 = vrot.slane %v3931, 4
        %v3933 = vadd.f32 %v3931, %v3932
        %v3934 = vrot.slane %v3933, 2
        %v3935 = vadd.f32 %v3933, %v3934
        %v3936 = vrot.slane %v3935, 1
        %v3937 = vadd.f32 %v3935, %v3936
        %v3938 = vpack.c.bf16 %v735, %v729
        %v3939 = vpack.c.bf16 %v737, %v731
        %v3940 = vpack.c.bf16 %v747, %v741
        %v3941 = vpack.c.bf16 %v749, %v743
        %v3942 = vpack.c.bf16 %v3741, %v3737
        %v3943 = vpack.c.bf16 %v3743, %v3739
        %v3944 = vpack.c.bf16 %v3749, %v3745
        %v3945 = vpack.c.bf16 %v3751, %v3747
        %v3946 = vpack.c.bf16 %v3757, %v3753
        %v3947 = vpack.c.bf16 %v3759, %v3755
        %v3948 = vpack.c.bf16 %v3765, %v3761
        %v3949 = vpack.c.bf16 %v3767, %v3763
        %v3950 = vpack.c.bf16 %v3773, %v3769
        %v3951 = vpack.c.bf16 %v3775, %v3771
        %v3952 = vpack.c.bf16 %v3781, %v3777
        %v3953 = vpack.c.bf16 %v3783, %v3779
        %v3954 = vpack.c.bf16 %v3789, %v3785
        %v3955 = vpack.c.bf16 %v3791, %v3787
        %v3956 = vpack.c.bf16 %v3797, %v3793
        %v3957 = vpack.c.bf16 %v3799, %v3795
        %v3958 = vpack.c.bf16 %v3805, %v3801
        %v3959 = vpack.c.bf16 %v3807, %v3803
        %v3960 = vpack.c.bf16 %v3813, %v3809
        %v3961 = vpack.c.bf16 %v3815, %v3811
        %v3962 = vpack.c.bf16 %v3821, %v3817
        %v3963 = vpack.c.bf16 %v3823, %v3819
        %v3964 = vpack.c.bf16 %v3829, %v3825
        %v3965 = vpack.c.bf16 %v3831, %v3827
        %v3966 = vpack.c.bf16 %v3837, %v3833
        %v3967 = vpack.c.bf16 %v3839, %v3835
        %v3968 = vpack.c.bf16 %v3845, %v3841
        %v3969 = vpack.c.bf16 %v3847, %v3843
        %v3970 = vpack.c.bf16 %v3853, %v3849
        %v3971 = vpack.c.bf16 %v3855, %v3851
        %v3972 = vpack.c.bf16 %v3861, %v3857
        %v3973 = vpack.c.bf16 %v3863, %v3859
        %3974 = vmatprep.subr.bf16.mxu0 %v3943
        %3975 = vmatpush1.bf16.msra.mxu0 %v3942
        %3976 = vmatprep.subr.bf16.mxu0 %v3945
        %3977 = vmatpush1.bf16.msra.mxu0 %v3944
        %3978 = vmatprep.subr.bf16.mxu0 %v3947
        %3979 = vmatpush1.bf16.msra.mxu0 %v3946
        %3980 = vmatprep.subr.bf16.mxu0 %v3949
        %3981 = vmatpush1.bf16.msra.mxu0 %v3948
        %3982 = vmatprep.subr.bf16.mxu0 %v3951
        %3983 = vmatpush1.bf16.msra.mxu0 %v3950
        %3984 = vmatprep.subr.bf16.mxu0 %v3953
        %3985 = vmatpush1.bf16.msra.mxu0 %v3952
        %3986 = vmatprep.subr.bf16.mxu0 %v3955
        %3987 = vmatpush1.bf16.msra.mxu0 %v3954
        %3988 = vmatprep.subr.bf16.mxu0 %v3957
        %3989 = vmatpush1.bf16.msra.mxu0 %v3956
        %3990 = vmatprep.subr.bf16.mxu0 %v3959
        %3991 = vmatpush1.bf16.msra.mxu0 %v3958
        %3992 = vmatprep.subr.bf16.mxu0 %v3961
        %3993 = vmatpush1.bf16.msra.mxu0 %v3960
        %3994 = vmatprep.subr.bf16.mxu0 %v3963
        %3995 = vmatpush1.bf16.msra.mxu0 %v3962
        %3996 = vmatprep.subr.bf16.mxu0 %v3965
        %3997 = vmatpush1.bf16.msra.mxu0 %v3964
        %3998 = vmatprep.subr.bf16.mxu0 %v3967
        %3999 = vmatpush1.bf16.msra.mxu0 %v3966
        %4000 = vmatprep.subr.bf16.mxu0 %v3969
        %4001 = vmatpush1.bf16.msra.mxu0 %v3968
        %4002 = vmatprep.subr.bf16.mxu0 %v3971
        %4003 = vmatpush1.bf16.msra.mxu0 %v3970
        %4004 = vmatprep.subr.bf16.mxu0 %v3973
        %4005 = vmatpush1.bf16.msra.mxu0 %v3972
        %4006 = vmatprep.mubr.bf16.mxu0 %v3939
        %4007 = vmatmul.mubr.bf16.gmra.mrb[0].mxu0 %v3938
        %v4008 = vpop.f32.mrb[0].mxu0
        %v4009 = vadd.f32 0.0, %v4008
        %v4010 = vpop.f32.mrb[0].mxu0
        %v4011 = vadd.f32 0.0, %v4010
        %v4012 = vpop.f32.mrb[0].mxu0
        %v4013 = vadd.f32 0.0, %v4012
        %v4014 = vpop.f32.mrb[0].mxu0
        %v4015 = vadd.f32 0.0, %v4014
        %4016 = vmatprep.mubr.bf16.mxu0 %v3941
        %4017 = vmatmul.mubr.bf16.gmra.mrb[0].mxu0 %v3940
        %v4018 = vpop.f32.mrb[0].mxu0
        %v4019 = vadd.f32 0.0, %v4018
        %v4020 = vpop.f32.mrb[0].mxu0
        %v4021 = vadd.f32 0.0, %v4020
        %v4022 = vpop.f32.mrb[0].mxu0
        %v4023 = vadd.f32 0.0, %v4022
        %v4024 = vpop.f32.mrb[0].mxu0
        %v4025 = vadd.f32 0.0, %v4024
        %4026 = vdwg.mxu0
        %v4027 = vrcp.pop %v3900
        %v4028 = vrcp.pop %v3937
        %v4029 = vmul.f32 %v4009, %v4027
        %v4030 = vmul.f32 %v4011, %v4028
        %v4031 = vmul.f32 %v4013, %v4027
        %v4032 = vmul.f32 %v4015, %v4028
        %v4033 = vmul.f32 %v4019, %v4027
        %v4034 = vmul.f32 %v4021, %v4028
        %v4035 = vmul.f32 %v4023, %v4027
        %v4036 = vmul.f32 %v4025, %v4028
        %s4037 = scalar_lea.vmem %s2, 12
        %v4038 = vld [vmem:[%s4037] sm:$0xf]
        %v4040 = vsel %vm835, %v4038, 0
        %4042 = vmatprep.subr.mxu0 %v4030
        %4043 = vmatpush1.msra.mxu0 %v4029
        %4044 = vmatprep.subr.mxu0 %v4032
        %4045 = vmatpush1.msra.mxu0 %v4031
        %4046 = vmatprep.subr.mxu0 %v4034
        %4047 = vmatpush1.msra.mxu0 %v4033
        %4048 = vmatprep.subr.mxu0 %v4036
        %4049 = vmatpush1.msra.mxu0 %v4035
        %4050 = vmatprep.subr.mxu0 0.0
        %4051 = vmatpush1.msra.mxu0 0.0
        %4052 = vmatprep.subr.mxu0 0.0
        %4053 = vmatpush1.msra.mxu0 0.0
        %4054 = vmatprep.subr.mxu0 0.0
        %4055 = vmatpush1.msra.mxu0 0.0
        %4056 = vmatprep.subr.mxu0 0.0
        %4057 = vmatpush1.msra.mxu0 0.0
        %4058 = vmatprep.subr.mxu0 0.0
        %4059 = vmatpush1.msra.mxu0 0.0
        %4060 = vmatprep.subr.mxu0 0.0
        %4061 = vmatpush1.msra.mxu0 0.0
        %4062 = vmatprep.subr.mxu0 0.0
        %4063 = vmatpush1.msra.mxu0 0.0
        %4064 = vmatprep.subr.mxu0 0.0
        %4065 = vmatpush1.msra.mxu0 0.0
        %4066 = vmatprep.subr.mxu0 0.0
        %4067 = vmatpush1.msra.mxu0 0.0
        %4068 = vmatprep.subr.mxu0 0.0
        %4069 = vmatpush1.msra.mxu0 0.0
        %4070 = vmatprep.subr.mxu0 0.0
        %4071 = vmatpush1.msra.mxu0 0.0
        %4072 = vmatprep.subr.mxu0 0.0
        %4073 = vmatpush1.msra.mxu0 0.0
        %4074 = vmatprep.subr.mxu0 0.0
        %4075 = vmatpush1.msra.mxu0 0.0
        %4076 = vmatprep.subr.mxu0 0.0
        %4077 = vmatpush1.msra.mxu0 0.0
        %4078 = vmatprep.subr.mxu0 0.0
        %4079 = vmatpush1.msra.mxu0 0.0
        %4080 = vmatprep.subr.mxu0 0.0
        %4081 = vmatpush1.msra.mxu0 0.0
        %4082 = vmatprep.subr.mxu0 0.0
        %4083 = vmatpush1.msra.mxu0 0.0
        %4084 = vmatprep.subr.mxu0 0.0
        %4085 = vmatpush1.msra.mxu0 0.0
        %4086 = vmatprep.subr.mxu0 0.0
        %4087 = vmatpush1.msra.mxu0 0.0
        %4088 = vmatprep.subr.mxu0 0.0
        %4089 = vmatpush1.msra.mxu0 0.0
        %4090 = vmatprep.subr.mxu0 0.0
        %4091 = vmatpush1.msra.mxu0 0.0
        %4092 = vmatprep.subr.mxu0 0.0
        %4093 = vmatpush1.msra.mxu0 0.0
        %4094 = vmatprep.subr.mxu0 0.0
        %4095 = vmatpush1.msra.mxu0 0.0
        %4096 = vmatprep.subr.mxu0 0.0
        %4097 = vmatpush1.msra.mxu0 0.0
        %4098 = vmatprep.subr.mxu0 0.0
        %4099 = vmatpush1.msra.mxu0 0.0
        %4100 = vmatprep.subr.mxu0 0.0
        %4101 = vmatpush1.msra.mxu0 0.0
        %4102 = vmatprep.subr.mxu0 0.0
        %4103 = vmatpush1.msra.mxu0 0.0
        %4104 = vmatprep.subr.mxu0 0.0
        %4105 = vmatpush1.msra.mxu0 0.0
        %4106 = vmatprep.mubr.f32.mxu0 0.0
        %4107 = vmatmul.mubr.f32.gmra.mrb[0].mxu0 %v4040
        %v4108 = vpop.f32.mrb[0].mxu0
        %v4109 = vadd.f32 0.0, %v4108
        %v4110 = vpop.f32.mrb[0].mxu0
        %v4111 = vadd.f32 0.0, %v4110
        %4112 = vdwg.mxu0
        %v4113 = vadd.f32 %v3271, %v4109
        %v4114 = vadd.f32 %v3272, %v4111
        %v4115 = vld [vmem:[%s3] sm:$0xf]
        %4117 = vset.pattern.permute.xlu0 0
        %4118 = vperm.xlu0 %4117, %v4115
        %v4119 = vpop.permute.xlu0 %4118
        %v4121 = vadd.f32 %v4113, %v4119
        %v4122 = vadd.f32 %v4114, %v4119
        %v4125 = vcombine.low %v4121, %v4122
        %4127 = vst [vmem:[%s190] sm:$0xff] %v4125
        %s4128 = sand.u32 %s115, 1
        %s4129 = scalar_lea.sflag [#allocation3], %s4128
        %s4130 = sand.u32 %s115, 1
        %s4131 = smul.addr %s4130, 8
        %s4132 = scalar_lea.vmem [#allocation2], %s4131
        // Predicated region
        $region37: #{tpu_custom_call.1} parent=35 // pred_check
          %p4133 = pneg %p125
        $region38: #{tpu_custom_call.1} parent=35 // pred_check_branch
          %4135 = sbr.rel (%p4133) target = $region40
        $region39: #{tpu_custom_call.1} parent=35 // pred_region
          %s4137 = ssub.s32 128, 128
          %4138 = vsyncadd %s4129, %s4137
          %s4139 = smul.addr %s18, 2
          %s4140 = smul.addr %s4139, 64
          %s4141 = scalar_lea.hbm %s4, %s4140
          %s4143 = sshll.u32 %s4132, 4
          %s4144 = int_to_ptr.vmem [resolvable:$true] %s4143
          %4146 = dma.vmem_to_hbm [thread:$0]  %s4144, 128, %s4141, %s4129
        $region40: #{tpu_custom_call.1} parent=35 // pred_fallthru
          _
      $region36: #{tpu_custom_call.1} parent=5 // pred_fallthru
        _
      %p4147 = scmp.le.s32.totalorder 2, %s13
      // Predicated region
      $region41: #{tpu_custom_call.1} parent=5 // pred_check
        %p4148 = pneg %p4147
      $region42: #{tpu_custom_call.1} parent=5 // pred_check_branch
        %4150 = sbr.rel (%p4148) target = $region44
      $region43: #{tpu_custom_call.1} parent=5 // pred_region
        %s4151 = ssub.s32 %s13, 2
        // Predicated region
        $region45: #{tpu_custom_call.1} parent=43 // pred_check
          %p4152 = pneg %p131
        $region46: #{tpu_custom_call.1} parent=43 // pred_check_branch
          %4154 = sbr.rel (%p4152) target = $region48
        $region47: #{tpu_custom_call.1} parent=43 // pred_region
          %s4155 = sand.u32 %s116, 1
          %s4156 = scalar_lea.sflag [#allocation3], %s4155
          %s4157 = sand.u32 %s116, 1
          %s4158 = smul.addr %s4157, 8
          %s4159 = scalar_lea.vmem [#allocation2], %s4158
          %4160 = dma.done %s4156, 128
        $region48: #{tpu_custom_call.1} parent=43 // pred_fallthru
          _
      $region44: #{tpu_custom_call.1} parent=5 // pred_fallthru
        _
    $region6: #{tpu_custom_call.1} parent=1 // loop_footer
      %s17 = sadd.s32 1, %s13
    $region7: #{tpu_custom_call.1} parent=1 // loop_footer_branch
      %12 = sbr.rel target = $region3
    $region8: #{tpu_custom_call.1} parent=1 // loop_exit
      _
    %4161 = vsyncpa [#allocation3], 1
    %s4162 = scalar_lea.sflag [#allocation3], 1
    %4163 = vsyncpa %s4162, 1

</llo_original>
